<compile_context>
chip_gen: v5e
topology: v5e:2x2
jax: 0.10.0
libtpu: 0.0.40
codegen_flags: <defaults>
</compile_context>

<pallas_src>
import functools
import math

import jax
import jax.numpy as jnp
from jax.experimental import pallas as pl
from jax.experimental.pallas import tpu as pltpu

# ----------------------------------------------------------------------------
# Small-model configuration (structurally faithful, scaled down)
# ----------------------------------------------------------------------------
X_BOUND = [-8.0, 8.0, 1.0]     # -> nx = 16
Y_BOUND = [-8.0, 8.0, 1.0]     # -> ny = 16
Z_BOUND = [-10.0, 10.0, 20.0]  # -> nz = 1
D_BOUND = [4.0, 8.0, 1.0]      # -> D  = 4
FINAL_DIM = (32, 32)           # input image H, W
DOWNSAMPLE = 16                # camera feature downsample
CAM_C = 8                      # camC (64 in the original)
OUT_C = 3                      # outC (p_c has 3 entries, so outC must be 3)
MID_C = 32                     # camera backbone hidden channels
LATENT = 16                    # BevEncodeGPN.latent_size
BEV_C = 32                     # BEV encoder hidden channels

D_DEPTH = int((D_BOUND[1] - D_BOUND[0]) / D_BOUND[2])  # = 4


def _round_up(v, m):
    return ((v + m - 1) // m) * m


# ----------------------------------------------------------------------------
# Pallas kernels
# ----------------------------------------------------------------------------
def _matmul_kernel(a_ref, b_ref, bias_ref, o_ref, *, activation):
    """One (tm, K) @ (K, NP) block with bias + fused epilogue."""
    acc = jnp.dot(a_ref[...], b_ref[...], preferred_element_type=jnp.float32)
    acc = acc + bias_ref[...]
    if activation == "relu":
        acc = jnp.maximum(acc, 0.0)
    elif activation == "alpha":            # exp(.) + 1, clamp(min=1e-4)
        acc = jnp.maximum(jnp.exp(acc) + 1.0, 0.0001)
    o_ref[...] = acc


def pallas_matmul(a, b, bias=None, activation=None):
    """(M, K) @ (K, N) + bias -> fused activation.

    Operands cast to bf16 (f32 MXU accumulation).  N is zero-padded to a
    multiple of 128 so output stores are lane-dense unmasked vst (sliced back
    in the wrapper).  M is tiled in 128-row blocks (padded last block) and the
    grid axis is "parallel" so multi-TensorCore chips can shard it.
    """
    M, K = a.shape
    K2, N = b.shape
    assert K == K2
    NP = _round_up(N, 128)
    b_p = jnp.pad(b, ((0, 0), (0, NP - N))) if NP != N else b
    if bias is None:
        bias_p = jnp.zeros((1, NP), jnp.float32)
    else:
        bias_p = jnp.pad(bias.reshape(1, N).astype(jnp.float32),
                         ((0, 0), (0, NP - N)))
    if M >= 128:
        tm = 128
        MP = _round_up(M, 128)
    else:
        MP = _round_up(max(M, 8), 8)       # one sublane-aligned block
        tm = MP
    a_p = jnp.pad(a, ((0, MP - M), (0, 0))) if MP != M else a
    out = pl.pallas_call(
        functools.partial(_matmul_kernel, activation=activation),
        out_shape=jax.ShapeDtypeStruct((MP, NP), jnp.float32),
        grid=(MP // tm,),
        in_specs=[
            pl.BlockSpec((tm, K), lambda i: (i, 0)),
            pl.BlockSpec((K, NP), lambda i: (0, 0)),
            pl.BlockSpec((1, NP), lambda i: (0, 0)),
        ],
        out_specs=pl.BlockSpec((tm, NP), lambda i: (i, 0)),
        compiler_params=pltpu.CompilerParams(dimension_semantics=("parallel",)),
    )(a_p.astype(jnp.bfloat16), b_p.astype(jnp.bfloat16), bias_p)
    return out[:M, :N]


def _cam_encode_kernel(p_ref, wp_ref, wd_ref, o_ref, *, D, C):
    """Fused camera encoder: patch conv + ReLU + 1x1 depth head + softmax lift."""
    feat = jnp.dot(p_ref[...], wp_ref[...], preferred_element_type=jnp.float32)
    feat = jnp.maximum(feat, 0.0)
    h = jnp.dot(feat.astype(jnp.bfloat16), wd_ref[...],
                preferred_element_type=jnp.float32)          # (P, D + C)
    logits = h[:, :D]
    feats = h[:, D:]
    m = jnp.max(logits, axis=-1, keepdims=True)
    e = jnp.exp(logits - m)
    depth = e / jnp.sum(e, axis=-1, keepdims=True)           # per-pixel depth softmax
    # Outer product depth (P, D) x feats (P, C) -> (P, D*C), written one depth
    # bin at a time via static slices (no lane-axis concatenate, no 3-D
    # reshape inside the kernel).
    for d in range(D):
        o_ref[:, d * C:(d + 1) * C] = depth[:, d:d + 1] * feats


def pallas_cam_encode(patches, w_patch, w_depth, D, C):
    P, _ = patches.shape
    PP = _round_up(max(P, 8), 8)
    p_p = jnp.pad(patches, ((0, PP - P), (0, 0))) if PP != P else patches
    out = pl.pallas_call(
        functools.partial(_cam_encode_kernel, D=D, C=C),
        out_shape=jax.ShapeDtypeStruct((PP, D * C), jnp.float32),
    )(p_p.astype(jnp.bfloat16), w_patch.astype(jnp.bfloat16),
      w_depth.astype(jnp.bfloat16))
    return out[:P]


def _latent_flow_kernel(p_ref, wl_ref, wf_ref, bf_ref, o_ref):
    """Fused latent 3x3 conv (+ReLU) and density-flow head (+folded evidence bias)."""
    lat = jnp.dot(p_ref[...], wl_ref[...], preferred_element_type=jnp.float32)
    lat = jnp.maximum(lat, 0.0)
    o_ref[...] = jnp.dot(lat.astype(jnp.bfloat16), wf_ref[...],
                         preferred_element_type=jnp.float32) + bf_ref[...]


def pallas_latent_flow(patches, w_lat, w_flow, b_fold):
    M, K = patches.shape
    K2, L = w_lat.shape
    L2, N = w_flow.shape
    assert K == K2 and L == L2
    NP = _round_up(N, 128)                                   # lane-dense output
    wf = jnp.pad(w_flow, ((0, 0), (0, NP - N))).astype(jnp.bfloat16)
    bf = jnp.pad(b_fold.reshape(1, N).astype(jnp.float32), ((0, 0), (0, NP - N)))
    if M >= 128:
        tm = 128
        MP = _round_up(M, 128)
    else:
        MP = _round_up(max(M, 8), 8)
        tm = MP
    p_p = jnp.pad(patches, ((0, MP - M), (0, 0))) if MP != M else patches
    out = pl.pallas_call(
        _latent_flow_kernel,
        out_shape=jax.ShapeDtypeStruct((MP, NP), jnp.float32),
        grid=(MP // tm,),
        in_specs=[
            pl.BlockSpec((tm, K), lambda i: (i, 0)),
            pl.BlockSpec((K, L), lambda i: (0, 0)),
            pl.BlockSpec((L, NP), lambda i: (0, 0)),
            pl.BlockSpec((1, NP), lambda i: (0, 0)),
        ],
        out_specs=pl.BlockSpec((tm, NP), lambda i: (i, 0)),
        compiler_params=pltpu.CompilerParams(dimension_semantics=("parallel",)),
    )(p_p.astype(jnp.bfloat16), w_lat.astype(jnp.bfloat16), wf, bf)
    return out[:M, :N]


# ----------------------------------------------------------------------------
# Conv2d = im2col (glue) + Pallas matmul with fused epilogue (hot path), NHWC
# ----------------------------------------------------------------------------
def _im2col(x_nhwc, kh, kw, stride=1, padding=0):
    B, H, W, Cin = x_nhwc.shape
    x = x_nhwc
    if padding:
        x = jnp.pad(x, ((0, 0), (padding, padding), (padding, padding), (0, 0)))
    Hp, Wp = x.shape[1], x.shape[2]
    Ho = (Hp - kh) // stride + 1
    Wo = (Wp - kw) // stride + 1
    cols = []
    for i in range(kh):
        for j in range(kw):
            cols.append(x[:, i:i + stride * Ho:stride, j:j + stride * Wo:stride, :])
    patches = jnp.concatenate(cols, axis=-1).reshape(B * Ho * Wo, kh * kw * Cin)
    return patches, Ho, Wo


def conv2d_nhwc(x_nhwc, w, bias=None, stride=1, padding=0, activation=None):
    """x: (B, H, W, Cin); w: (kh, kw, Cin, Cout) -> (B, Ho, Wo, Cout)."""
    kh, kw, Cin, Cout = w.shape
    B = x_nhwc.shape[0]
    patches, Ho, Wo = _im2col(x_nhwc, kh, kw, stride, padding)
    out = pallas_matmul(patches, w.reshape(kh * kw * Cin, Cout),
                        bias=bias, activation=activation)
    return out.reshape(B, Ho, Wo, Cout)


# ----------------------------------------------------------------------------
# LiftSplatShoot geometry / voxel pooling (plain JAX glue)
# ----------------------------------------------------------------------------
def gen_dx_bx(xb, yb, zb):
    dx = jnp.array([row[2] for row in (xb, yb, zb)], jnp.float32)
    bx = jnp.array([row[0] + row[2] / 2.0 for row in (xb, yb, zb)], jnp.float32)
    nx = tuple(int((row[1] - row[0]) / row[2]) for row in (xb, yb, zb))
    return dx, bx, nx


def create_frustum():
    ogfH, ogfW = FINAL_DIM
    fH, fW = ogfH // DOWNSAMPLE, ogfW // DOWNSAMPLE
    ds = jnp.arange(D_BOUND[0], D_BOUND[1], D_BOUND[2], dtype=jnp.float32)
    D = ds.shape[0]
    ds = jnp.broadcast_to(ds[:, None, None], (D, fH, fW))
    xs = jnp.broadcast_to(
        jnp.linspace(0.0, ogfW - 1, fW, dtype=jnp.float32)[None, None, :], (D, fH, fW))
    ys = jnp.broadcast_to(
        jnp.linspace(0.0, ogfH - 1, fH, dtype=jnp.float32)[None, :, None], (D, fH, fW))
    return jnp.stack([xs, ys, ds], axis=-1)  # (D, fH, fW, 3)


def get_geometry(frustum, rots, trans, intrins, post_rots, post_trans):
    points = frustum[None, None] - post_trans[:, :, None, None, None, :]
    inv_post = jnp.linalg.inv(post_rots)                             # (B,N,3,3)
    points = jnp.einsum('bnij,bndhwj->bndhwi', inv_post, points)
    points = jnp.concatenate(
        [points[..., :2] * points[..., 2:3], points[..., 2:3]], axis=-1)
    combine = jnp.einsum('bnij,bnjk->bnik', rots, jnp.linalg.inv(intrins))
    points = jnp.einsum('bnij,bndhwj->bndhwi', combine, points)
    points = points + trans[:, :, None, None, None, :]
    return points  # (B, N, D, fH, fW, 3)


def voxel_pooling(geom, feats, dx, bx, nx):
    # TODO(synk): QuickCumsum (sort + cumsum + rank-dedup) is replaced by an
    # equivalent scatter-add per voxel (same sum-pooling semantics).
    B, N, D, H, W, C = feats.shape
    Nprime = B * N * D * H * W
    x = feats.reshape(Nprime, C)
    gidx = ((geom - (bx - dx / 2.0)) / dx).astype(jnp.int32).reshape(Nprime, 3)
    batch_ix = jnp.repeat(jnp.arange(B, dtype=jnp.int32), Nprime // B)
    kept = ((gidx[:, 0] >= 0) & (gidx[:, 0] < nx[0]) &
            (gidx[:, 1] >= 0) & (gidx[:, 1] < nx[1]) &
            (gidx[:, 2] >= 0) & (gidx[:, 2] < nx[2]))
    gx = jnp.where(kept, gidx[:, 0], 0)
    gy = jnp.where(kept, gidx[:, 1], 0)
    gz = jnp.where(kept, gidx[:, 2], 0)
    vals = x * kept[:, None].astype(x.dtype)
    grid = jnp.zeros((B, nx[2], nx[0], nx[1], C), jnp.float32)
    grid = grid.at[batch_ix, gz, gx, gy].add(vals)           # (B, nz, X, Y, C)
    # cat z-slices into channels (z-major), keep NHWC for the BEV encoder.
    grid = jnp.transpose(grid, (0, 2, 3, 1, 4)).reshape(B, nx[0], nx[1], nx[2] * C)
    return grid


# ----------------------------------------------------------------------------
# CamEncode (simplified, fully fused) and BevEncodeGPN (simplified)
# ----------------------------------------------------------------------------
def cam_encode(params, x_bn_nhwc):
    """x: (B*N, imH, imW, 3) NHWC -> (B*N*fH*fW, D*camC) lifted features."""
    # TODO(synk): EfficientNet-b0 trunk + Up block replaced by a stride-16
    # patch conv + 1x1 depth/feature head (no pretrained weights available).
    patches, fH, fW = _im2col(x_bn_nhwc, DOWNSAMPLE, DOWNSAMPLE,
                              stride=DOWNSAMPLE, padding=0)
    lifted = pallas_cam_encode(patches, params['cam_patch_w'],
                               params['cam_depth_w'], D_DEPTH, CAM_C)
    return lifted, fH, fW


def bev_encode_gpn(params, bev_nhwc, nx):
    """bev: (B, X, Y, camC) NHWC -> alpha: (B, X, Y, outC) NHWC."""
    B = bev_nhwc.shape[0]
    # TODO(synk): ResNet18 trunk (bn1/layer1-3), Up skip block and bilinear
    # upsample replaced by a spatially-preserving conv stack.
    h = conv2d_nhwc(bev_nhwc, params['bev_conv1_w'], padding=1, activation='relu')
    h = conv2d_nhwc(h, params['bev_conv2_w'], padding=1, activation='relu')

    # Latent 3x3 conv + ReLU + density-flow head fused into one kernel; the
    # class prior p_c and the Evidence('latent-new', further_scale=2.0)
    # log-scale are folded into the head bias.
    # TODO(synk): Density normalizing flow replaced by a linear log-density head.
    patches, _, _ = _im2col(h, 3, 3, stride=1, padding=1)
    p_c = jnp.array([0.2, 0.4, 0.4], jnp.float32)
    log_scale = 0.5 * (LATENT * math.log(2.0 * math.pi) + math.log(LATENT + 1.0)) + math.log(2.0)
    b_fold = params['flow_b'] + p_c + log_scale
    log_beta = pallas_latent_flow(patches,
                                  params['bev_lat_w'].reshape(9 * BEV_C, LATENT),
                                  params['flow_w'], b_fold)  # (B*X*Y, outC)

    # evidence(...).exp() immediately followed by .log() before `last` is the
    # identity -> stay in log space; beta itself is never materialized.
    log_beta = log_beta.reshape(B, OUT_C, nx[0], nx[1])      # same raw reshape as torch
    log_beta = jnp.transpose(log_beta, (0, 2, 3, 1))         # NHWC for the last conv
    # last 3x3 conv with fused alpha epilogue: exp(.) + 1, clamp(min=1e-4).
    return conv2d_nhwc(log_beta, params['last_w'], bias=params['last_b'],
                       padding=1, activation='alpha')


# ----------------------------------------------------------------------------
# Full model forward
# ----------------------------------------------------------------------------
def lift_splat_shoot_gpn(params, x, rots, trans, intrins, post_rots, post_trans):
    B, N, Cimg, imH, imW = x.shape
    frustum = create_frustum()
    dx, bx, nx = gen_dx_bx(X_BOUND, Y_BOUND, Z_BOUND)

    geom = get_geometry(frustum, rots, trans, intrins, post_rots, post_trans)

    # Single NCHW -> NHWC transpose at the module boundary; NHWC inside.
    x_nhwc = jnp.transpose(x.reshape(B * N, Cimg, imH, imW), (0, 2, 3, 1))
    lifted, fH, fW = cam_encode(params, x_nhwc)
    # (B*N*fH*fW, D*camC) -> (B, N, D, fH, fW, camC)
    camfeats = lifted.reshape(B, N, fH, fW, D_DEPTH, CAM_C).transpose(0, 1, 4, 2, 3, 5)

    bev = voxel_pooling(geom, camfeats, dx, bx, nx)          # (B, X, Y, camC*nz)
    alpha = bev_encode_gpn(params, bev, nx)                  # (B, X, Y, outC)
    return jnp.transpose(alpha, (0, 3, 1, 2))                # NCHW at the boundary


# ----------------------------------------------------------------------------
# Deterministic parameter init (weights stored in matmul/NHWC-friendly layouts)
# ----------------------------------------------------------------------------
def init_params(key):
    ks = jax.random.split(key, 8)
    p = {}
    p['cam_patch_w'] = 0.05 * jax.random.normal(
        ks[0], (DOWNSAMPLE * DOWNSAMPLE * 3, MID_C), jnp.float32)
    p['cam_depth_w'] = 0.10 * jax.random.normal(
        ks[1], (MID_C, D_DEPTH + CAM_C), jnp.float32)
    p['bev_conv1_w'] = 0.10 * jax.random.normal(ks[2], (3, 3, CAM_C, BEV_C), jnp.float32)
    p['bev_conv2_w'] = 0.10 * jax.random.normal(ks[3], (3, 3, BEV_C, BEV_C), jnp.float32)
    p['bev_lat_w'] = 0.10 * jax.random.normal(ks[4], (3, 3, BEV_C, LATENT), jnp.float32)
    p['flow_w'] = 0.10 * jax.random.normal(ks[5], (LATENT, OUT_C), jnp.float32)
    p['flow_b'] = jnp.zeros((OUT_C,), jnp.float32)
    p['last_w'] = 0.10 * jax.random.normal(ks[6], (3, 3, OUT_C, OUT_C), jnp.float32)
    p['last_b'] = 0.01 * jax.random.normal(ks[7], (OUT_C,), jnp.float32)
    return p


if __name__ == "__main__":
    key = jax.random.PRNGKey(0)
    pkey, xkey = jax.random.split(key)
    params = init_params(pkey)

    B, N = 1, 2
    imH, imW = FINAL_DIM
    x = jax.random.normal(xkey, (B, N, 3, imH, imW), jnp.float32)
    eye = jnp.broadcast_to(jnp.eye(3, dtype=jnp.float32), (B, N, 3, 3))
    rots = eye
    post_rots = eye
    trans = jnp.zeros((B, N, 3), jnp.float32)
    post_trans = jnp.zeros((B, N, 3), jnp.float32)
    f = 16.0
    intrins = jnp.broadcast_to(
        jnp.array([[f, 0.0, imW / 2.0],
                   [0.0, f, imH / 2.0],
                   [0.0, 0.0, 1.0]], jnp.float32), (B, N, 3, 3))

    fwd = jax.jit(lift_splat_shoot_gpn)
    out = jax.block_until_ready(
        fwd(params, x, rots, trans, intrins, post_rots, post_trans))
    assert out.shape == (B, OUT_C, 16, 16)
    assert bool(jnp.all(out >= 0.0001)) and bool(jnp.all(jnp.isfinite(out)))
    print("KERNEL_OK")
</pallas_src>

<mosaic_0001>
module attributes {stable_mosaic.version = 11 : i64} {
  func.func @_cam_encode_kernel(%arg0: memref<8x768xbf16, #tpu.memory_space<vmem>>, %arg1: memref<768x32xbf16, #tpu.memory_space<vmem>>, %arg2: memref<32x12xbf16, #tpu.memory_space<vmem>>, %arg3: memref<8x32xf32, #tpu.memory_space<vmem>>) attributes {dimension_semantics = [], scalar_prefetch = 0 : i64, scratch_operands = 0 : i64, tpu.core_type = #tpu.core_type<tc>} {
    %c0 = arith.constant 0 : index
    %c0_0 = arith.constant 0 : index
    %0 = vector.load %arg0[%c0, %c0_0] : memref<8x768xbf16, #tpu.memory_space<vmem>>, vector<8x768xbf16>
    %c0_1 = arith.constant 0 : index
    %c0_2 = arith.constant 0 : index
    %1 = vector.load %arg1[%c0_1, %c0_2] : memref<768x32xbf16, #tpu.memory_space<vmem>>, vector<768x32xbf16>
    %cst = arith.constant dense<0.000000e+00> : vector<8x32xf32>
    %2 = tpu.matmul %0, %1, %cst {dimension_numbers = #tpu.dot_dimension_numbers<[1], [0], [0], [1], [0, 0, 1, 1], [], []>} : vector<8x768xbf16>, vector<768x32xbf16>, vector<8x32xf32> -> vector<8x32xf32>
    %cst_3 = arith.constant 0.000000e+00 : f32
    %3 = vector.broadcast %cst_3 : f32 to vector<8x32xf32>
    %4 = arith.maximumf %2, %3 : vector<8x32xf32>
    %5 = arith.truncf %4 : vector<8x32xf32> to vector<8x32xbf16>
    %c0_4 = arith.constant 0 : index
    %c0_5 = arith.constant 0 : index
    %6 = vector.load %arg2[%c0_4, %c0_5] : memref<32x12xbf16, #tpu.memory_space<vmem>>, vector<32x12xbf16>
    %cst_6 = arith.constant dense<0.000000e+00> : vector<8x12xf32>
    %7 = tpu.matmul %5, %6, %cst_6 {dimension_numbers = #tpu.dot_dimension_numbers<[1], [0], [0], [1], [0, 0, 1, 1], [], []>} : vector<8x32xbf16>, vector<32x12xbf16>, vector<8x12xf32> -> vector<8x12xf32>
    %8 = vector.extract_strided_slice %7 {offsets = [0, 0], sizes = [8, 4], strides = [1, 1]} : vector<8x12xf32> to vector<8x4xf32>
    %9 = vector.extract_strided_slice %7 {offsets = [0, 4], sizes = [8, 8], strides = [1, 1]} : vector<8x12xf32> to vector<8x8xf32>
    %cst_7 = arith.constant dense<0xFF800000> : vector<8xf32>
    %10 = vector.multi_reduction <maximumf>, %8, %cst_7 [1] : vector<8x4xf32> to vector<8xf32>
    %11 = vector.shape_cast %10 : vector<8xf32> to vector<8x1xf32>
    %12 = vector.broadcast %11 : vector<8x1xf32> to vector<8x4xf32>
    %13 = arith.subf %8, %12 : vector<8x4xf32>
    %14 = math.exp %13 : vector<8x4xf32>
    %cst_8 = arith.constant dense<0.000000e+00> : vector<8xf32>
    %15 = vector.multi_reduction <add>, %14, %cst_8 [1] : vector<8x4xf32> to vector<8xf32>
    %16 = vector.shape_cast %15 : vector<8xf32> to vector<8x1xf32>
    %17 = vector.broadcast %16 : vector<8x1xf32> to vector<8x4xf32>
    %18 = arith.divf %14, %17 : vector<8x4xf32>
    %19 = vector.extract_strided_slice %18 {offsets = [0, 0], sizes = [8, 1], strides = [1, 1]} : vector<8x4xf32> to vector<8x1xf32>
    %20 = vector.broadcast %19 : vector<8x1xf32> to vector<8x8xf32>
    %21 = arith.mulf %20, %9 : vector<8x8xf32>
    %c0_9 = arith.constant 0 : index
    %c0_10 = arith.constant 0 : index
    %22 = vector.load %arg3[%c0_9, %c0_10] : memref<8x32xf32, #tpu.memory_space<vmem>>, vector<8x8xf32>
    tpu.vector_store %arg3[%c0_9, %c0_10], %21 {strides = array<i32>} : memref<8x32xf32, #tpu.memory_space<vmem>>, vector<8x8xf32>,
    %23 = vector.extract_strided_slice %18 {offsets = [0, 1], sizes = [8, 1], strides = [1, 1]} : vector<8x4xf32> to vector<8x1xf32>
    %24 = vector.broadcast %23 : vector<8x1xf32> to vector<8x8xf32>
    %25 = arith.mulf %24, %9 : vector<8x8xf32>
    %c0_11 = arith.constant 0 : index
    %c8 = arith.constant 8 : index
    %26 = vector.load %arg3[%c0_11, %c8] : memref<8x32xf32, #tpu.memory_space<vmem>>, vector<8x8xf32>
    tpu.vector_store %arg3[%c0_11, %c8], %25 {strides = array<i32>} : memref<8x32xf32, #tpu.memory_space<vmem>>, vector<8x8xf32>,
    %27 = vector.extract_strided_slice %18 {offsets = [0, 2], sizes = [8, 1], strides = [1, 1]} : vector<8x4xf32> to vector<8x1xf32>
    %28 = vector.broadcast %27 : vector<8x1xf32> to vector<8x8xf32>
    %29 = arith.mulf %28, %9 : vector<8x8xf32>
    %c0_12 = arith.constant 0 : index
    %c16 = arith.constant 16 : index
    %30 = vector.load %arg3[%c0_12, %c16] : memref<8x32xf32, #tpu.memory_space<vmem>>, vector<8x8xf32>
    tpu.vector_store %arg3[%c0_12, %c16], %29 {strides = array<i32>} : memref<8x32xf32, #tpu.memory_space<vmem>>, vector<8x8xf32>,
    %31 = vector.extract_strided_slice %18 {offsets = [0, 3], sizes = [8, 1], strides = [1, 1]} : vector<8x4xf32> to vector<8x1xf32>
    %32 = vector.broadcast %31 : vector<8x1xf32> to vector<8x8xf32>
    %33 = arith.mulf %32, %9 : vector<8x8xf32>
    %c0_13 = arith.constant 0 : index
    %c24 = arith.constant 24 : index
    %34 = vector.load %arg3[%c0_13, %c24] : memref<8x32xf32, #tpu.memory_space<vmem>>, vector<8x8xf32>
    tpu.vector_store %arg3[%c0_13, %c24], %33 {strides = array<i32>} : memref<8x32xf32, #tpu.memory_space<vmem>>, vector<8x8xf32>,
    return
  }
}

module attributes {stable_mosaic.version = 11 : i64} {
  func.func @_matmul_kernel(%arg0: i32, %arg1: memref<128x72xbf16, #tpu.memory_space<vmem>>, %arg2: memref<72x128xbf16, #tpu.memory_space<vmem>>, %arg3: memref<1x128xf32, #tpu.memory_space<vmem>>, %arg4: memref<128x128xf32, #tpu.memory_space<vmem>>) attributes {dimension_semantics = [#tpu.dimension_semantics<parallel>], iteration_bounds = array<i64: 2>, scalar_prefetch = 0 : i64, scratch_operands = 0 : i64, tpu.core_type = #tpu.core_type<tc>, window_params = [{transform_indices = @transform_0, window_bounds = array<i64: 128, 72>}, {pipeline_mode = #tpu.pipeline_mode<synchronous>, transform_indices = @transform_1, window_bounds = array<i64: 72, 128>}, {pipeline_mode = #tpu.pipeline_mode<synchronous>, transform_indices = @transform_2, window_bounds = array<i64: 1, 128>}, {transform_indices = @transform_3, window_bounds = array<i64: 128, 128>}]} {
    %c0 = arith.constant 0 : index
    %c0_0 = arith.constant 0 : index
    %0 = vector.load %arg1[%c0, %c0_0] : memref<128x72xbf16, #tpu.memory_space<vmem>>, vector<128x72xbf16>
    %c0_1 = arith.constant 0 : index
    %c0_2 = arith.constant 0 : index
    %1 = vector.load %arg2[%c0_1, %c0_2] : memref<72x128xbf16, #tpu.memory_space<vmem>>, vector<72x128xbf16>
    %cst = arith.constant dense<0.000000e+00> : vector<128x128xf32>
    %2 = tpu.matmul %0, %1, %cst {dimension_numbers = #tpu.dot_dimension_numbers<[1], [0], [0], [1], [0, 0, 1, 1], [], []>} : vector<128x72xbf16>, vector<72x128xbf16>, vector<128x128xf32> -> vector<128x128xf32>
    %c0_3 = arith.constant 0 : index
    %c0_4 = arith.constant 0 : index
    %3 = vector.load %arg3[%c0_3, %c0_4] : memref<1x128xf32, #tpu.memory_space<vmem>>, vector<1x128xf32>
    %4 = vector.broadcast %3 : vector<1x128xf32> to vector<128x128xf32>
    %5 = arith.addf %2, %4 : vector<128x128xf32>
    %cst_5 = arith.constant 0.000000e+00 : f32
    %6 = vector.broadcast %cst_5 : f32 to vector<128x128xf32>
    %7 = arith.maximumf %5, %6 : vector<128x128xf32>
    %c0_6 = arith.constant 0 : index
    %c0_7 = arith.constant 0 : index
    %8 = vector.load %arg4[%c0_6, %c0_7] : memref<128x128xf32, #tpu.memory_space<vmem>>, vector<128x128xf32>
    tpu.vector_store %arg4[%c0_6, %c0_7], %7 {strides = array<i32>} : memref<128x128xf32, #tpu.memory_space<vmem>>, vector<128x128xf32>,
    return
  }
  func.func @transform_0(%arg0: i32) -> (i32, i32) {
    %c0_i32 = arith.constant 0 : i32
    %c0_i32_0 = arith.constant 0 : i32
    return %arg0, %c0_i32 : i32, i32
  }
  func.func @transform_1(%arg0: i32) -> (i32, i32) {
    %c0_i32 = arith.constant 0 : i32
    %c0_i32_0 = arith.constant 0 : i32
    %c0_i32_1 = arith.constant 0 : i32
    return %c0_i32, %c0_i32_0 : i32, i32
  }
  func.func @transform_2(%arg0: i32) -> (i32, i32) {
    %c0_i32 = arith.constant 0 : i32
    %c0_i32_0 = arith.constant 0 : i32
    %c0_i32_1 = arith.constant 0 : i32
    return %c0_i32, %c0_i32_0 : i32, i32
  }
  func.func @transform_3(%arg0: i32) -> (i32, i32) {
    %c0_i32 = arith.constant 0 : i32
    %c0_i32_0 = arith.constant 0 : i32
    return %arg0, %c0_i32 : i32, i32
  }
}

module attributes {stable_mosaic.version = 11 : i64} {
  func.func @_matmul_kernel(%arg0: i32, %arg1: memref<128x288xbf16, #tpu.memory_space<vmem>>, %arg2: memref<288x128xbf16, #tpu.memory_space<vmem>>, %arg3: memref<1x128xf32, #tpu.memory_space<vmem>>, %arg4: memref<128x128xf32, #tpu.memory_space<vmem>>) attributes {dimension_semantics = [#tpu.dimension_semantics<parallel>], iteration_bounds = array<i64: 2>, scalar_prefetch = 0 : i64, scratch_operands = 0 : i64, tpu.core_type = #tpu.core_type<tc>, window_params = [{transform_indices = @transform_0, window_bounds = array<i64: 128, 288>}, {pipeline_mode = #tpu.pipeline_mode<synchronous>, transform_indices = @transform_1, window_bounds = array<i64: 288, 128>}, {pipeline_mode = #tpu.pipeline_mode<synchronous>, transform_indices = @transform_2, window_bounds = array<i64: 1, 128>}, {transform_indices = @transform_3, window_bounds = array<i64: 128, 128>}]} {
    %c0 = arith.constant 0 : index
    %c0_0 = arith.constant 0 : index
    %0 = vector.load %arg1[%c0, %c0_0] : memref<128x288xbf16, #tpu.memory_space<vmem>>, vector<128x288xbf16>
    %c0_1 = arith.constant 0 : index
    %c0_2 = arith.constant 0 : index
    %1 = vector.load %arg2[%c0_1, %c0_2] : memref<288x128xbf16, #tpu.memory_space<vmem>>, vector<288x128xbf16>
    %cst = arith.constant dense<0.000000e+00> : vector<128x128xf32>
    %2 = tpu.matmul %0, %1, %cst {dimension_numbers = #tpu.dot_dimension_numbers<[1], [0], [0], [1], [0, 0, 1, 1], [], []>} : vector<128x288xbf16>, vector<288x128xbf16>, vector<128x128xf32> -> vector<128x128xf32>
    %c0_3 = arith.constant 0 : index
    %c0_4 = arith.constant 0 : index
    %3 = vector.load %arg3[%c0_3, %c0_4] : memref<1x128xf32, #tpu.memory_space<vmem>>, vector<1x128xf32>
    %4 = vector.broadcast %3 : vector<1x128xf32> to vector<128x128xf32>
    %5 = arith.addf %2, %4 : vector<128x128xf32>
    %cst_5 = arith.constant 0.000000e+00 : f32
    %6 = vector.broadcast %cst_5 : f32 to vector<128x128xf32>
    %7 = arith.maximumf %5, %6 : vector<128x128xf32>
    %c0_6 = arith.constant 0 : index
    %c0_7 = arith.constant 0 : index
    %8 = vector.load %arg4[%c0_6, %c0_7] : memref<128x128xf32, #tpu.memory_space<vmem>>, vector<128x128xf32>
    tpu.vector_store %arg4[%c0_6, %c0_7], %7 {strides = array<i32>} : memref<128x128xf32, #tpu.memory_space<vmem>>, vector<128x128xf32>,
    return
  }
  func.func @transform_0(%arg0: i32) -> (i32, i32) {
    %c0_i32 = arith.constant 0 : i32
    %c0_i32_0 = arith.constant 0 : i32
    return %arg0, %c0_i32 : i32, i32
  }
  func.func @transform_1(%arg0: i32) -> (i32, i32) {
    %c0_i32 = arith.constant 0 : i32
    %c0_i32_0 = arith.constant 0 : i32
    %c0_i32_1 = arith.constant 0 : i32
    return %c0_i32, %c0_i32_0 : i32, i32
  }
  func.func @transform_2(%arg0: i32) -> (i32, i32) {
    %c0_i32 = arith.constant 0 : i32
    %c0_i32_0 = arith.constant 0 : i32
    %c0_i32_1 = arith.constant 0 : i32
    return %c0_i32, %c0_i32_0 : i32, i32
  }
  func.func @transform_3(%arg0: i32) -> (i32, i32) {
    %c0_i32 = arith.constant 0 : i32
    %c0_i32_0 = arith.constant 0 : i32
    return %arg0, %c0_i32 : i32, i32
  }
}

module attributes {stable_mosaic.version = 11 : i64} {
  func.func @_latent_flow_kernel(%arg0: i32, %arg1: memref<128x288xbf16, #tpu.memory_space<vmem>>, %arg2: memref<288x16xbf16, #tpu.memory_space<vmem>>, %arg3: memref<16x128xbf16, #tpu.memory_space<vmem>>, %arg4: memref<1x128xf32, #tpu.memory_space<vmem>>, %arg5: memref<128x128xf32, #tpu.memory_space<vmem>>) attributes {dimension_semantics = [#tpu.dimension_semantics<parallel>], iteration_bounds = array<i64: 2>, scalar_prefetch = 0 : i64, scratch_operands = 0 : i64, tpu.core_type = #tpu.core_type<tc>, window_params = [{transform_indices = @transform_0, window_bounds = array<i64: 128, 288>}, {pipeline_mode = #tpu.pipeline_mode<synchronous>, transform_indices = @transform_1, window_bounds = array<i64: 288, 16>}, {pipeline_mode = #tpu.pipeline_mode<synchronous>, transform_indices = @transform_2, window_bounds = array<i64: 16, 128>}, {pipeline_mode = #tpu.pipeline_mode<synchronous>, transform_indices = @transform_3, window_bounds = array<i64: 1, 128>}, {transform_indices = @transform_4, window_bounds = array<i64: 128, 128>}]} {
    %c0 = arith.constant 0 : index
    %c0_0 = arith.constant 0 : index
    %0 = vector.load %arg1[%c0, %c0_0] : memref<128x288xbf16, #tpu.memory_space<vmem>>, vector<128x288xbf16>
    %c0_1 = arith.constant 0 : index
    %c0_2 = arith.constant 0 : index
    %1 = vector.load %arg2[%c0_1, %c0_2] : memref<288x16xbf16, #tpu.memory_space<vmem>>, vector<288x16xbf16>
    %cst = arith.constant dense<0.000000e+00> : vector<128x16xf32>
    %2 = tpu.matmul %0, %1, %cst {dimension_numbers = #tpu.dot_dimension_numbers<[1], [0], [0], [1], [0, 0, 1, 1], [], []>} : vector<128x288xbf16>, vector<288x16xbf16>, vector<128x16xf32> -> vector<128x16xf32>
    %cst_3 = arith.constant 0.000000e+00 : f32
    %3 = vector.broadcast %cst_3 : f32 to vector<128x16xf32>
    %4 = arith.maximumf %2, %3 : vector<128x16xf32>
    %5 = arith.truncf %4 : vector<128x16xf32> to vector<128x16xbf16>
    %c0_4 = arith.constant 0 : index
    %c0_5 = arith.constant 0 : index
    %6 = vector.load %arg3[%c0_4, %c0_5] : memref<16x128xbf16, #tpu.memory_space<vmem>>, vector<16x128xbf16>
    %cst_6 = arith.constant dense<0.000000e+00> : vector<128x128xf32>
    %7 = tpu.matmul %5, %6, %cst_6 {dimension_numbers = #tpu.dot_dimension_numbers<[1], [0], [0], [1], [0, 0, 1, 1], [], []>} : vector<128x16xbf16>, vector<16x128xbf16>, vector<128x128xf32> -> vector<128x128xf32>
    %c0_7 = arith.constant 0 : index
    %c0_8 = arith.constant 0 : index
    %8 = vector.load %arg4[%c0_7, %c0_8] : memref<1x128xf32, #tpu.memory_space<vmem>>, vector<1x128xf32>
    %9 = vector.broadcast %8 : vector<1x128xf32> to vector<128x128xf32>
    %10 = arith.addf %7, %9 : vector<128x128xf32>
    %c0_9 = arith.constant 0 : index
    %c0_10 = arith.constant 0 : index
    %11 = vector.load %arg5[%c0_9, %c0_10] : memref<128x128xf32, #tpu.memory_space<vmem>>, vector<128x128xf32>
    tpu.vector_store %arg5[%c0_9, %c0_10], %10 {strides = array<i32>} : memref<128x128xf32, #tpu.memory_space<vmem>>, vector<128x128xf32>,
    return
  }
  func.func @transform_0(%arg0: i32) -> (i32, i32) {
    %c0_i32 = arith.constant 0 : i32
    %c0_i32_0 = arith.constant 0 : i32
    return %arg0, %c0_i32 : i32, i32
  }
  func.func @transform_1(%arg0: i32) -> (i32, i32) {
    %c0_i32 = arith.constant 0 : i32
    %c0_i32_0 = arith.constant 0 : i32
    %c0_i32_1 = arith.constant 0 : i32
    return %c0_i32, %c0_i32_0 : i32, i32
  }
  func.func @transform_2(%arg0: i32) -> (i32, i32) {
    %c0_i32 = arith.constant 0 : i32
    %c0_i32_0 = arith.constant 0 : i32
    %c0_i32_1 = arith.constant 0 : i32
    return %c0_i32, %c0_i32_0 : i32, i32
  }
  func.func @transform_3(%arg0: i32) -> (i32, i32) {
    %c0_i32 = arith.constant 0 : i32
    %c0_i32_0 = arith.constant 0 : i32
    %c0_i32_1 = arith.constant 0 : i32
    return %c0_i32, %c0_i32_0 : i32, i32
  }
  func.func @transform_4(%arg0: i32) -> (i32, i32) {
    %c0_i32 = arith.constant 0 : i32
    %c0_i32_0 = arith.constant 0 : i32
    return %arg0, %c0_i32 : i32, i32
  }
}

module attributes {stable_mosaic.version = 11 : i64} {
  func.func @_matmul_kernel(%arg0: i32, %arg1: memref<128x27xbf16, #tpu.memory_space<vmem>>, %arg2: memref<27x128xbf16, #tpu.memory_space<vmem>>, %arg3: memref<1x128xf32, #tpu.memory_space<vmem>>, %arg4: memref<128x128xf32, #tpu.memory_space<vmem>>) attributes {dimension_semantics = [#tpu.dimension_semantics<parallel>], iteration_bounds = array<i64: 2>, scalar_prefetch = 0 : i64, scratch_operands = 0 : i64, tpu.core_type = #tpu.core_type<tc>, window_params = [{transform_indices = @transform_0, window_bounds = array<i64: 128, 27>}, {pipeline_mode = #tpu.pipeline_mode<synchronous>, transform_indices = @transform_1, window_bounds = array<i64: 27, 128>}, {pipeline_mode = #tpu.pipeline_mode<synchronous>, transform_indices = @transform_2, window_bounds = array<i64: 1, 128>}, {transform_indices = @transform_3, window_bounds = array<i64: 128, 128>}]} {
    %c0 = arith.constant 0 : index
    %c0_0 = arith.constant 0 : index
    %0 = vector.load %arg1[%c0, %c0_0] : memref<128x27xbf16, #tpu.memory_space<vmem>>, vector<128x27xbf16>
    %c0_1 = arith.constant 0 : index
    %c0_2 = arith.constant 0 : index
    %1 = vector.load %arg2[%c0_1, %c0_2] : memref<27x128xbf16, #tpu.memory_space<vmem>>, vector<27x128xbf16>
    %cst = arith.constant dense<0.000000e+00> : vector<128x128xf32>
    %2 = tpu.matmul %0, %1, %cst {dimension_numbers = #tpu.dot_dimension_numbers<[1], [0], [0], [1], [0, 0, 1, 1], [], []>} : vector<128x27xbf16>, vector<27x128xbf16>, vector<128x128xf32> -> vector<128x128xf32>
    %c0_3 = arith.constant 0 : index
    %c0_4 = arith.constant 0 : index
    %3 = vector.load %arg3[%c0_3, %c0_4] : memref<1x128xf32, #tpu.memory_space<vmem>>, vector<1x128xf32>
    %4 = vector.broadcast %3 : vector<1x128xf32> to vector<128x128xf32>
    %5 = arith.addf %2, %4 : vector<128x128xf32>
    %6 = math.exp %5 : vector<128x128xf32>
    %cst_5 = arith.constant 1.000000e+00 : f32
    %7 = vector.broadcast %cst_5 : f32 to vector<128x128xf32>
    %8 = arith.addf %6, %7 : vector<128x128xf32>
    %cst_6 = arith.constant 9.99999974E-5 : f32
    %9 = vector.broadcast %cst_6 : f32 to vector<128x128xf32>
    %10 = arith.maximumf %8, %9 : vector<128x128xf32>
    %c0_7 = arith.constant 0 : index
    %c0_8 = arith.constant 0 : index
    %11 = vector.load %arg4[%c0_7, %c0_8] : memref<128x128xf32, #tpu.memory_space<vmem>>, vector<128x128xf32>
    tpu.vector_store %arg4[%c0_7, %c0_8], %10 {strides = array<i32>} : memref<128x128xf32, #tpu.memory_space<vmem>>, vector<128x128xf32>,
    return
  }
  func.func @transform_0(%arg0: i32) -> (i32, i32) {
    %c0_i32 = arith.constant 0 : i32
    %c0_i32_0 = arith.constant 0 : i32
    return %arg0, %c0_i32 : i32, i32
  }
  func.func @transform_1(%arg0: i32) -> (i32, i32) {
    %c0_i32 = arith.constant 0 : i32
    %c0_i32_0 = arith.constant 0 : i32
    %c0_i32_1 = arith.constant 0 : i32
    return %c0_i32, %c0_i32_0 : i32, i32
  }
  func.func @transform_2(%arg0: i32) -> (i32, i32) {
    %c0_i32 = arith.constant 0 : i32
    %c0_i32_0 = arith.constant 0 : i32
    %c0_i32_1 = arith.constant 0 : i32
    return %c0_i32, %c0_i32_0 : i32, i32
  }
  func.func @transform_3(%arg0: i32) -> (i32, i32) {
    %c0_i32 = arith.constant 0 : i32
    %c0_i32_0 = arith.constant 0 : i32
    return %arg0, %c0_i32 : i32, i32
  }
}

</mosaic_0001>

<llo_original>
// kernel: custom-call.24
$region0: #{custom-call.24}
  %s0 = inlined_call_operand.vmem [shape: f32[2,3,3], index: 0, kind: input, shape index: {}]
  %s1 = inlined_call_operand.vmem [shape: f32[2,3,3], index: 1, kind: output, shape index: {0}]
  %s2 = inlined_call_operand.hbm [shape: s32[2,3], index: 2, kind: output, shape index: {1}]
  %s3 = inlined_call_operand.vmem [shape: s32[2,3], index: 3, kind: output, shape index: {2}]
  %4 = xla_tuple %s1, %s2, %s3
  $region1: #{custom-call.24} parent=0
    #allocation0 [shape = 'u8[4096]{0}', space=vmem, size = 0x1000, scoped, tag = 'operand span for operand 0']
    #allocation1 [shape = 'u8[4096]{0}', space=vmem, size = 0x1000, scoped, tag = 'packed  for operand 0']
    #allocation2 [shape = 'u8[4096]{0}', space=vmem, size = 0x1000, scoped, tag = 'operand span for operand 1']
    #allocation3 [shape = 'u8[4096]{0}', space=vmem, size = 0x1000, scoped, tag = 'packed  for operand 1']
    #allocation4 [shape = 'u8[4096]{0}', space=vmem, size = 0x1000, scoped, tag = 'operand span for operand 2']
    #allocation5 [shape = 'u8[2048]{0}', space=vmem, size = 0x800, scoped, tag = 'packed  for operand 2']
    #allocation6 [shape = 's32[2]{0}', space=sflag, size = 0x8, scoped, tag = 'scoped memory for custom-call.24']
    #allocation7 [shape = 'u8[4096]{0}', space=vmem, size = 0x1000, scoped, tag = 'operand span for operand 3']
    #allocation8 [shape = 'u8[2048]{0}', space=vmem, size = 0x800, scoped, tag = 'packed  for operand 3']
    %5 = vsyncpa [#allocation6], 0
    %s6 = scalar_lea.sflag [#allocation6], 1
    %7 = vsyncpa %s6, 0
    loop: start=0, step=1, limit=4
    $region2: #{custom-call.24} parent=1 // loop_pre_header
      _
    $region3: #{custom-call.24} parent=1 // loop_header
      %s9 = sphi 0, %s13
      %p10 = scmp.ge.s32.totalorder %s9, 4
      %s21 = sphi 0, %s23
      %s24 = sphi 0, %s21
      %s25 = sphi 0, %s24
      %s41 = sphi 0, %s25
      %s49 = sphi 0, %s51
      %s52 = sphi 0, %s49
      %s53 = sphi 0, %s52
      %s69 = sphi 0, %s53
    $region4: #{custom-call.24} parent=1 // loop_header_branch
      %12 = sbr.rel (%p10) target = $region8
    $region5: #{custom-call.24} parent=1 // loop_body
      %s14 = ssub.s32 %s9, 1
      %s15 = ssub.s32 %s9, 2
      %s16 = sadd.s32 %s9, 1
      %s17 = sshrl.u32 %s9, 3
      %s18 = sshrl.u32 %s16, 3
      %s19 = ssub.s32 %s17, %s18
      %p20 = scmp.eq.s32.totalorder %s19, 0
      %s22 = sadd.s32 %s21, 1
      %s23 = scalar_select %p20, %s21, %s22
      %p26 = pneg %p20
      %p27 = scmp.eq.s32.totalorder %s9, 1
      %p28 = por %p26, %p27
      %p29 = scmp.ne.s32.totalorder %s21, %s24
      %p30 = scmp.eq.s32.totalorder %s9, 0
      %p31 = por %p29, %p30
      %p32 = scmp.ne.s32.totalorder %s21, %s24
      %p33 = scmp.eq.s32.totalorder %s14, 1
      %p34 = por %p32, %p33
      %p35 = scmp.ne.s32.totalorder %s24, %s25
      %p36 = scmp.eq.s32.totalorder %s14, 0
      %p37 = por %p35, %p36
      %p38 = scmp.ne.s32.totalorder %s24, %s25
      %p39 = scmp.eq.s32.totalorder %s15, 1
      %p40 = por %p38, %p39
      %p42 = scmp.ne.s32.totalorder %s25, %s41
      %p43 = scmp.eq.s32.totalorder %s15, 0
      %p44 = por %p42, %p43
      %s45 = sshrl.u32 %s9, 3
      %s46 = sshrl.u32 %s16, 3
      %s47 = ssub.s32 %s45, %s46
      %p48 = scmp.eq.s32.totalorder %s47, 0
      %s50 = sadd.s32 %s49, 1
      %s51 = scalar_select %p48, %s49, %s50
      %p54 = pneg %p48
      %p55 = scmp.eq.s32.totalorder %s9, 1
      %p56 = por %p54, %p55
      %p57 = scmp.ne.s32.totalorder %s49, %s52
      %p58 = scmp.eq.s32.totalorder %s9, 0
      %p59 = por %p57, %p58
      %p60 = scmp.ne.s32.totalorder %s49, %s52
      %p61 = scmp.eq.s32.totalorder %s14, 1
      %p62 = por %p60, %p61
      %p63 = scmp.ne.s32.totalorder %s52, %s53
      %p64 = scmp.eq.s32.totalorder %s14, 0
      %p65 = por %p63, %p64
      %p66 = scmp.ne.s32.totalorder %s52, %s53
      %p67 = scmp.eq.s32.totalorder %s15, 1
      %p68 = por %p66, %p67
      %p70 = scmp.ne.s32.totalorder %s53, %s69
      %p71 = scmp.eq.s32.totalorder %s15, 0
      %p72 = por %p70, %p71
      %p73 = scmp.le.s32.totalorder 1, %s9
      %p74 = scmp.lt.s32.totalorder %s9, 3
      %p75 = pnand %p73, %p74
      %p76 = pneg %p75
      // Predicated region
      $region9: #{custom-call.24} parent=5 // pred_check
        _
      $region10: #{custom-call.24} parent=5 // pred_check_branch
        %78 = sbr.rel (%p75) target = $region12
      $region11: #{custom-call.24} parent=5 // pred_region
        %s79 = ssub.s32 %s9, 1
      $region12: #{custom-call.24} parent=5 // pred_fallthru
        _
      %p80 = scmp.lt.s32.totalorder %s9, 2
      // Predicated region
      $region13: #{custom-call.24} parent=5 // pred_check
        %p81 = pneg %p80
      $region14: #{custom-call.24} parent=5 // pred_check_branch
        %83 = sbr.rel (%p81) target = $region16
      $region15: #{custom-call.24} parent=5 // pred_region
        %s84 = sand.u32 %s9, 1
        %s85 = sand.u32 %s9, 1
        %s86 = smul.addr %s85, 4
        %s87 = scalar_lea.vmem [#allocation1], %s86
        %s88 = smul.addr %s9, 4
        %s89 = scalar_lea.vmem %s0, %s88
        // Predicated region
        $region17: #{custom-call.24} parent=15 // pred_check
          _
        $region18: #{custom-call.24} parent=15 // pred_check_branch
          %91 = sbr.rel (0) target = $region20
        $region19: #{custom-call.24} parent=15 // pred_region
          // Predicated region
          $region21: #{custom-call.24} parent=19 // pred_check
            _
          $region22: #{custom-call.24} parent=19 // pred_check_branch
            %93 = sbr.rel target = $region24
          $region23: #{custom-call.24} parent=19 // pred_region
            // Predicated region
            $region36: #{custom-call.24} parent=23 // pred_check
              _
            $region37: #{custom-call.24} parent=23 // pred_check_branch
              %109 = sbr.rel (0) target = $region39
            $region38: #{custom-call.24} parent=23 // pred_region
              %s111 = ssub.s32 16, 1
              loop: start=0, step=1, limit=1
              $region40: #{custom-call.24} parent=38 // loop_pre_header
                _
              $region41: #{custom-call.24} parent=38 // loop_header
                %s113 = sphi 0, %s117
                %p114 = scmp.ge.s32.totalorder %s113, 1
                %s118 = sphi %s89, %s89
                %s119 = sphi %s87, %s87
              $region42: #{custom-call.24} parent=38 // loop_header_branch
                %116 = sbr.rel (%p114) target = $region46
              $region43: #{custom-call.24} parent=38 // loop_body
                %v120 = vld [vmem:[%s118] sm:%s111]
                %121 = vst [vmem:[%s119] sm:%s111] %v120
              $region44: #{custom-call.24} parent=38 // loop_footer
                %s117 = sadd.s32 1, %s113
              $region45: #{custom-call.24} parent=38 // loop_footer_branch
                %112 = sbr.rel target = $region41
              $region46: #{custom-call.24} parent=38 // loop_exit
                _
            $region39: #{custom-call.24} parent=23 // pred_fallthru
              _
          $region24: #{custom-call.24} parent=19 // pred_fallthru
            _
          // Predicated region
          $region25: #{custom-call.24} parent=19 // pred_check
            _
          $region26: #{custom-call.24} parent=19 // pred_check_branch
            %95 = sbr.rel (0) target = $region28
          $region27: #{custom-call.24} parent=19 // pred_region
            %s97 = ssub.s32 16, 1
            loop: start=0, step=1, limit=1
            $region29: #{custom-call.24} parent=27 // loop_pre_header
              _
            $region30: #{custom-call.24} parent=27 // loop_header
              %s99 = sphi 0, %s103
              %p100 = scmp.ge.s32.totalorder %s99, 1
              %s104 = sphi %s89, %s89
              %s105 = sphi %s87, %s87
            $region31: #{custom-call.24} parent=27 // loop_header_branch
              %102 = sbr.rel (%p100) target = $region35
            $region32: #{custom-call.24} parent=27 // loop_body
              %v106 = vld [vmem:[%s104] sm:%s97]
              %107 = vst [vmem:[%s105] sm:%s97] %v106
            $region33: #{custom-call.24} parent=27 // loop_footer
              %s103 = sadd.s32 1, %s99
            $region34: #{custom-call.24} parent=27 // loop_footer_branch
              %98 = sbr.rel target = $region30
            $region35: #{custom-call.24} parent=27 // loop_exit
              _
          $region28: #{custom-call.24} parent=19 // pred_fallthru
            _
        $region20: #{custom-call.24} parent=15 // pred_fallthru
          _
        %122 = vnop
      $region16: #{custom-call.24} parent=5 // pred_fallthru
        _
      %p123 = scmp.le.s32.totalorder 1, %s9
      %p124 = scmp.lt.s32.totalorder %s9, 3
      %p125 = pnand %p123, %p124
      %p126 = pneg %p125
      // Predicated region
      $region47: #{custom-call.24} parent=5 // pred_check
        _
      $region48: #{custom-call.24} parent=5 // pred_check_branch
        %128 = sbr.rel (%p125) target = $region50
      $region49: #{custom-call.24} parent=5 // pred_region
        #allocation9 [shape = 's32[3,128]{1,0}', space=vmem, size = 0x1000, scoped, tag = 'scratch for permutations']
        %s129 = ssub.s32 %s9, 1
        %s130 = sand.u32 %s14, 1
        %s131 = sand.u32 %s14, 1
        %s132 = smul.addr %s131, 4
        %s133 = scalar_lea.vmem [#allocation1], %s132
        %s134 = sand.u32 %s14, 1
        %s135 = sand.u32 %s14, 1
        %s136 = smul.addr %s135, 4
        %s137 = scalar_lea.vmem [#allocation1], %s136
        %s138 = sand.u32 %s14, 1
        %s139 = sand.u32 %s14, 1
        %s140 = smul.addr %s139, 4
        %s141 = scalar_lea.vmem [#allocation3], %s140
        %p142 = pneg %p37
        %p143 = pneg %p34
        %s144 = sand.u32 %s24, 1
        %s145 = scalar_lea.sflag [#allocation6], %s144
        %s146 = sand.u32 %s24, 1
        %s147 = smul.addr %s146, 2
        %s148 = scalar_lea.vmem [#allocation5], %s147
        %p149 = pneg %p65
        %p150 = pneg %p62
        %s151 = sand.u32 %s52, 1
        %s152 = sand.u32 %s52, 1
        %s153 = smul.addr %s152, 2
        %s154 = scalar_lea.vmem [#allocation8], %s153
        %s156 = ssub.s32 16, 1
        %v157 = vld [vmem:[%s137] sm:%s156]
        %158 = vst [vmem:[#allocation0] sm:%s156] %v157
        %s159 = sshrl.u32 %s14, 3
        %s160 = sshrl.u32 %s14, 3
        %v161 = vld [vmem:[#allocation0] sm:$0xff]
        %162 = vst [vmem:[#allocation2] sm:$0xff] %v161
        %s163 = sand.u32 %s14, 7
        %s164 = scalar_lea.vmem [#allocation4], %s163
        %s165 = sand.u32 %s14, 7
        %s166 = scalar_lea.vmem [#allocation7], %s165
        %167 = vst [vmem:[%s164] sm:$0x1] 0
        %v168 = vlaneseq
        %v169 = vshrl.u32 %v168, 7
        %v170 = vmov %v169
        %172 = vst [vmem:[#allocation9] sm:$0xff] %v170
        loop: start=0, step=1, limit=3
        $region52: #{custom-call.24} parent=49 // loop_pre_header
          _
        $region53: #{custom-call.24} parent=49 // loop_header
          %s174 = sphi 0, %s178
          %p175 = scmp.ge.s32.totalorder %s174, 3
        $region54: #{custom-call.24} parent=49 // loop_header_branch
          %177 = sbr.rel (%p175) target = $region58
        $region55: #{custom-call.24} parent=49 // loop_body
          %v179 = vstv %s174
          %v180 = vlaneseq
          %v181 = vshrl.u32 %v180, 7
          %v182 = vmov %v181
          %v183 = vld [vmem:[#allocation2] sm:$0xff]
          %v184 = vand.u32 2147483647, %v183
          %v186 = vstv %s174
          %vm187 = vcmp.ge.s32.totalorder %v182, %v186
          %vm188 = vcmp.lt.s32.totalorder %v182, 3
          %vm189 = vmand %vm187, %vm188
          %vm190 = vcmp.lt.f32.partialorder -inf, %v184
          %vm191 = vmand %vm189, %vm190
          %v192 = vsel %vm191, %v182, %v179
          %v193 = vsel %vm191, %v184, -inf
          %v194 = vrot.slane %v193, 1
          %v195 = vrot.slane %v192, 1
          %vm196 = vcmp.ge.f32.partialorder %v194, %v193
          %v197 = vsel %vm196, %v194, %v193
          %v198 = vsel %vm196, %v195, %v192
          %v199 = vrot.slane %v194, 1
          %v200 = vrot.slane %v195, 1
          %vm201 = vcmp.ge.f32.partialorder %v199, %v197
          %v202 = vsel %vm201, %v199, %v197
          %v203 = vsel %vm201, %v200, %v198
          %v204 = vrot.slane %v199, 1
          %v205 = vrot.slane %v200, 1
          %vm206 = vcmp.ge.f32.partialorder %v204, %v202
          %v207 = vsel %vm206, %v204, %v202
          %v208 = vsel %vm206, %v205, %v203
          %v209 = vrot.slane %v204, 1
          %v210 = vrot.slane %v205, 1
          %vm211 = vcmp.ge.f32.partialorder %v209, %v207
          %v212 = vsel %vm211, %v209, %v207
          %v213 = vsel %vm211, %v210, %v208
          %v214 = vrot.slane %v209, 1
          %v215 = vrot.slane %v210, 1
          %vm216 = vcmp.ge.f32.partialorder %v214, %v212
          %v217 = vsel %vm216, %v214, %v212
          %v218 = vsel %vm216, %v215, %v213
          %v219 = vrot.slane %v214, 1
          %v220 = vrot.slane %v215, 1
          %vm221 = vcmp.ge.f32.partialorder %v219, %v217
          %v222 = vsel %vm221, %v219, %v217
          %v223 = vsel %vm221, %v220, %v218
          %v224 = vrot.slane %v219, 1
          %v225 = vrot.slane %v220, 1
          %vm226 = vcmp.ge.f32.partialorder %v224, %v222
          %v227 = vsel %vm226, %v224, %v222
          %v228 = vsel %vm226, %v225, %v223
          %s229 = ssub.s32 128, %s174
          %230 = vrot.lane.b32.xlu0 %v228, %s229
          %v231 = vpop.permute.xlu0 %230
          %s232 = vtos %v231
          %v233 = vstv %s174
          %v234 = vlaneseq
          %v235 = vand.u32 %v234, 127
          %vm236 = vcmp.eq.s32.totalorder %v235, %v233
          %v237 = vstv %s232
          %v238 = vld [vmem:[%s164] ss:$0 sm:$0xff]
          %v239 = vsel %vm236, %v237, %v238
          %240 = vst [vmem:[%s164] sm:$0x1] %v239
          %s241 = scalar_lea.vmem [#allocation2], %s174
          %s242 = scalar_lea.vmem [#allocation2], %s232
          %v243 = vld [vmem:[%s241] ss:$0 sm:$0xff]
          %v244 = vld [vmem:[%s242] ss:$0 sm:$0xff]
          %245 = vst [vmem:[%s242] sm:$0x1] %v243
          %246 = vst [vmem:[%s241] sm:$0x1] %v244
          %s247 = scalar_lea.vmem [#allocation9], %s174
          %s248 = scalar_lea.vmem [#allocation9], %s232
          %v249 = vld [vmem:[%s247] ss:$0 sm:$0xff]
          %v250 = vld [vmem:[%s248] ss:$0 sm:$0xff]
          %251 = vst [vmem:[%s248] sm:$0x1] %v249
          %252 = vst [vmem:[%s247] sm:$0x1] %v250
          %vm253 = vcmp.ne.f32.partialorder %v244, 0.0
          %vm254 = vmand %vm236, %vm253
          %v255 = vsel %vm254, %v244, 1.0
          %v256 = vlaneseq
          %v257 = vand.u32 %v256, 127
          %v258 = vstv %s174
          %vm259 = vcmp.gt.s32.totalorder %v257, %v258
          %v260 = vsel %vm259, %v244, 0.0
          %v261 = vlaneseq
          %v262 = vshrl.u32 %v261, 7
          %v263 = vmov %v262
          %v264 = vld [vmem:[#allocation2] sm:$0xff]
          %v266 = vstv %s174
          %vm267 = vcmp.gt.s32.totalorder %v263, %v266
          %v268 = vsel %vm267, %v255, 1.0
          %v269 = vrcp.pop %v268
          %v270 = vmul.f32 %v268, %v269
          %v271 = vsub.f32 1.0, %v270
          %v272 = vmul.f32 %v269, %v271
          %v273 = vadd.f32 %v269, %v272
          %vm274 = vweird.f32 %v268
          %vm275 = vweird.f32 %v269
          %vm276 = vmor %vm274, %vm275
          %v277 = vsel %vm276, %v269, %v273
          %v278 = vand.u32 2147483647, %v268
          %vm279 = vcmp.eq.f32.partialorder %v278, 8.507059e+37
          %v280 = vand.u32 %v268, 2147483648
          %v281 = vor.u32 1.1754944e-38, %v280
          %v282 = vsel %vm279, %v281, %v277
          %v283 = vmul.f32 %v264, %v282
          %vm284 = vmand %vm267, %vm236
          %v285 = vsel %vm284, %v283, 0.0
          %286 = vadd.xlane.f32.xlu0 %v285
          %v287 = vpop.xlane.xlu0 %286
          %v288 = vmul.f32 %v287, %v260
          %v289 = vsub.f32 %v283, %v288
          %290 = vst [vmem:[#allocation2] sm:$0xff] %v289
        $region56: #{custom-call.24} parent=49 // loop_footer
          %s178 = sadd.s32 1, %s174
        $region57: #{custom-call.24} parent=49 // loop_footer_branch
          %173 = sbr.rel target = $region53
        $region58: #{custom-call.24} parent=49 // loop_exit
          _
        %v291 = vld [vmem:[#allocation9] sm:$0xff]
        %s292 = scalar_lea.vmem [#allocation9], 8
        %s293 = scalar_lea.vmem [#allocation9], 16
        %s294 = scalar_lea.vmem [#allocation9], 24
        %s295 = scalar_lea.vmem [#allocation9], 32
        %s296 = scalar_lea.vmem [#allocation9], 40
        %s297 = scalar_lea.vmem [#allocation9], 48
        %s298 = scalar_lea.vmem [#allocation9], 56
        %s299 = scalar_lea.vmem [#allocation9], 64
        %s300 = scalar_lea.vmem [#allocation9], 72
        %s301 = scalar_lea.vmem [#allocation9], 80
        %s302 = scalar_lea.vmem [#allocation9], 88
        %s303 = scalar_lea.vmem [#allocation9], 96
        %s304 = scalar_lea.vmem [#allocation9], 104
        %s305 = scalar_lea.vmem [#allocation9], 112
        %s306 = scalar_lea.vmem [#allocation9], 120
        %307 = vxpose.xlu0.b32.start [1/16] %v291, 128
        %308 = vxpose.xlu0.b32.cont [2/16] 0, 128
        %309 = vxpose.xlu0.b32.cont [3/16] 0, 128
        %310 = vxpose.xlu0.b32.cont [4/16] 0, 128
        %311 = vxpose.xlu0.b32.cont [5/16] 0, 128
        %312 = vxpose.xlu0.b32.cont [6/16] 0, 128
        %313 = vxpose.xlu0.b32.cont [7/16] 0, 128
        %314 = vxpose.xlu0.b32.cont [8/16] 0, 128
        %315 = vxpose.xlu0.b32.cont [9/16] 0, 128
        %316 = vxpose.xlu0.b32.cont [10/16] 0, 128
        %317 = vxpose.xlu0.b32.cont [11/16] 0, 128
        %318 = vxpose.xlu0.b32.cont [12/16] 0, 128
        %319 = vxpose.xlu0.b32.cont [13/16] 0, 128
        %320 = vxpose.xlu0.b32.cont [14/16] 0, 128
        %321 = vxpose.xlu0.b32.cont [15/16] 0, 128
        %322 = vxpose.xlu0.b32.end [16/16] 0, 128
        %v323 = vpop.trf.xlu0
        %v324 = vpop.trf.xlu0
        %v325 = vpop.trf.xlu0
        %v326 = vpop.trf.xlu0
        %v327 = vpop.trf.xlu0
        %v328 = vpop.trf.xlu0
        %v329 = vpop.trf.xlu0
        %v330 = vpop.trf.xlu0
        %v331 = vpop.trf.xlu0
        %v332 = vpop.trf.xlu0
        %v333 = vpop.trf.xlu0
        %v334 = vpop.trf.xlu0
        %v335 = vpop.trf.xlu0
        %v336 = vpop.trf.xlu0
        %v337 = vpop.trf.xlu0
        %v338 = vpop.trf.xlu0
        %339 = vst [vmem:[%s166] sm:$0x1] %v323
        %s341 = ssub.s32 16, 1
        %v342 = vld [vmem:[#allocation2] sm:%s341]
        %s344 = ssub.s32 16, 1
        %345 = vst [vmem:[%s141] sm:%s344] %v342
        %s347 = ssub.s32 4, 1
        %v348 = vld [vmem:[#allocation4] sm:%s347]
        %s350 = ssub.s32 4, 1
        %351 = vst [vmem:[%s148] sm:%s350] %v348
        %s353 = ssub.s32 4, 1
        %v354 = vld [vmem:[#allocation7] sm:%s353]
        %s356 = ssub.s32 4, 1
        %357 = vst [vmem:[%s154] sm:%s356] %v354
        %s358 = sand.u32 %s14, 1
        %s359 = sand.u32 %s14, 1
        %s360 = smul.addr %s359, 4
        %s361 = scalar_lea.vmem [#allocation3], %s360
        %s362 = sand.u32 %s24, 1
        %s363 = scalar_lea.sflag [#allocation6], %s362
        %s364 = sand.u32 %s24, 1
        %s365 = smul.addr %s364, 2
        %s366 = scalar_lea.vmem [#allocation5], %s365
        %s367 = sand.u32 %s52, 1
        %s368 = sand.u32 %s52, 1
        %s369 = smul.addr %s368, 2
        %s370 = scalar_lea.vmem [#allocation8], %s369
        %s371 = smul.addr %s14, 4
        %s372 = scalar_lea.vmem %s1, %s371
        // Predicated region
        $region59: #{custom-call.24} parent=49 // pred_check
          _
        $region60: #{custom-call.24} parent=49 // pred_check_branch
          %374 = sbr.rel (0) target = $region62
        $region61: #{custom-call.24} parent=49 // pred_region
          // Predicated region
          $region63: #{custom-call.24} parent=61 // pred_check
            _
          $region64: #{custom-call.24} parent=61 // pred_check_branch
            %376 = sbr.rel target = $region66
          $region65: #{custom-call.24} parent=61 // pred_region
            // Predicated region
            $region78: #{custom-call.24} parent=65 // pred_check
              _
            $region79: #{custom-call.24} parent=65 // pred_check_branch
              %392 = sbr.rel (0) target = $region81
            $region80: #{custom-call.24} parent=65 // pred_region
              %s394 = ssub.s32 16, 1
              loop: start=0, step=1, limit=1
              $region82: #{custom-call.24} parent=80 // loop_pre_header
                _
              $region83: #{custom-call.24} parent=80 // loop_header
                %s396 = sphi 0, %s400
                %p397 = scmp.ge.s32.totalorder %s396, 1
                %s401 = sphi %s361, %s361
                %s402 = sphi %s372, %s372
              $region84: #{custom-call.24} parent=80 // loop_header_branch
                %399 = sbr.rel (%p397) target = $region88
              $region85: #{custom-call.24} parent=80 // loop_body
                %v403 = vld [vmem:[%s401] sm:%s394]
                %404 = vst [vmem:[%s402] sm:%s394] %v403
              $region86: #{custom-call.24} parent=80 // loop_footer
                %s400 = sadd.s32 1, %s396
              $region87: #{custom-call.24} parent=80 // loop_footer_branch
                %395 = sbr.rel target = $region83
              $region88: #{custom-call.24} parent=80 // loop_exit
                _
            $region81: #{custom-call.24} parent=65 // pred_fallthru
              _
          $region66: #{custom-call.24} parent=61 // pred_fallthru
            _
          // Predicated region
          $region67: #{custom-call.24} parent=61 // pred_check
            _
          $region68: #{custom-call.24} parent=61 // pred_check_branch
            %378 = sbr.rel (0) target = $region70
          $region69: #{custom-call.24} parent=61 // pred_region
            %s380 = ssub.s32 16, 1
            loop: start=0, step=1, limit=1
            $region71: #{custom-call.24} parent=69 // loop_pre_header
              _
            $region72: #{custom-call.24} parent=69 // loop_header
              %s382 = sphi 0, %s386
              %p383 = scmp.ge.s32.totalorder %s382, 1
              %s387 = sphi %s361, %s361
              %s388 = sphi %s372, %s372
            $region73: #{custom-call.24} parent=69 // loop_header_branch
              %385 = sbr.rel (%p383) target = $region77
            $region74: #{custom-call.24} parent=69 // loop_body
              %v389 = vld [vmem:[%s387] sm:%s380]
              %390 = vst [vmem:[%s388] sm:%s380] %v389
            $region75: #{custom-call.24} parent=69 // loop_footer
              %s386 = sadd.s32 1, %s382
            $region76: #{custom-call.24} parent=69 // loop_footer_branch
              %381 = sbr.rel target = $region72
            $region77: #{custom-call.24} parent=69 // loop_exit
              _
          $region70: #{custom-call.24} parent=61 // pred_fallthru
            _
        $region62: #{custom-call.24} parent=49 // pred_fallthru
          _
        %405 = vnop
        // Predicated region
        $region89: #{custom-call.24} parent=49 // pred_check
          %p406 = pneg %p34
        $region90: #{custom-call.24} parent=49 // pred_check_branch
          %408 = sbr.rel (%p406) target = $region92
        $region91: #{custom-call.24} parent=49 // pred_region
          %s409 = sshrl.u32 %s14, 3
          %411 = vsyncadd %s363, 0
          %s412 = smul.addr %s409, 2
          %s413 = scalar_lea.hbm %s2, %s412
          %s415 = sshll.u32 %s366, 4
          %s416 = int_to_ptr.vmem [resolvable:$true] %s415
          %s417 = sshll.u32 %s413, 4
          %s418 = int_to_ptr.hbm [resolvable:$true] %s417
          %420 = dma.vmem_to_hbm [thread:$0]  %s416, 32, %s418, %s363
        $region92: #{custom-call.24} parent=49 // pred_fallthru
          _
        // Predicated region
        $region93: #{custom-call.24} parent=49 // pred_check
          %p421 = pneg %p62
        $region94: #{custom-call.24} parent=49 // pred_check_branch
          %423 = sbr.rel (%p421) target = $region96
        $region95: #{custom-call.24} parent=49 // pred_region
          %s424 = sshrl.u32 %s14, 3
          %s425 = smul.addr %s424, 2
          %s426 = scalar_lea.vmem %s3, %s425
          // Predicated region
          $region97: #{custom-call.24} parent=95 // pred_check
            _
          $region98: #{custom-call.24} parent=95 // pred_check_branch
            %428 = sbr.rel (0) target = $region100
          $region99: #{custom-call.24} parent=95 // pred_region
            // Predicated region
            $region101: #{custom-call.24} parent=99 // pred_check
              _
            $region102: #{custom-call.24} parent=99 // pred_check_branch
              %430 = sbr.rel target = $region104
            $region103: #{custom-call.24} parent=99 // pred_region
              // Predicated region
              $region116: #{custom-call.24} parent=103 // pred_check
                _
              $region117: #{custom-call.24} parent=103 // pred_check_branch
                %446 = sbr.rel (0) target = $region119
              $region118: #{custom-call.24} parent=103 // pred_region
                %s448 = ssub.s32 4, 1
                loop: start=0, step=1, limit=1
                $region120: #{custom-call.24} parent=118 // loop_pre_header
                  _
                $region121: #{custom-call.24} parent=118 // loop_header
                  %s450 = sphi 0, %s454
                  %p451 = scmp.ge.s32.totalorder %s450, 1
                  %s455 = sphi %s370, %s370
                  %s456 = sphi %s426, %s426
                $region122: #{custom-call.24} parent=118 // loop_header_branch
                  %453 = sbr.rel (%p451) target = $region126
                $region123: #{custom-call.24} parent=118 // loop_body
                  %v457 = vld [vmem:[%s455] sm:%s448]
                  %458 = vst [vmem:[%s456] sm:%s448] %v457
                $region124: #{custom-call.24} parent=118 // loop_footer
                  %s454 = sadd.s32 1, %s450
                $region125: #{custom-call.24} parent=118 // loop_footer_branch
                  %449 = sbr.rel target = $region121
                $region126: #{custom-call.24} parent=118 // loop_exit
                  _
              $region119: #{custom-call.24} parent=103 // pred_fallthru
                _
            $region104: #{custom-call.24} parent=99 // pred_fallthru
              _
            // Predicated region
            $region105: #{custom-call.24} parent=99 // pred_check
              _
            $region106: #{custom-call.24} parent=99 // pred_check_branch
              %432 = sbr.rel (0) target = $region108
            $region107: #{custom-call.24} parent=99 // pred_region
              %s434 = ssub.s32 4, 1
              loop: start=0, step=1, limit=1
              $region109: #{custom-call.24} parent=107 // loop_pre_header
                _
              $region110: #{custom-call.24} parent=107 // loop_header
                %s436 = sphi 0, %s440
                %p437 = scmp.ge.s32.totalorder %s436, 1
                %s441 = sphi %s370, %s370
                %s442 = sphi %s426, %s426
              $region111: #{custom-call.24} parent=107 // loop_header_branch
                %439 = sbr.rel (%p437) target = $region115
              $region112: #{custom-call.24} parent=107 // loop_body
                %v443 = vld [vmem:[%s441] sm:%s434]
                %444 = vst [vmem:[%s442] sm:%s434] %v443
              $region113: #{custom-call.24} parent=107 // loop_footer
                %s440 = sadd.s32 1, %s436
              $region114: #{custom-call.24} parent=107 // loop_footer_branch
                %435 = sbr.rel target = $region110
              $region115: #{custom-call.24} parent=107 // loop_exit
                _
            $region108: #{custom-call.24} parent=99 // pred_fallthru
              _
          $region100: #{custom-call.24} parent=95 // pred_fallthru
            _
          %459 = vnop
        $region96: #{custom-call.24} parent=49 // pred_fallthru
          _
      $region50: #{custom-call.24} parent=5 // pred_fallthru
        _
      %p460 = scmp.le.s32.totalorder 2, %s9
      // Predicated region
      $region127: #{custom-call.24} parent=5 // pred_check
        %p461 = pneg %p460
      $region128: #{custom-call.24} parent=5 // pred_check_branch
        %463 = sbr.rel (%p461) target = $region130
      $region129: #{custom-call.24} parent=5 // pred_region
        %s464 = ssub.s32 %s9, 2
        %s465 = sand.u32 %s15, 1
        %s466 = sand.u32 %s15, 1
        %s467 = smul.addr %s466, 4
        %s468 = scalar_lea.vmem [#allocation3], %s467
        // Predicated region
        $region131: #{custom-call.24} parent=129 // pred_check
          %p469 = pneg %p40
        $region132: #{custom-call.24} parent=129 // pred_check_branch
          %471 = sbr.rel (%p469) target = $region134
        $region133: #{custom-call.24} parent=129 // pred_region
          %s472 = sand.u32 %s25, 1
          %s473 = scalar_lea.sflag [#allocation6], %s472
          %s474 = sand.u32 %s25, 1
          %s475 = smul.addr %s474, 2
          %s476 = scalar_lea.vmem [#allocation5], %s475
          %478 = dma.done %s473, 32
        $region134: #{custom-call.24} parent=129 // pred_fallthru
          _
        // Predicated region
        $region135: #{custom-call.24} parent=129 // pred_check
          %p479 = pneg %p68
        $region136: #{custom-call.24} parent=129 // pred_check_branch
          %481 = sbr.rel (%p479) target = $region138
        $region137: #{custom-call.24} parent=129 // pred_region
          %s482 = sand.u32 %s53, 1
          %s483 = sand.u32 %s53, 1
          %s484 = smul.addr %s483, 2
          %s485 = scalar_lea.vmem [#allocation8], %s484
        $region138: #{custom-call.24} parent=129 // pred_fallthru
          _
      $region130: #{custom-call.24} parent=5 // pred_fallthru
        _
    $region6: #{custom-call.24} parent=1 // loop_footer
      %s13 = sadd.s32 1, %s9
    $region7: #{custom-call.24} parent=1 // loop_footer_branch
      %8 = sbr.rel target = $region3
    $region8: #{custom-call.24} parent=1 // loop_exit
      _
    %486 = vsyncpa [#allocation6], 1
    %s487 = scalar_lea.sflag [#allocation6], 1
    %488 = vsyncpa %s487, 1

// kernel: custom-call.26
$region0: #{custom-call.26}
  %s0 = inlined_call_operand.vmem [shape: f32[2,1,3,3], index: 0, kind: input, shape index: {}]
  %s1 = inlined_call_operand.vmem [shape: f32[2,1,3,3], index: 1, kind: output, shape index: {}]
  $region1: #{custom-call.26} parent=0
    #allocation0 [shape = 'u8[4096]{0}', space=vmem, size = 0x1000, scoped, tag = 'operand span for operand 0']
    #allocation1 [shape = 'u8[4096]{0}', space=vmem, size = 0x1000, scoped, tag = 'packed  for operand 0']
    #allocation2 [shape = 'u8[4096]{0}', space=vmem, size = 0x1000, scoped, tag = 'operand span for operand 1']
    #allocation3 [shape = 'u8[4096]{0}', space=vmem, size = 0x1000, scoped, tag = 'packed  for operand 1']
    loop: start=0, step=1, limit=4
    $region2: #{custom-call.26} parent=1 // loop_pre_header
      _
    $region3: #{custom-call.26} parent=1 // loop_header
      %s3 = sphi 0, %s7
      %p4 = scmp.ge.s32.totalorder %s3, 4
      %s10 = sphi 0, %s36
      %s11 = sphi 0, %s32
      %s12 = sphi 0, %s28
      %s13 = sphi 0, %s24
      %s14 = sphi 0, %s10
      %s15 = sphi 0, %s11
      %s16 = sphi 0, %s12
      %s17 = sphi 0, %s13
      %s18 = sphi 0, %s14
      %s19 = sphi 0, %s15
      %s20 = sphi 0, %s16
      %s21 = sphi 0, %s17
    $region4: #{custom-call.26} parent=1 // loop_header_branch
      %6 = sbr.rel (%p4) target = $region8
    $region5: #{custom-call.26} parent=1 // loop_body
      %s8 = ssub.s32 %s3, 1
      %s9 = ssub.s32 %s3, 2
      %s22 = sadd.s32 1, %s13
      %p23 = scmp.ge.s32.totalorder %s22, 1
      %s24 = scalar_select %p23, 0, %s22
      %s25 = sadd.s32 1, %s12
      %s26 = scalar_select %p23, %s25, %s12
      %p27 = scmp.ge.s32.totalorder %s26, 1
      %s28 = scalar_select %p27, 0, %s26
      %s29 = sadd.s32 1, %s11
      %s30 = scalar_select %p27, %s29, %s11
      %p31 = scmp.ge.s32.totalorder %s30, 1
      %s32 = scalar_select %p31, 0, %s30
      %s33 = sadd.s32 1, %s10
      %s34 = scalar_select %p31, %s33, %s10
      %p35 = scmp.ge.s32.totalorder %s34, 2
      %s36 = scalar_select %p35, 0, %s34
      %p37 = scmp.le.s32.totalorder 1, %s3
      %p38 = scmp.lt.s32.totalorder %s3, 3
      %p39 = pnand %p37, %p38
      %p40 = pneg %p39
      // Predicated region
      $region9: #{custom-call.26} parent=5 // pred_check
        _
      $region10: #{custom-call.26} parent=5 // pred_check_branch
        %42 = sbr.rel (%p39) target = $region12
      $region11: #{custom-call.26} parent=5 // pred_region
        %s43 = ssub.s32 %s3, 1
      $region12: #{custom-call.26} parent=5 // pred_fallthru
        _
      %p44 = scmp.lt.s32.totalorder %s3, 2
      // Predicated region
      $region13: #{custom-call.26} parent=5 // pred_check
        %p45 = pneg %p44
      $region14: #{custom-call.26} parent=5 // pred_check_branch
        %47 = sbr.rel (%p45) target = $region16
      $region15: #{custom-call.26} parent=5 // pred_region
        %s48 = sand.u32 %s3, 1
        %s49 = sand.u32 %s3, 1
        %s50 = smul.addr %s49, 4
        %s51 = scalar_lea.vmem [#allocation1], %s50
        %s52 = sadd.s32 %s13, %s12
        %s53 = sadd.s32 %s52, %s11
        %s54 = sadd.s32 %s53, %s10
        %s55 = smul.addr %s54, 4
        %s56 = scalar_lea.vmem %s0, %s55
        // Predicated region
        $region17: #{custom-call.26} parent=15 // pred_check
          _
        $region18: #{custom-call.26} parent=15 // pred_check_branch
          %58 = sbr.rel (0) target = $region20
        $region19: #{custom-call.26} parent=15 // pred_region
          // Predicated region
          $region21: #{custom-call.26} parent=19 // pred_check
            _
          $region22: #{custom-call.26} parent=19 // pred_check_branch
            %60 = sbr.rel target = $region24
          $region23: #{custom-call.26} parent=19 // pred_region
            // Predicated region
            $region36: #{custom-call.26} parent=23 // pred_check
              _
            $region37: #{custom-call.26} parent=23 // pred_check_branch
              %76 = sbr.rel (0) target = $region39
            $region38: #{custom-call.26} parent=23 // pred_region
              %s78 = ssub.s32 16, 1
              loop: start=0, step=1, limit=1
              $region40: #{custom-call.26} parent=38 // loop_pre_header
                _
              $region41: #{custom-call.26} parent=38 // loop_header
                %s80 = sphi 0, %s84
                %p81 = scmp.ge.s32.totalorder %s80, 1
                %s85 = sphi %s56, %s56
                %s86 = sphi %s51, %s51
              $region42: #{custom-call.26} parent=38 // loop_header_branch
                %83 = sbr.rel (%p81) target = $region46
              $region43: #{custom-call.26} parent=38 // loop_body
                %v87 = vld [vmem:[%s85] sm:%s78]
                %88 = vst [vmem:[%s86] sm:%s78] %v87
              $region44: #{custom-call.26} parent=38 // loop_footer
                %s84 = sadd.s32 1, %s80
              $region45: #{custom-call.26} parent=38 // loop_footer_branch
                %79 = sbr.rel target = $region41
              $region46: #{custom-call.26} parent=38 // loop_exit
                _
            $region39: #{custom-call.26} parent=23 // pred_fallthru
              _
          $region24: #{custom-call.26} parent=19 // pred_fallthru
            _
          // Predicated region
          $region25: #{custom-call.26} parent=19 // pred_check
            _
          $region26: #{custom-call.26} parent=19 // pred_check_branch
            %62 = sbr.rel (0) target = $region28
          $region27: #{custom-call.26} parent=19 // pred_region
            %s64 = ssub.s32 16, 1
            loop: start=0, step=1, limit=1
            $region29: #{custom-call.26} parent=27 // loop_pre_header
              _
            $region30: #{custom-call.26} parent=27 // loop_header
              %s66 = sphi 0, %s70
              %p67 = scmp.ge.s32.totalorder %s66, 1
              %s71 = sphi %s56, %s56
              %s72 = sphi %s51, %s51
            $region31: #{custom-call.26} parent=27 // loop_header_branch
              %69 = sbr.rel (%p67) target = $region35
            $region32: #{custom-call.26} parent=27 // loop_body
              %v73 = vld [vmem:[%s71] sm:%s64]
              %74 = vst [vmem:[%s72] sm:%s64] %v73
            $region33: #{custom-call.26} parent=27 // loop_footer
              %s70 = sadd.s32 1, %s66
            $region34: #{custom-call.26} parent=27 // loop_footer_branch
              %65 = sbr.rel target = $region30
            $region35: #{custom-call.26} parent=27 // loop_exit
              _
          $region28: #{custom-call.26} parent=19 // pred_fallthru
            _
        $region20: #{custom-call.26} parent=15 // pred_fallthru
          _
        %89 = vnop
      $region16: #{custom-call.26} parent=5 // pred_fallthru
        _
      %p90 = scmp.le.s32.totalorder 1, %s3
      %p91 = scmp.lt.s32.totalorder %s3, 3
      %p92 = pnand %p90, %p91
      %p93 = pneg %p92
      // Predicated region
      $region47: #{custom-call.26} parent=5 // pred_check
        _
      $region48: #{custom-call.26} parent=5 // pred_check_branch
        %95 = sbr.rel (%p92) target = $region50
      $region49: #{custom-call.26} parent=5 // pred_region
        #allocation4 [shape = 'f32[3,3]{1,0}', space=vmem, size = 0x1000, scoped, tag = 'rescaled input a']
        %s96 = ssub.s32 %s3, 1
        %s97 = sand.u32 %s8, 1
        %s98 = sand.u32 %s8, 1
        %s99 = smul.addr %s98, 4
        %s100 = scalar_lea.vmem [#allocation1], %s99
        %s101 = sand.u32 %s8, 1
        %s102 = sand.u32 %s8, 1
        %s103 = smul.addr %s102, 4
        %s104 = scalar_lea.vmem [#allocation1], %s103
        %s105 = sand.u32 %s8, 1
        %s106 = sand.u32 %s8, 1
        %s107 = smul.addr %s106, 4
        %s108 = scalar_lea.vmem [#allocation3], %s107
        %s110 = ssub.s32 16, 1
        %v111 = vld [vmem:[%s104] sm:%s110]
        %112 = vst [vmem:[#allocation0] sm:%s110] %v111
        %v113 = vlaneseq
        %v114 = vand.u32 %v113, 127
        %vm115 = vcmp.lt.s32.totalorder %v114, 3
        %v116 = vlaneseq
        %v117 = vshrl.u32 %v116, 7
        %vm119 = vcmp.eq.s32.totalorder %v117, %v114
        %v120 = vld [vmem:[#allocation0] sm:$0xff]
        %v121 = vsel %vm119, %v120, 0.0
        %122 = vadd.xlane.f32.xlu0 %v121
        %v123 = vpop.xlane.xlu0 %122
        %vm124 = vcmp.ge.s32.totalorder %v117, %v114
        %vm125 = vmand %vm124, %vm115
        %v126 = vsel %vm125, %v120, 0.0
        %v127 = vrcp.pop %v123
        %v128 = vmul.f32 %v123, %v127
        %v129 = vsub.f32 1.0, %v128
        %v130 = vmul.f32 %v127, %v129
        %v131 = vadd.f32 %v127, %v130
        %vm132 = vweird.f32 %v123
        %vm133 = vweird.f32 %v127
        %vm134 = vmor %vm132, %vm133
        %v135 = vsel %vm134, %v127, %v131
        %v136 = vand.u32 2147483647, %v123
        %vm137 = vcmp.eq.f32.partialorder %v136, 8.507059e+37
        %v138 = vand.u32 %v123, 2147483648
        %v139 = vor.u32 1.1754944e-38, %v138
        %v140 = vsel %vm137, %v139, %v135
        %v141 = vmul.f32 %v126, %v140
        %142 = vst [vmem:[#allocation4] sm:$0xff] %v141
        %v143 = vlaneseq
        %v144 = vand.u32 %v143, 127
        %v145 = vlaneseq
        %v146 = vshrl.u32 %v145, 7
        %vm148 = vcmp.eq.s32.totalorder %v144, %v146
        %v149 = vlaneseq
        %v150 = vand.u32 %v149, 127
        %vm151 = vcmp.eq.s32.totalorder %v150, 0
        %v152 = vsel %vm151, 1.0, -1.0
        %v153 = vsel %vm148, %v152, 0.0
        %s154 = scalar_lea.vmem [#allocation4], 1
        %v155 = vld [vmem:[%s154] ss:$0 sm:$0xff]
        %v156 = vxor.u32 %v155, 2147483648
        %v157 = vlaneseq
        %v158 = vand.u32 %v157, 127
        %vm159 = vcmp.eq.s32.totalorder %v158, 1
        %v160 = vmul.f32 %v156, %v153
        %161 = vadd.xlane.f32.xlu0 %v160
        %v162 = vpop.xlane.xlu0 %161
        %v163 = vsel %vm159, %v162, %v153
        %s164 = scalar_lea.vmem [#allocation4], 2
        %v165 = vld [vmem:[%s164] ss:$0 sm:$0xff]
        %v166 = vxor.u32 %v165, 2147483648
        %v167 = vlaneseq
        %v168 = vand.u32 %v167, 127
        %vm169 = vcmp.eq.s32.totalorder %v168, 2
        %v170 = vmul.f32 %v166, %v163
        %171 = vadd.xlane.f32.xlu0 %v170
        %v172 = vpop.xlane.xlu0 %171
        %v173 = vsel %vm169, %v172, %v163
        %v174 = vrcp.pop %v123
        %v175 = vmul.f32 %v123, %v174
        %v176 = vsub.f32 1.0, %v175
        %v177 = vmul.f32 %v174, %v176
        %v178 = vadd.f32 %v174, %v177
        %vm179 = vweird.f32 %v123
        %vm180 = vweird.f32 %v174
        %vm181 = vmor %vm179, %vm180
        %v182 = vsel %vm181, %v174, %v178
        %v183 = vand.u32 2147483647, %v123
        %vm184 = vcmp.eq.f32.partialorder %v183, 8.507059e+37
        %v185 = vand.u32 %v123, 2147483648
        %v186 = vor.u32 1.1754944e-38, %v185
        %v187 = vsel %vm184, %v186, %v182
        %v188 = vmul.f32 %v173, %v187
        %vm189 = vweird.f32 %v123
        %v190 = vsel %vm189, %v173, %v188
        %191 = vst [vmem:[#allocation2] sm:$0xff] %v190
        %s193 = ssub.s32 16, 1
        %v194 = vld [vmem:[#allocation2] sm:%s193]
        %s196 = ssub.s32 16, 1
        %197 = vst [vmem:[%s108] sm:%s196] %v194
        %s198 = sand.u32 %s8, 1
        %s199 = sand.u32 %s8, 1
        %s200 = smul.addr %s199, 4
        %s201 = scalar_lea.vmem [#allocation3], %s200
        %s202 = sadd.s32 %s17, %s16
        %s203 = sadd.s32 %s202, %s15
        %s204 = sadd.s32 %s203, %s14
        %s205 = smul.addr %s204, 4
        %s206 = scalar_lea.vmem %s1, %s205
        // Predicated region
        $region51: #{custom-call.26} parent=49 // pred_check
          _
        $region52: #{custom-call.26} parent=49 // pred_check_branch
          %208 = sbr.rel (0) target = $region54
        $region53: #{custom-call.26} parent=49 // pred_region
          // Predicated region
          $region55: #{custom-call.26} parent=53 // pred_check
            _
          $region56: #{custom-call.26} parent=53 // pred_check_branch
            %210 = sbr.rel target = $region58
          $region57: #{custom-call.26} parent=53 // pred_region
            // Predicated region
            $region70: #{custom-call.26} parent=57 // pred_check
              _
            $region71: #{custom-call.26} parent=57 // pred_check_branch
              %226 = sbr.rel (0) target = $region73
            $region72: #{custom-call.26} parent=57 // pred_region
              %s228 = ssub.s32 16, 1
              loop: start=0, step=1, limit=1
              $region74: #{custom-call.26} parent=72 // loop_pre_header
                _
              $region75: #{custom-call.26} parent=72 // loop_header
                %s230 = sphi 0, %s234
                %p231 = scmp.ge.s32.totalorder %s230, 1
                %s235 = sphi %s201, %s201
                %s236 = sphi %s206, %s206
              $region76: #{custom-call.26} parent=72 // loop_header_branch
                %233 = sbr.rel (%p231) target = $region80
              $region77: #{custom-call.26} parent=72 // loop_body
                %v237 = vld [vmem:[%s235] sm:%s228]
                %238 = vst [vmem:[%s236] sm:%s228] %v237
              $region78: #{custom-call.26} parent=72 // loop_footer
                %s234 = sadd.s32 1, %s230
              $region79: #{custom-call.26} parent=72 // loop_footer_branch
                %229 = sbr.rel target = $region75
              $region80: #{custom-call.26} parent=72 // loop_exit
                _
            $region73: #{custom-call.26} parent=57 // pred_fallthru
              _
          $region58: #{custom-call.26} parent=53 // pred_fallthru
            _
          // Predicated region
          $region59: #{custom-call.26} parent=53 // pred_check
            _
          $region60: #{custom-call.26} parent=53 // pred_check_branch
            %212 = sbr.rel (0) target = $region62
          $region61: #{custom-call.26} parent=53 // pred_region
            %s214 = ssub.s32 16, 1
            loop: start=0, step=1, limit=1
            $region63: #{custom-call.26} parent=61 // loop_pre_header
              _
            $region64: #{custom-call.26} parent=61 // loop_header
              %s216 = sphi 0, %s220
              %p217 = scmp.ge.s32.totalorder %s216, 1
              %s221 = sphi %s201, %s201
              %s222 = sphi %s206, %s206
            $region65: #{custom-call.26} parent=61 // loop_header_branch
              %219 = sbr.rel (%p217) target = $region69
            $region66: #{custom-call.26} parent=61 // loop_body
              %v223 = vld [vmem:[%s221] sm:%s214]
              %224 = vst [vmem:[%s222] sm:%s214] %v223
            $region67: #{custom-call.26} parent=61 // loop_footer
              %s220 = sadd.s32 1, %s216
            $region68: #{custom-call.26} parent=61 // loop_footer_branch
              %215 = sbr.rel target = $region64
            $region69: #{custom-call.26} parent=61 // loop_exit
              _
          $region62: #{custom-call.26} parent=53 // pred_fallthru
            _
        $region54: #{custom-call.26} parent=49 // pred_fallthru
          _
        %239 = vnop
      $region50: #{custom-call.26} parent=5 // pred_fallthru
        _
      %p240 = scmp.le.s32.totalorder 2, %s3
      // Predicated region
      $region81: #{custom-call.26} parent=5 // pred_check
        %p241 = pneg %p240
      $region82: #{custom-call.26} parent=5 // pred_check_branch
        %243 = sbr.rel (%p241) target = $region84
      $region83: #{custom-call.26} parent=5 // pred_region
        %s244 = ssub.s32 %s3, 2
        %s245 = sand.u32 %s9, 1
        %s246 = sand.u32 %s9, 1
        %s247 = smul.addr %s246, 4
        %s248 = scalar_lea.vmem [#allocation3], %s247
      $region84: #{custom-call.26} parent=5 // pred_fallthru
        _
    $region6: #{custom-call.26} parent=1 // loop_footer
      %s7 = sadd.s32 1, %s3
    $region7: #{custom-call.26} parent=1 // loop_footer_branch
      %2 = sbr.rel target = $region3
    $region8: #{custom-call.26} parent=1 // loop_exit
      _

// kernel: custom-call.25
$region0: #{custom-call.25}
  %s0 = inlined_call_operand.vmem [shape: f32[2,1,3,3], index: 0, kind: input, shape index: {}]
  %s1 = inlined_call_operand.vmem [shape: f32[2,1,3,3], index: 1, kind: output, shape index: {}]
  $region1: #{custom-call.25} parent=0
    #allocation0 [shape = 'u8[4096]{0}', space=vmem, size = 0x1000, scoped, tag = 'operand span for operand 0']
    #allocation1 [shape = 'u8[4096]{0}', space=vmem, size = 0x1000, scoped, tag = 'packed  for operand 0']
    #allocation2 [shape = 'u8[4096]{0}', space=vmem, size = 0x1000, scoped, tag = 'operand span for operand 1']
    #allocation3 [shape = 'u8[4096]{0}', space=vmem, size = 0x1000, scoped, tag = 'packed  for operand 1']
    loop: start=0, step=1, limit=4
    $region2: #{custom-call.25} parent=1 // loop_pre_header
      _
    $region3: #{custom-call.25} parent=1 // loop_header
      %s3 = sphi 0, %s7
      %p4 = scmp.ge.s32.totalorder %s3, 4
      %s10 = sphi 0, %s36
      %s11 = sphi 0, %s32
      %s12 = sphi 0, %s28
      %s13 = sphi 0, %s24
      %s14 = sphi 0, %s10
      %s15 = sphi 0, %s11
      %s16 = sphi 0, %s12
      %s17 = sphi 0, %s13
      %s18 = sphi 0, %s14
      %s19 = sphi 0, %s15
      %s20 = sphi 0, %s16
      %s21 = sphi 0, %s17
    $region4: #{custom-call.25} parent=1 // loop_header_branch
      %6 = sbr.rel (%p4) target = $region8
    $region5: #{custom-call.25} parent=1 // loop_body
      %s8 = ssub.s32 %s3, 1
      %s9 = ssub.s32 %s3, 2
      %s22 = sadd.s32 1, %s13
      %p23 = scmp.ge.s32.totalorder %s22, 1
      %s24 = scalar_select %p23, 0, %s22
      %s25 = sadd.s32 1, %s12
      %s26 = scalar_select %p23, %s25, %s12
      %p27 = scmp.ge.s32.totalorder %s26, 1
      %s28 = scalar_select %p27, 0, %s26
      %s29 = sadd.s32 1, %s11
      %s30 = scalar_select %p27, %s29, %s11
      %p31 = scmp.ge.s32.totalorder %s30, 1
      %s32 = scalar_select %p31, 0, %s30
      %s33 = sadd.s32 1, %s10
      %s34 = scalar_select %p31, %s33, %s10
      %p35 = scmp.ge.s32.totalorder %s34, 2
      %s36 = scalar_select %p35, 0, %s34
      %p37 = scmp.le.s32.totalorder 1, %s3
      %p38 = scmp.lt.s32.totalorder %s3, 3
      %p39 = pnand %p37, %p38
      %p40 = pneg %p39
      // Predicated region
      $region9: #{custom-call.25} parent=5 // pred_check
        _
      $region10: #{custom-call.25} parent=5 // pred_check_branch
        %42 = sbr.rel (%p39) target = $region12
      $region11: #{custom-call.25} parent=5 // pred_region
        %s43 = ssub.s32 %s3, 1
      $region12: #{custom-call.25} parent=5 // pred_fallthru
        _
      %p44 = scmp.lt.s32.totalorder %s3, 2
      // Predicated region
      $region13: #{custom-call.25} parent=5 // pred_check
        %p45 = pneg %p44
      $region14: #{custom-call.25} parent=5 // pred_check_branch
        %47 = sbr.rel (%p45) target = $region16
      $region15: #{custom-call.25} parent=5 // pred_region
        %s48 = sand.u32 %s3, 1
        %s49 = sand.u32 %s3, 1
        %s50 = smul.addr %s49, 4
        %s51 = scalar_lea.vmem [#allocation1], %s50
        %s52 = sadd.s32 %s13, %s12
        %s53 = sadd.s32 %s52, %s11
        %s54 = sadd.s32 %s53, %s10
        %s55 = smul.addr %s54, 4
        %s56 = scalar_lea.vmem %s0, %s55
        // Predicated region
        $region17: #{custom-call.25} parent=15 // pred_check
          _
        $region18: #{custom-call.25} parent=15 // pred_check_branch
          %58 = sbr.rel (0) target = $region20
        $region19: #{custom-call.25} parent=15 // pred_region
          // Predicated region
          $region21: #{custom-call.25} parent=19 // pred_check
            _
          $region22: #{custom-call.25} parent=19 // pred_check_branch
            %60 = sbr.rel target = $region24
          $region23: #{custom-call.25} parent=19 // pred_region
            // Predicated region
            $region36: #{custom-call.25} parent=23 // pred_check
              _
            $region37: #{custom-call.25} parent=23 // pred_check_branch
              %76 = sbr.rel (0) target = $region39
            $region38: #{custom-call.25} parent=23 // pred_region
              %s78 = ssub.s32 16, 1
              loop: start=0, step=1, limit=1
              $region40: #{custom-call.25} parent=38 // loop_pre_header
                _
              $region41: #{custom-call.25} parent=38 // loop_header
                %s80 = sphi 0, %s84
                %p81 = scmp.ge.s32.totalorder %s80, 1
                %s85 = sphi %s56, %s56
                %s86 = sphi %s51, %s51
              $region42: #{custom-call.25} parent=38 // loop_header_branch
                %83 = sbr.rel (%p81) target = $region46
              $region43: #{custom-call.25} parent=38 // loop_body
                %v87 = vld [vmem:[%s85] sm:%s78]
                %88 = vst [vmem:[%s86] sm:%s78] %v87
              $region44: #{custom-call.25} parent=38 // loop_footer
                %s84 = sadd.s32 1, %s80
              $region45: #{custom-call.25} parent=38 // loop_footer_branch
                %79 = sbr.rel target = $region41
              $region46: #{custom-call.25} parent=38 // loop_exit
                _
            $region39: #{custom-call.25} parent=23 // pred_fallthru
              _
          $region24: #{custom-call.25} parent=19 // pred_fallthru
            _
          // Predicated region
          $region25: #{custom-call.25} parent=19 // pred_check
            _
          $region26: #{custom-call.25} parent=19 // pred_check_branch
            %62 = sbr.rel (0) target = $region28
          $region27: #{custom-call.25} parent=19 // pred_region
            %s64 = ssub.s32 16, 1
            loop: start=0, step=1, limit=1
            $region29: #{custom-call.25} parent=27 // loop_pre_header
              _
            $region30: #{custom-call.25} parent=27 // loop_header
              %s66 = sphi 0, %s70
              %p67 = scmp.ge.s32.totalorder %s66, 1
              %s71 = sphi %s56, %s56
              %s72 = sphi %s51, %s51
            $region31: #{custom-call.25} parent=27 // loop_header_branch
              %69 = sbr.rel (%p67) target = $region35
            $region32: #{custom-call.25} parent=27 // loop_body
              %v73 = vld [vmem:[%s71] sm:%s64]
              %74 = vst [vmem:[%s72] sm:%s64] %v73
            $region33: #{custom-call.25} parent=27 // loop_footer
              %s70 = sadd.s32 1, %s66
            $region34: #{custom-call.25} parent=27 // loop_footer_branch
              %65 = sbr.rel target = $region30
            $region35: #{custom-call.25} parent=27 // loop_exit
              _
          $region28: #{custom-call.25} parent=19 // pred_fallthru
            _
        $region20: #{custom-call.25} parent=15 // pred_fallthru
          _
        %89 = vnop
      $region16: #{custom-call.25} parent=5 // pred_fallthru
        _
      %p90 = scmp.le.s32.totalorder 1, %s3
      %p91 = scmp.lt.s32.totalorder %s3, 3
      %p92 = pnand %p90, %p91
      %p93 = pneg %p92
      // Predicated region
      $region47: #{custom-call.25} parent=5 // pred_check
        _
      $region48: #{custom-call.25} parent=5 // pred_check_branch
        %95 = sbr.rel (%p92) target = $region50
      $region49: #{custom-call.25} parent=5 // pred_region
        #allocation4 [shape = 'f32[3,3]{1,0}', space=vmem, size = 0x1000, scoped, tag = 'rescaled input a']
        %s96 = ssub.s32 %s3, 1
        %s97 = sand.u32 %s8, 1
        %s98 = sand.u32 %s8, 1
        %s99 = smul.addr %s98, 4
        %s100 = scalar_lea.vmem [#allocation1], %s99
        %s101 = sand.u32 %s8, 1
        %s102 = sand.u32 %s8, 1
        %s103 = smul.addr %s102, 4
        %s104 = scalar_lea.vmem [#allocation1], %s103
        %s105 = sand.u32 %s8, 1
        %s106 = sand.u32 %s8, 1
        %s107 = smul.addr %s106, 4
        %s108 = scalar_lea.vmem [#allocation3], %s107
        %s110 = ssub.s32 16, 1
        %v111 = vld [vmem:[%s104] sm:%s110]
        %112 = vst [vmem:[#allocation0] sm:%s110] %v111
        %v113 = vlaneseq
        %v114 = vand.u32 %v113, 127
        %vm115 = vcmp.lt.s32.totalorder %v114, 3
        %v116 = vlaneseq
        %v117 = vshrl.u32 %v116, 7
        %vm119 = vcmp.eq.s32.totalorder %v117, %v114
        %v120 = vld [vmem:[#allocation0] sm:$0xff]
        %v121 = vsel %vm119, %v120, 0.0
        %122 = vadd.xlane.f32.xlu0 %v121
        %v123 = vpop.xlane.xlu0 %122
        %vm124 = vcmp.le.s32.totalorder %v117, %v114
        %vm125 = vmand %vm124, %vm115
        %v126 = vsel %vm125, %v120, 0.0
        %v127 = vrcp.pop %v123
        %v128 = vmul.f32 %v123, %v127
        %v129 = vsub.f32 1.0, %v128
        %v130 = vmul.f32 %v127, %v129
        %v131 = vadd.f32 %v127, %v130
        %vm132 = vweird.f32 %v123
        %vm133 = vweird.f32 %v127
        %vm134 = vmor %vm132, %vm133
        %v135 = vsel %vm134, %v127, %v131
        %v136 = vand.u32 2147483647, %v123
        %vm137 = vcmp.eq.f32.partialorder %v136, 8.507059e+37
        %v138 = vand.u32 %v123, 2147483648
        %v139 = vor.u32 1.1754944e-38, %v138
        %v140 = vsel %vm137, %v139, %v135
        %v141 = vmul.f32 %v126, %v140
        %142 = vst [vmem:[#allocation4] sm:$0xff] %v141
        %v143 = vlaneseq
        %v144 = vand.u32 %v143, 127
        %v145 = vlaneseq
        %v146 = vshrl.u32 %v145, 7
        %vm148 = vcmp.eq.s32.totalorder %v144, %v146
        %v149 = vlaneseq
        %v150 = vand.u32 %v149, 127
        %vm151 = vcmp.eq.s32.totalorder %v150, 2
        %v152 = vsel %vm151, 1.0, -1.0
        %v153 = vsel %vm148, %v152, 0.0
        %s154 = scalar_lea.vmem [#allocation4], 1
        %v155 = vld [vmem:[%s154] ss:$0 sm:$0xff]
        %v156 = vxor.u32 %v155, 2147483648
        %v157 = vlaneseq
        %v158 = vand.u32 %v157, 127
        %vm159 = vcmp.eq.s32.totalorder %v158, 1
        %v160 = vmul.f32 %v156, %v153
        %161 = vadd.xlane.f32.xlu0 %v160
        %v162 = vpop.xlane.xlu0 %161
        %v163 = vsel %vm159, %v162, %v153
        %v164 = vld [vmem:[#allocation4] ss:$0 sm:$0xff]
        %v165 = vxor.u32 %v164, 2147483648
        %v166 = vlaneseq
        %v167 = vand.u32 %v166, 127
        %vm168 = vcmp.eq.s32.totalorder %v167, 0
        %v169 = vmul.f32 %v165, %v163
        %170 = vadd.xlane.f32.xlu0 %v169
        %v171 = vpop.xlane.xlu0 %170
        %v172 = vsel %vm168, %v171, %v163
        %v173 = vrcp.pop %v123
        %v174 = vmul.f32 %v123, %v173
        %v175 = vsub.f32 1.0, %v174
        %v176 = vmul.f32 %v173, %v175
        %v177 = vadd.f32 %v173, %v176
        %vm178 = vweird.f32 %v123
        %vm179 = vweird.f32 %v173
        %vm180 = vmor %vm178, %vm179
        %v181 = vsel %vm180, %v173, %v177
        %v182 = vand.u32 2147483647, %v123
        %vm183 = vcmp.eq.f32.partialorder %v182, 8.507059e+37
        %v184 = vand.u32 %v123, 2147483648
        %v185 = vor.u32 1.1754944e-38, %v184
        %v186 = vsel %vm183, %v185, %v181
        %v187 = vmul.f32 %v172, %v186
        %vm188 = vweird.f32 %v123
        %v189 = vsel %vm188, %v172, %v187
        %190 = vst [vmem:[#allocation2] sm:$0xff] %v189
        %s192 = ssub.s32 16, 1
        %v193 = vld [vmem:[#allocation2] sm:%s192]
        %s195 = ssub.s32 16, 1
        %196 = vst [vmem:[%s108] sm:%s195] %v193
        %s197 = sand.u32 %s8, 1
        %s198 = sand.u32 %s8, 1
        %s199 = smul.addr %s198, 4
        %s200 = scalar_lea.vmem [#allocation3], %s199
        %s201 = sadd.s32 %s17, %s16
        %s202 = sadd.s32 %s201, %s15
        %s203 = sadd.s32 %s202, %s14
        %s204 = smul.addr %s203, 4
        %s205 = scalar_lea.vmem %s1, %s204
        // Predicated region
        $region51: #{custom-call.25} parent=49 // pred_check
          _
        $region52: #{custom-call.25} parent=49 // pred_check_branch
          %207 = sbr.rel (0) target = $region54
        $region53: #{custom-call.25} parent=49 // pred_region
          // Predicated region
          $region55: #{custom-call.25} parent=53 // pred_check
            _
          $region56: #{custom-call.25} parent=53 // pred_check_branch
            %209 = sbr.rel target = $region58
          $region57: #{custom-call.25} parent=53 // pred_region
            // Predicated region
            $region70: #{custom-call.25} parent=57 // pred_check
              _
            $region71: #{custom-call.25} parent=57 // pred_check_branch
              %225 = sbr.rel (0) target = $region73
            $region72: #{custom-call.25} parent=57 // pred_region
              %s227 = ssub.s32 16, 1
              loop: start=0, step=1, limit=1
              $region74: #{custom-call.25} parent=72 // loop_pre_header
                _
              $region75: #{custom-call.25} parent=72 // loop_header
                %s229 = sphi 0, %s233
                %p230 = scmp.ge.s32.totalorder %s229, 1
                %s234 = sphi %s200, %s200
                %s235 = sphi %s205, %s205
              $region76: #{custom-call.25} parent=72 // loop_header_branch
                %232 = sbr.rel (%p230) target = $region80
              $region77: #{custom-call.25} parent=72 // loop_body
                %v236 = vld [vmem:[%s234] sm:%s227]
                %237 = vst [vmem:[%s235] sm:%s227] %v236
              $region78: #{custom-call.25} parent=72 // loop_footer
                %s233 = sadd.s32 1, %s229
              $region79: #{custom-call.25} parent=72 // loop_footer_branch
                %228 = sbr.rel target = $region75
              $region80: #{custom-call.25} parent=72 // loop_exit
                _
            $region73: #{custom-call.25} parent=57 // pred_fallthru
              _
          $region58: #{custom-call.25} parent=53 // pred_fallthru
            _
          // Predicated region
          $region59: #{custom-call.25} parent=53 // pred_check
            _
          $region60: #{custom-call.25} parent=53 // pred_check_branch
            %211 = sbr.rel (0) target = $region62
          $region61: #{custom-call.25} parent=53 // pred_region
            %s213 = ssub.s32 16, 1
            loop: start=0, step=1, limit=1
            $region63: #{custom-call.25} parent=61 // loop_pre_header
              _
            $region64: #{custom-call.25} parent=61 // loop_header
              %s215 = sphi 0, %s219
              %p216 = scmp.ge.s32.totalorder %s215, 1
              %s220 = sphi %s200, %s200
              %s221 = sphi %s205, %s205
            $region65: #{custom-call.25} parent=61 // loop_header_branch
              %218 = sbr.rel (%p216) target = $region69
            $region66: #{custom-call.25} parent=61 // loop_body
              %v222 = vld [vmem:[%s220] sm:%s213]
              %223 = vst [vmem:[%s221] sm:%s213] %v222
            $region67: #{custom-call.25} parent=61 // loop_footer
              %s219 = sadd.s32 1, %s215
            $region68: #{custom-call.25} parent=61 // loop_footer_branch
              %214 = sbr.rel target = $region64
            $region69: #{custom-call.25} parent=61 // loop_exit
              _
          $region62: #{custom-call.25} parent=53 // pred_fallthru
            _
        $region54: #{custom-call.25} parent=49 // pred_fallthru
          _
        %238 = vnop
      $region50: #{custom-call.25} parent=5 // pred_fallthru
        _
      %p239 = scmp.le.s32.totalorder 2, %s3
      // Predicated region
      $region81: #{custom-call.25} parent=5 // pred_check
        %p240 = pneg %p239
      $region82: #{custom-call.25} parent=5 // pred_check_branch
        %242 = sbr.rel (%p240) target = $region84
      $region83: #{custom-call.25} parent=5 // pred_region
        %s243 = ssub.s32 %s3, 2
        %s244 = sand.u32 %s9, 1
        %s245 = sand.u32 %s9, 1
        %s246 = smul.addr %s245, 4
        %s247 = scalar_lea.vmem [#allocation3], %s246
      $region84: #{custom-call.25} parent=5 // pred_fallthru
        _
    $region6: #{custom-call.25} parent=1 // loop_footer
      %s7 = sadd.s32 1, %s3
    $region7: #{custom-call.25} parent=1 // loop_footer_branch
      %2 = sbr.rel target = $region3
    $region8: #{custom-call.25} parent=1 // loop_exit
      _

// kernel: lift_splat_shoot_gpn.5
$region0: #{lift_splat_shoot_gpn.5}
  #allocation0 [shape = 'u32[]', space=smem, size = 0x4, offset = 0x4, fixed_abs, tag = 'smem constant byte address 0x4 - core index']
  #allocation1 [shape = 'u32[72,128]{1,0:T(1,128)}', space=vmem, size = 0x9000, scoped, tag = 'internal scratch']
  %s0 = inlined_call_operand.vmem [shape: bf16[8,768], index: 0, kind: input, shape index: {}]
  %s1 = inlined_call_operand.vmem [shape: bf16[768,32], index: 1, kind: input, shape index: {}]
  %s2 = inlined_call_operand.vmem [shape: bf16[32,12], index: 2, kind: input, shape index: {}]
  %s3 = inlined_call_operand.vmem [shape: f32[8,32], index: 3, kind: output, shape index: {}]
  %s4 = sld [smem:[#allocation0]]
  $region22: #{lift_splat_shoot_gpn.5} parent=0
    _
  %s6 = ssub.s32 1, %s4
  %s7 = scalar_select 0, %s6, %s4
  // Predicated region
  $region2: #{lift_splat_shoot_gpn.5} parent=0 // pred_check
    _
  $region3: #{lift_splat_shoot_gpn.5} parent=0 // pred_check_branch
    %9 = sbr.rel (0) target = $region5
  $region4: #{lift_splat_shoot_gpn.5} parent=0 // pred_region
    _
  $region5: #{lift_splat_shoot_gpn.5} parent=0 // pred_fallthru
    _
  // Predicated region
  $region6: #{lift_splat_shoot_gpn.5} parent=0 // pred_check
    _
  $region7: #{lift_splat_shoot_gpn.5} parent=0 // pred_check_branch
    %11 = sbr.rel (0) target = $region9
  $region8: #{lift_splat_shoot_gpn.5} parent=0 // pred_region
    _
  $region9: #{lift_splat_shoot_gpn.5} parent=0 // pred_fallthru
    _
  // Predicated region
  $region10: #{lift_splat_shoot_gpn.5} parent=0 // pred_check
    _
  $region11: #{lift_splat_shoot_gpn.5} parent=0 // pred_check_branch
    %13 = sbr.rel (0) target = $region13
  $region12: #{lift_splat_shoot_gpn.5} parent=0 // pred_region
    _
  $region13: #{lift_splat_shoot_gpn.5} parent=0 // pred_fallthru
    _
  %v15 = vld [vmem:[%s0] sm:$0xff]
  %v16 = vld [vmem:[%s0 + $0x8] sm:$0xff]
  %v17 = vld [vmem:[%s0 + $0x10] sm:$0xff]
  %v18 = vld [vmem:[%s1] sm:$0xf]
  %v19 = vld [vmem:[%s1 + $0x4] sm:$0xf]
  %v20 = vld [vmem:[%s1 + $0x8] sm:$0xf]
  %v21 = vld [vmem:[%s1 + $0xc] sm:$0xf]
  %v22 = vld [vmem:[%s1 + $0x10] sm:$0xf]
  %v23 = vld [vmem:[%s1 + $0x14] sm:$0xf]
  %v24 = vld [vmem:[%s1 + $0x18] sm:$0xf]
  %v25 = vld [vmem:[%s1 + $0x1c] sm:$0xf]
  %v26 = vld [vmem:[%s1 + $0x20] sm:$0xf]
  %v27 = vld [vmem:[%s1 + $0x24] sm:$0xf]
  %v28 = vld [vmem:[%s1 + $0x28] sm:$0xf]
  %v29 = vld [vmem:[%s1 + $0x2c] sm:$0xf]
  %v30 = vld [vmem:[%s1 + $0x30] sm:$0xf]
  %v31 = vld [vmem:[%s1 + $0x34] sm:$0xf]
  %v32 = vld [vmem:[%s1 + $0x38] sm:$0xf]
  %v33 = vld [vmem:[%s1 + $0x3c] sm:$0xf]
  %v34 = vld [vmem:[%s1 + $0x40] sm:$0xf]
  %v35 = vld [vmem:[%s1 + $0x44] sm:$0xf]
  %v36 = vld [vmem:[%s1 + $0x48] sm:$0xf]
  %v37 = vld [vmem:[%s1 + $0x4c] sm:$0xf]
  %v38 = vld [vmem:[%s1 + $0x50] sm:$0xf]
  %v39 = vld [vmem:[%s1 + $0x54] sm:$0xf]
  %v40 = vld [vmem:[%s1 + $0x58] sm:$0xf]
  %v41 = vld [vmem:[%s1 + $0x5c] sm:$0xf]
  %v42 = vld [vmem:[%s1 + $0x60] sm:$0xf]
  %v43 = vld [vmem:[%s1 + $0x64] sm:$0xf]
  %v44 = vld [vmem:[%s1 + $0x68] sm:$0xf]
  %v45 = vld [vmem:[%s1 + $0x6c] sm:$0xf]
  %v46 = vld [vmem:[%s1 + $0x70] sm:$0xf]
  %v47 = vld [vmem:[%s1 + $0x74] sm:$0xf]
  %v48 = vld [vmem:[%s1 + $0x78] sm:$0xf]
  %v49 = vld [vmem:[%s1 + $0x7c] sm:$0xf]
  %v50 = vld [vmem:[%s1 + $0x80] sm:$0xf]
  %v51 = vld [vmem:[%s1 + $0x84] sm:$0xf]
  %v52 = vld [vmem:[%s1 + $0x88] sm:$0xf]
  %v53 = vld [vmem:[%s1 + $0x8c] sm:$0xf]
  %v54 = vld [vmem:[%s1 + $0x90] sm:$0xf]
  %v55 = vld [vmem:[%s1 + $0x94] sm:$0xf]
  %v56 = vld [vmem:[%s1 + $0x98] sm:$0xf]
  %v57 = vld [vmem:[%s1 + $0x9c] sm:$0xf]
  %v58 = vld [vmem:[%s1 + $0xa0] sm:$0xf]
  %v59 = vld [vmem:[%s1 + $0xa4] sm:$0xf]
  %v60 = vld [vmem:[%s1 + $0xa8] sm:$0xf]
  %v61 = vld [vmem:[%s1 + $0xac] sm:$0xf]
  %v62 = vld [vmem:[%s1 + $0xb0] sm:$0xf]
  %v63 = vld [vmem:[%s1 + $0xb4] sm:$0xf]
  %v64 = vld [vmem:[%s1 + $0xb8] sm:$0xf]
  %v65 = vld [vmem:[%s1 + $0xbc] sm:$0xf]
  %v66 = vld [vmem:[%s1 + $0xc0] sm:$0xf]
  %v67 = vld [vmem:[%s1 + $0xc4] sm:$0xf]
  %v68 = vld [vmem:[%s1 + $0xc8] sm:$0xf]
  %v69 = vld [vmem:[%s1 + $0xcc] sm:$0xf]
  %v70 = vld [vmem:[%s1 + $0xd0] sm:$0xf]
  %v71 = vld [vmem:[%s1 + $0xd4] sm:$0xf]
  %v72 = vld [vmem:[%s1 + $0xd8] sm:$0xf]
  %v73 = vld [vmem:[%s1 + $0xdc] sm:$0xf]
  %v74 = vld [vmem:[%s1 + $0xe0] sm:$0xf]
  %v75 = vld [vmem:[%s1 + $0xe4] sm:$0xf]
  %v76 = vld [vmem:[%s1 + $0xe8] sm:$0xf]
  %v77 = vld [vmem:[%s1 + $0xec] sm:$0xf]
  %v78 = vld [vmem:[%s1 + $0xf0] sm:$0xf]
  %v79 = vld [vmem:[%s1 + $0xf4] sm:$0xf]
  %v80 = vld [vmem:[%s1 + $0xf8] sm:$0xf]
  %v81 = vld [vmem:[%s1 + $0xfc] sm:$0xf]
  %v82 = vld [vmem:[%s1 + $0x100] sm:$0xf]
  %v83 = vld [vmem:[%s1 + $0x104] sm:$0xf]
  %v84 = vld [vmem:[%s1 + $0x108] sm:$0xf]
  %v85 = vld [vmem:[%s1 + $0x10c] sm:$0xf]
  %v86 = vld [vmem:[%s1 + $0x110] sm:$0xf]
  %v87 = vld [vmem:[%s1 + $0x114] sm:$0xf]
  %v88 = vld [vmem:[%s1 + $0x118] sm:$0xf]
  %v89 = vld [vmem:[%s1 + $0x11c] sm:$0xf]
  %v90 = vld [vmem:[%s1 + $0x120] sm:$0xf]
  %v91 = vld [vmem:[%s1 + $0x124] sm:$0xf]
  %v92 = vld [vmem:[%s1 + $0x128] sm:$0xf]
  %v93 = vld [vmem:[%s1 + $0x12c] sm:$0xf]
  %v94 = vld [vmem:[%s1 + $0x130] sm:$0xf]
  %v95 = vld [vmem:[%s1 + $0x134] sm:$0xf]
  %v96 = vld [vmem:[%s1 + $0x138] sm:$0xf]
  %v97 = vld [vmem:[%s1 + $0x13c] sm:$0xf]
  %v98 = vld [vmem:[%s1 + $0x140] sm:$0xf]
  %v99 = vld [vmem:[%s1 + $0x144] sm:$0xf]
  %v100 = vld [vmem:[%s1 + $0x148] sm:$0xf]
  %v101 = vld [vmem:[%s1 + $0x14c] sm:$0xf]
  %v102 = vld [vmem:[%s1 + $0x150] sm:$0xf]
  %v103 = vld [vmem:[%s1 + $0x154] sm:$0xf]
  %v104 = vld [vmem:[%s1 + $0x158] sm:$0xf]
  %v105 = vld [vmem:[%s1 + $0x15c] sm:$0xf]
  %v106 = vld [vmem:[%s1 + $0x160] sm:$0xf]
  %v107 = vld [vmem:[%s1 + $0x164] sm:$0xf]
  %v108 = vld [vmem:[%s1 + $0x168] sm:$0xf]
  %v109 = vld [vmem:[%s1 + $0x16c] sm:$0xf]
  %v110 = vld [vmem:[%s1 + $0x170] sm:$0xf]
  %v111 = vld [vmem:[%s1 + $0x174] sm:$0xf]
  %v112 = vld [vmem:[%s1 + $0x178] sm:$0xf]
  %v113 = vld [vmem:[%s1 + $0x17c] sm:$0xf]
  %v117 = vunpack.c.l.b16 %v15
  %v118 = vunpack.c.h.b16 %v15
  %v119 = vunpack.c.l.b16 %v16
  %v120 = vunpack.c.h.b16 %v16
  %v121 = vunpack.c.l.b16 %v17
  %v122 = vunpack.c.h.b16 %v17
  %v123 = vpack.c.b16 %v117, %v117
  %v124 = vpack.c.b16 %v118, %v118
  %v125 = vpack.c.b16 %v119, %v119
  %v126 = vpack.c.b16 %v120, %v120
  %v127 = vpack.c.b16 %v121, %v121
  %v128 = vpack.c.b16 %v122, %v122
  %v231 = vunpack.c.l.b16 %v18
  %v232 = vunpack.c.l.b16 %v19
  %v233 = vunpack.c.l.b16 %v20
  %v234 = vunpack.c.l.b16 %v21
  %v235 = vunpack.c.l.b16 %v22
  %v236 = vunpack.c.l.b16 %v23
  %v237 = vunpack.c.l.b16 %v24
  %v238 = vunpack.c.l.b16 %v25
  %v239 = vunpack.c.l.b16 %v26
  %v240 = vunpack.c.l.b16 %v27
  %v241 = vunpack.c.l.b16 %v28
  %v242 = vunpack.c.l.b16 %v29
  %v243 = vunpack.c.l.b16 %v30
  %v244 = vunpack.c.l.b16 %v31
  %v245 = vunpack.c.l.b16 %v32
  %v246 = vunpack.c.l.b16 %v33
  %v247 = vunpack.c.l.b16 %v34
  %v248 = vunpack.c.l.b16 %v35
  %v249 = vunpack.c.l.b16 %v36
  %v250 = vunpack.c.l.b16 %v37
  %v251 = vunpack.c.l.b16 %v38
  %v252 = vunpack.c.l.b16 %v39
  %v253 = vunpack.c.l.b16 %v40
  %v254 = vunpack.c.l.b16 %v41
  %v255 = vunpack.c.l.b16 %v42
  %v256 = vunpack.c.l.b16 %v43
  %v257 = vunpack.c.l.b16 %v44
  %v258 = vunpack.c.l.b16 %v45
  %v259 = vunpack.c.l.b16 %v46
  %v260 = vunpack.c.l.b16 %v47
  %v261 = vunpack.c.l.b16 %v48
  %v262 = vunpack.c.l.b16 %v49
  %v263 = vunpack.c.l.b16 %v50
  %v264 = vunpack.c.l.b16 %v51
  %v265 = vunpack.c.l.b16 %v52
  %v266 = vunpack.c.l.b16 %v53
  %v267 = vunpack.c.l.b16 %v54
  %v268 = vunpack.c.l.b16 %v55
  %v269 = vunpack.c.l.b16 %v56
  %v270 = vunpack.c.l.b16 %v57
  %v271 = vunpack.c.l.b16 %v58
  %v272 = vunpack.c.l.b16 %v59
  %v273 = vunpack.c.l.b16 %v60
  %v274 = vunpack.c.l.b16 %v61
  %v275 = vunpack.c.l.b16 %v62
  %v276 = vunpack.c.l.b16 %v63
  %v277 = vunpack.c.l.b16 %v64
  %v278 = vunpack.c.l.b16 %v65
  %v279 = vunpack.c.l.b16 %v66
  %v280 = vunpack.c.l.b16 %v67
  %v281 = vunpack.c.l.b16 %v68
  %v282 = vunpack.c.l.b16 %v69
  %v283 = vunpack.c.l.b16 %v70
  %v284 = vunpack.c.l.b16 %v71
  %v285 = vunpack.c.l.b16 %v72
  %v286 = vunpack.c.l.b16 %v73
  %v287 = vunpack.c.l.b16 %v74
  %v288 = vunpack.c.l.b16 %v75
  %v289 = vunpack.c.l.b16 %v76
  %v290 = vunpack.c.l.b16 %v77
  %v291 = vunpack.c.l.b16 %v78
  %v292 = vunpack.c.l.b16 %v79
  %v293 = vunpack.c.l.b16 %v80
  %v294 = vunpack.c.l.b16 %v81
  %v295 = vunpack.c.l.b16 %v82
  %v296 = vunpack.c.l.b16 %v83
  %v297 = vunpack.c.l.b16 %v84
  %v298 = vunpack.c.l.b16 %v85
  %v299 = vunpack.c.l.b16 %v86
  %v300 = vunpack.c.l.b16 %v87
  %v301 = vunpack.c.l.b16 %v88
  %v302 = vunpack.c.l.b16 %v89
  %v303 = vunpack.c.l.b16 %v90
  %v304 = vunpack.c.l.b16 %v91
  %v305 = vunpack.c.l.b16 %v92
  %v306 = vunpack.c.l.b16 %v93
  %v307 = vunpack.c.l.b16 %v94
  %v308 = vunpack.c.l.b16 %v95
  %v309 = vunpack.c.l.b16 %v96
  %v310 = vunpack.c.l.b16 %v97
  %v311 = vunpack.c.l.b16 %v98
  %v312 = vunpack.c.l.b16 %v99
  %v313 = vunpack.c.l.b16 %v100
  %v314 = vunpack.c.l.b16 %v101
  %v315 = vunpack.c.l.b16 %v102
  %v316 = vunpack.c.l.b16 %v103
  %v317 = vunpack.c.l.b16 %v104
  %v318 = vunpack.c.l.b16 %v105
  %v319 = vunpack.c.l.b16 %v106
  %v320 = vunpack.c.l.b16 %v107
  %v321 = vunpack.c.l.b16 %v108
  %v322 = vunpack.c.l.b16 %v109
  %v323 = vunpack.c.l.b16 %v110
  %v324 = vunpack.c.l.b16 %v111
  %v325 = vunpack.c.l.b16 %v112
  %v326 = vunpack.c.l.b16 %v113
  %v327 = vpack.c.b16 %v232, %v231
  %v328 = vpack.c.b16 %v234, %v233
  %v329 = vpack.c.b16 %v236, %v235
  %v330 = vpack.c.b16 %v238, %v237
  %v331 = vpack.c.b16 %v240, %v239
  %v332 = vpack.c.b16 %v242, %v241
  %v333 = vpack.c.b16 %v244, %v243
  %v334 = vpack.c.b16 %v246, %v245
  %v335 = vpack.c.b16 %v248, %v247
  %v336 = vpack.c.b16 %v250, %v249
  %v337 = vpack.c.b16 %v252, %v251
  %v338 = vpack.c.b16 %v254, %v253
  %v339 = vpack.c.b16 %v256, %v255
  %v340 = vpack.c.b16 %v258, %v257
  %v341 = vpack.c.b16 %v260, %v259
  %v342 = vpack.c.b16 %v262, %v261
  %v343 = vpack.c.b16 %v264, %v263
  %v344 = vpack.c.b16 %v266, %v265
  %v345 = vpack.c.b16 %v268, %v267
  %v346 = vpack.c.b16 %v270, %v269
  %v347 = vpack.c.b16 %v272, %v271
  %v348 = vpack.c.b16 %v274, %v273
  %v349 = vpack.c.b16 %v276, %v275
  %v350 = vpack.c.b16 %v278, %v277
  %v351 = vpack.c.b16 %v280, %v279
  %v352 = vpack.c.b16 %v282, %v281
  %v353 = vpack.c.b16 %v284, %v283
  %v354 = vpack.c.b16 %v286, %v285
  %v355 = vpack.c.b16 %v288, %v287
  %v356 = vpack.c.b16 %v290, %v289
  %v357 = vpack.c.b16 %v292, %v291
  %v358 = vpack.c.b16 %v294, %v293
  %v359 = vpack.c.b16 %v296, %v295
  %v360 = vpack.c.b16 %v298, %v297
  %v361 = vpack.c.b16 %v300, %v299
  %v362 = vpack.c.b16 %v302, %v301
  %v363 = vpack.c.b16 %v304, %v303
  %v364 = vpack.c.b16 %v306, %v305
  %v365 = vpack.c.b16 %v308, %v307
  %v366 = vpack.c.b16 %v310, %v309
  %v367 = vpack.c.b16 %v312, %v311
  %v368 = vpack.c.b16 %v314, %v313
  %v369 = vpack.c.b16 %v316, %v315
  %v370 = vpack.c.b16 %v318, %v317
  %v371 = vpack.c.b16 %v320, %v319
  %v372 = vpack.c.b16 %v322, %v321
  %v373 = vpack.c.b16 %v324, %v323
  %v374 = vpack.c.b16 %v326, %v325
  %423 = vmatpush.bf16.msra.mxu0 %v334
  %424 = vmatpush.bf16.msra.mxu0 %v333
  %425 = vmatpush.bf16.msra.mxu0 %v332
  %426 = vmatpush.bf16.msra.mxu0 %v331
  %427 = vmatpush.bf16.msra.mxu0 %v330
  %428 = vmatpush.bf16.msra.mxu0 %v329
  %429 = vmatpush.bf16.msra.mxu0 %v328
  %430 = vmatpush.bf16.msra.mxu0 %v327
  %431 = vmatmul.bf16.gmra.mxu0 %v123
  %v432 = vpop.f32.mrf.mxu0
  %v433 = vadd.f32 0.0, %v432
  %v434 = vpop.f32.mrf.mxu0
  %435 = vdwg.mxu0
  %436 = vmatpush.bf16.msra.mxu0 %v342
  %437 = vmatpush.bf16.msra.mxu0 %v341
  %438 = vmatpush.bf16.msra.mxu0 %v340
  %439 = vmatpush.bf16.msra.mxu0 %v339
  %440 = vmatpush.bf16.msra.mxu0 %v338
  %441 = vmatpush.bf16.msra.mxu0 %v337
  %442 = vmatpush.bf16.msra.mxu0 %v336
  %443 = vmatpush.bf16.msra.mxu0 %v335
  %444 = vmatmul.bf16.gmra.mxu0 %v124
  %v445 = vpop.f32.mrf.mxu0
  %v446 = vadd.f32 %v433, %v445
  %v447 = vpop.f32.mrf.mxu0
  %448 = vdwg.mxu0
  %449 = vmatpush.bf16.msra.mxu0 %v350
  %450 = vmatpush.bf16.msra.mxu0 %v349
  %451 = vmatpush.bf16.msra.mxu0 %v348
  %452 = vmatpush.bf16.msra.mxu0 %v347
  %453 = vmatpush.bf16.msra.mxu0 %v346
  %454 = vmatpush.bf16.msra.mxu0 %v345
  %455 = vmatpush.bf16.msra.mxu0 %v344
  %456 = vmatpush.bf16.msra.mxu0 %v343
  %457 = vmatmul.bf16.gmra.mxu0 %v125
  %v458 = vpop.f32.mrf.mxu0
  %v459 = vadd.f32 %v446, %v458
  %v460 = vpop.f32.mrf.mxu0
  %461 = vdwg.mxu0
  %462 = vmatpush.bf16.msra.mxu0 %v358
  %463 = vmatpush.bf16.msra.mxu0 %v357
  %464 = vmatpush.bf16.msra.mxu0 %v356
  %465 = vmatpush.bf16.msra.mxu0 %v355
  %466 = vmatpush.bf16.msra.mxu0 %v354
  %467 = vmatpush.bf16.msra.mxu0 %v353
  %468 = vmatpush.bf16.msra.mxu0 %v352
  %469 = vmatpush.bf16.msra.mxu0 %v351
  %470 = vmatmul.bf16.gmra.mxu0 %v126
  %v471 = vpop.f32.mrf.mxu0
  %v472 = vadd.f32 %v459, %v471
  %v473 = vpop.f32.mrf.mxu0
  %474 = vdwg.mxu0
  %475 = vmatpush.bf16.msra.mxu0 %v366
  %476 = vmatpush.bf16.msra.mxu0 %v365
  %477 = vmatpush.bf16.msra.mxu0 %v364
  %478 = vmatpush.bf16.msra.mxu0 %v363
  %479 = vmatpush.bf16.msra.mxu0 %v362
  %480 = vmatpush.bf16.msra.mxu0 %v361
  %481 = vmatpush.bf16.msra.mxu0 %v360
  %482 = vmatpush.bf16.msra.mxu0 %v359
  %483 = vmatmul.bf16.gmra.mxu0 %v127
  %v484 = vpop.f32.mrf.mxu0
  %v485 = vadd.f32 %v472, %v484
  %v486 = vpop.f32.mrf.mxu0
  %487 = vdwg.mxu0
  %488 = vmatpush.bf16.msra.mxu0 %v374
  %489 = vmatpush.bf16.msra.mxu0 %v373
  %490 = vmatpush.bf16.msra.mxu0 %v372
  %491 = vmatpush.bf16.msra.mxu0 %v371
  %492 = vmatpush.bf16.msra.mxu0 %v370
  %493 = vmatpush.bf16.msra.mxu0 %v369
  %494 = vmatpush.bf16.msra.mxu0 %v368
  %495 = vmatpush.bf16.msra.mxu0 %v367
  %496 = vmatmul.bf16.gmra.mxu0 %v128
  %v497 = vpop.f32.mrf.mxu0
  %v498 = vadd.f32 %v485, %v497
  %v499 = vpop.f32.mrf.mxu0
  %500 = vdwg.mxu0
  %v501 = vmax.f32 %v498, 0.0
  %v502 = vpack.c.bf16 %v501, %v501
  %v503 = vld [vmem:[%s2] sm:$0xf]
  %v504 = vld [vmem:[%s2 + $0x4] sm:$0xf]
  %v505 = vld [vmem:[%s2 + $0x8] sm:$0xf]
  %v506 = vld [vmem:[%s2 + $0xc] sm:$0xf]
  %v511 = vunpack.c.l.b16 %v503
  %v512 = vunpack.c.l.b16 %v504
  %v513 = vunpack.c.l.b16 %v505
  %v514 = vunpack.c.l.b16 %v506
  %v515 = vpack.c.b16 %v512, %v511
  %v516 = vpack.c.b16 %v514, %v513
  %vm519 = vcmask 261120
  %v521 = vsel %vm519, %v502, 0
  %523 = vmatpush.bf16.msra.mxu0 0
  %524 = vmatpush.bf16.msra.mxu0 0
  %525 = vmatpush.bf16.msra.mxu0 0
  %526 = vmatpush.bf16.msra.mxu0 0
  %527 = vmatpush.bf16.msra.mxu0 0
  %528 = vmatpush.bf16.msra.mxu0 0
  %529 = vmatpush.bf16.msra.mxu0 %v516
  %530 = vmatpush.bf16.msra.mxu0 %v515
  %531 = vmatmul.bf16.gmra.mxu0 %v521
  %v532 = vpop.f32.mrf.mxu0
  %v533 = vadd.f32 0.0, %v532
  %v534 = vpop.f32.mrf.mxu0
  %535 = vdwg.mxu0
  %vm536 = vcmask 31744
  %v537 = vsel %vm536, %v533, -inf
  %538 = vmax.xlane.f32.xlu0 %v537
  %v539 = vpop.xlane.xlu0 %538
  %v540 = vsub.f32 %v533, %v539
  %v541 = vmul.f32 %v540, 1.442695
  %v542 = vpow.pop %v541
  %v543 = vsel %vm536, %v542, 0.0
  %544 = vadd.xlane.f32.xlu0 %v543
  %v545 = vpop.xlane.xlu0 %544
  %v546 = vrcp.pop %v545
  %v547 = vmul.f32 %v545, %v546
  %v548 = vsub.f32 1.0, %v547
  %v549 = vmul.f32 %v546, %v548
  %v550 = vadd.f32 %v546, %v549
  %vm551 = vweird.f32 %v545
  %vm552 = vweird.f32 %v546
  %vm553 = vmor %vm551, %vm552
  %v554 = vsel %vm553, %v546, %v550
  %v555 = vand.u32 2147483647, %v545
  %vm556 = vcmp.eq.f32.partialorder %v555, 8.507059e+37
  %v557 = vand.u32 %v545, 2147483648
  %v558 = vor.u32 1.1754944e-38, %v557
  %v559 = vsel %vm556, %v558, %v554
  %v560 = vmul.f32 %v542, %v559
  %562 = vset.pattern.permute.xlu0 0
  %563 = vperm.xlu0 %562, %v560
  %v564 = vpop.permute.xlu0 %563
  %v566 = vmul.f32 %v564, %v533
  %568 = vrot.lane.b32.xlu0 %v566, 124
  %v569 = vpop.permute.xlu0 %568
  %vm571 = vcmask 64512
  %572 = vst.msk [vmem:[%s3] sm:$0xff] %vm571, %v569
  %573 = vset.pattern.permute.xlu0 1
  %574 = vperm.xlu0 %573, %v560
  %v575 = vpop.permute.xlu0 %574
  %v577 = vmul.f32 %v575, %v533
  %579 = vrot.lane.b32.xlu0 %v577, 4
  %v580 = vpop.permute.xlu0 %579
  %vm582 = vcmask 130112
  %583 = vst.msk [vmem:[%s3] sm:$0xff] %vm582, %v580
  %584 = vset.pattern.permute.xlu0 2
  %585 = vperm.xlu0 %584, %v560
  %v586 = vpop.permute.xlu0 %585
  %v588 = vmul.f32 %v586, %v533
  %590 = vrot.lane.b32.xlu0 %v588, 12
  %v591 = vpop.permute.xlu0 %590
  %vm593 = vcmask 195712
  %594 = vst.msk [vmem:[%s3] sm:$0xff] %vm593, %v591
  %595 = vset.pattern.permute.xlu0 3
  %596 = vperm.xlu0 %595, %v560
  %v597 = vpop.permute.xlu0 %596
  %v599 = vmul.f32 %v597, %v533
  %601 = vrot.lane.b32.xlu0 %v599, 20
  %v602 = vpop.permute.xlu0 %601
  %vm604 = vcmask 261312
  %605 = vst.msk [vmem:[%s3] sm:$0xff] %vm604, %v602
  // Predicated region
  $region14: #{lift_splat_shoot_gpn.5} parent=0 // pred_check
    _
  $region15: #{lift_splat_shoot_gpn.5} parent=0 // pred_check_branch
    %607 = sbr.rel (0) target = $region17
  $region16: #{lift_splat_shoot_gpn.5} parent=0 // pred_region
    _
  $region17: #{lift_splat_shoot_gpn.5} parent=0 // pred_fallthru
    _
  // Predicated region
  $region18: #{lift_splat_shoot_gpn.5} parent=0 // pred_check
    _
  $region19: #{lift_splat_shoot_gpn.5} parent=0 // pred_check_branch
    %609 = sbr.rel (0) target = $region21
  $region20: #{lift_splat_shoot_gpn.5} parent=0 // pred_region
    _
  $region21: #{lift_splat_shoot_gpn.5} parent=0 // pred_fallthru
    _

// kernel: lift_splat_shoot_gpn.6
$region0: #{lift_splat_shoot_gpn.6}
  #allocation0 [shape = 'u32[]', space=smem, size = 0x4, offset = 0x4, fixed_abs, tag = 'smem constant byte address 0x4 - core index']
  #allocation1 [shape = 'u32[72,128]{1,0:T(1,128)}', space=vmem, size = 0x9000, scoped, tag = 'internal scratch']
  %s0 = inlined_call_operand.vmem [shape: bf16[256,72], index: 0, kind: input, shape index: {}]
  %s1 = inlined_call_operand.vmem [shape: bf16[72,128], index: 1, kind: input, shape index: {}]
  %s2 = inlined_call_operand.vmem [shape: f32[1,128], index: 2, kind: input, shape index: {}]
  %s3 = inlined_call_operand.vmem [shape: f32[256,128], index: 3, kind: output, shape index: {}]
  %s4 = sld [smem:[#allocation0]]
  $region45: #{lift_splat_shoot_gpn.6} parent=0
    _
  %s6 = ssub.s32 1, %s4
  %s7 = scalar_select 0, %s6, %s4
  loop: start=0, step=1, limit=4
  $region2: #{lift_splat_shoot_gpn.6} parent=0 // loop_pre_header
    _
  $region3: #{lift_splat_shoot_gpn.6} parent=0 // loop_header
    %s9 = sphi 0, %s13
    %p10 = scmp.ge.s32.totalorder %s9, 4
    %s19 = sphi 0, %s21
    %s22 = sphi 0, %s19
    %s23 = sphi 0, %s22
    %s39 = sphi 0, %s23
    %s43 = sphi 0, %s43
    %s45 = sphi 0, %s43
    %s46 = sphi 0, %s45
    %s60 = sphi 0, %s46
    %s64 = sphi 0, %s64
    %s66 = sphi 0, %s64
    %s67 = sphi 0, %s66
    %s81 = sphi 0, %s67
    %s87 = sphi 0, %s89
    %s90 = sphi 0, %s87
    %s91 = sphi 0, %s90
    %s107 = sphi 0, %s91
  $region4: #{lift_splat_shoot_gpn.6} parent=0 // loop_header_branch
    %12 = sbr.rel (%p10) target = $region8
  $region5: #{lift_splat_shoot_gpn.6} parent=0 // loop_body
    %s14 = ssub.s32 %s9, 1
    %s15 = ssub.s32 %s9, 2
    %s16 = sadd.s32 %s9, 1
    %s17 = ssub.s32 %s9, %s16
    %p18 = scmp.eq.s32.totalorder %s17, 0
    %s20 = sadd.s32 %s19, 1
    %s21 = scalar_select %p18, %s19, %s20
    %p24 = pneg %p18
    %p25 = scmp.eq.s32.totalorder %s9, 1
    %p26 = por %p24, %p25
    %p27 = scmp.ne.s32.totalorder %s19, %s22
    %p28 = scmp.eq.s32.totalorder %s9, 0
    %p29 = por %p27, %p28
    %p30 = scmp.ne.s32.totalorder %s19, %s22
    %p31 = scmp.eq.s32.totalorder %s14, 1
    %p32 = por %p30, %p31
    %p33 = scmp.ne.s32.totalorder %s22, %s23
    %p34 = scmp.eq.s32.totalorder %s14, 0
    %p35 = por %p33, %p34
    %p36 = scmp.ne.s32.totalorder %s22, %s23
    %p37 = scmp.eq.s32.totalorder %s15, 1
    %p38 = por %p36, %p37
    %p40 = scmp.ne.s32.totalorder %s23, %s39
    %p41 = scmp.eq.s32.totalorder %s15, 0
    %p42 = por %p40, %p41
    %s44 = sadd.s32 %s43, 1
    %p47 = scmp.eq.s32.totalorder %s9, 1
    %p48 = scmp.ne.s32.totalorder %s43, %s45
    %p49 = scmp.eq.s32.totalorder %s9, 0
    %p50 = por %p48, %p49
    %p51 = scmp.ne.s32.totalorder %s43, %s45
    %p52 = scmp.eq.s32.totalorder %s14, 1
    %p53 = por %p51, %p52
    %p54 = scmp.ne.s32.totalorder %s45, %s46
    %p55 = scmp.eq.s32.totalorder %s14, 0
    %p56 = por %p54, %p55
    %p57 = scmp.ne.s32.totalorder %s45, %s46
    %p58 = scmp.eq.s32.totalorder %s15, 1
    %p59 = por %p57, %p58
    %p61 = scmp.ne.s32.totalorder %s46, %s60
    %p62 = scmp.eq.s32.totalorder %s15, 0
    %p63 = por %p61, %p62
    %s65 = sadd.s32 %s64, 1
    %p68 = scmp.eq.s32.totalorder %s9, 1
    %p69 = scmp.ne.s32.totalorder %s64, %s66
    %p70 = scmp.eq.s32.totalorder %s9, 0
    %p71 = por %p69, %p70
    %p72 = scmp.ne.s32.totalorder %s64, %s66
    %p73 = scmp.eq.s32.totalorder %s14, 1
    %p74 = por %p72, %p73
    %p75 = scmp.ne.s32.totalorder %s66, %s67
    %p76 = scmp.eq.s32.totalorder %s14, 0
    %p77 = por %p75, %p76
    %p78 = scmp.ne.s32.totalorder %s66, %s67
    %p79 = scmp.eq.s32.totalorder %s15, 1
    %p80 = por %p78, %p79
    %p82 = scmp.ne.s32.totalorder %s67, %s81
    %p83 = scmp.eq.s32.totalorder %s15, 0
    %p84 = por %p82, %p83
    %s85 = ssub.s32 %s9, %s16
    %p86 = scmp.eq.s32.totalorder %s85, 0
    %s88 = sadd.s32 %s87, 1
    %s89 = scalar_select %p86, %s87, %s88
    %p92 = pneg %p86
    %p93 = scmp.eq.s32.totalorder %s9, 1
    %p94 = por %p92, %p93
    %p95 = scmp.ne.s32.totalorder %s87, %s90
    %p96 = scmp.eq.s32.totalorder %s9, 0
    %p97 = por %p95, %p96
    %p98 = scmp.ne.s32.totalorder %s87, %s90
    %p99 = scmp.eq.s32.totalorder %s14, 1
    %p100 = por %p98, %p99
    %p101 = scmp.ne.s32.totalorder %s90, %s91
    %p102 = scmp.eq.s32.totalorder %s14, 0
    %p103 = por %p101, %p102
    %p104 = scmp.ne.s32.totalorder %s90, %s91
    %p105 = scmp.eq.s32.totalorder %s15, 1
    %p106 = por %p104, %p105
    %p108 = scmp.ne.s32.totalorder %s91, %s107
    %p109 = scmp.eq.s32.totalorder %s15, 0
    %p110 = por %p108, %p109
    %p111 = scmp.le.s32.totalorder 1, %s9
    %p112 = scmp.lt.s32.totalorder %s9, 3
    %p113 = pnand %p111, %p112
    %p114 = pneg %p113
    // Predicated region
    $region9: #{lift_splat_shoot_gpn.6} parent=5 // pred_check
      _
    $region10: #{lift_splat_shoot_gpn.6} parent=5 // pred_check_branch
      %116 = sbr.rel (%p113) target = $region12
    $region11: #{lift_splat_shoot_gpn.6} parent=5 // pred_region
      %s117 = ssub.s32 %s9, 1
      // Predicated region
      $region13: #{lift_splat_shoot_gpn.6} parent=11 // pred_check
        %p118 = pneg %p56
      $region14: #{lift_splat_shoot_gpn.6} parent=11 // pred_check_branch
        %120 = sbr.rel (%p118) target = $region16
      $region15: #{lift_splat_shoot_gpn.6} parent=11 // pred_region
        _
      $region16: #{lift_splat_shoot_gpn.6} parent=11 // pred_fallthru
        _
      // Predicated region
      $region17: #{lift_splat_shoot_gpn.6} parent=11 // pred_check
        %p121 = pneg %p77
      $region18: #{lift_splat_shoot_gpn.6} parent=11 // pred_check_branch
        %123 = sbr.rel (%p121) target = $region20
      $region19: #{lift_splat_shoot_gpn.6} parent=11 // pred_region
        _
      $region20: #{lift_splat_shoot_gpn.6} parent=11 // pred_fallthru
        _
    $region12: #{lift_splat_shoot_gpn.6} parent=5 // pred_fallthru
      _
    %p124 = scmp.lt.s32.totalorder %s9, 2
    // Predicated region
    $region21: #{lift_splat_shoot_gpn.6} parent=5 // pred_check
      %p125 = pneg %p124
    $region22: #{lift_splat_shoot_gpn.6} parent=5 // pred_check_branch
      %127 = sbr.rel (%p125) target = $region24
    $region23: #{lift_splat_shoot_gpn.6} parent=5 // pred_region
      // Predicated region
      $region25: #{lift_splat_shoot_gpn.6} parent=23 // pred_check
        %p128 = pneg %p29
      $region26: #{lift_splat_shoot_gpn.6} parent=23 // pred_check_branch
        %130 = sbr.rel (%p128) target = $region28
      $region27: #{lift_splat_shoot_gpn.6} parent=23 // pred_region
        %s131 = smul.u32 16, %s9
        %p132 = scmp.lt.s32.totalorder %s131, 31
        %s133 = scalar_select %p132, %s131, 31
        %s134 = smul.addr %s133, 4
        %s135 = scalar_lea.vmem %s0, %s134
        %s136 = smul.u32 16, %s9
      $region28: #{lift_splat_shoot_gpn.6} parent=23 // pred_fallthru
        _
    $region24: #{lift_splat_shoot_gpn.6} parent=5 // pred_fallthru
      _
    %p137 = scmp.le.s32.totalorder 1, %s9
    %p138 = scmp.lt.s32.totalorder %s9, 3
    %p139 = pnand %p137, %p138
    %p140 = pneg %p139
    // Predicated region
    $region29: #{lift_splat_shoot_gpn.6} parent=5 // pred_check
      _
    $region30: #{lift_splat_shoot_gpn.6} parent=5 // pred_check_branch
      %142 = sbr.rel (%p139) target = $region32
    $region31: #{lift_splat_shoot_gpn.6} parent=5 // pred_region
      %s143 = ssub.s32 %s9, 1
      %s144 = smul.u32 16, %s14
      %p145 = scmp.lt.s32.totalorder %s144, 31
      %s146 = scalar_select %p145, %s144, 31
      %s147 = smul.addr %s146, 4
      %s148 = scalar_lea.vmem %s0, %s147
      %p149 = pneg %p35
      %p150 = pneg %p32
      %p151 = pneg %p56
      %p152 = pneg %p53
      %p153 = pneg %p77
      %p154 = pneg %p74
      %p155 = pneg %p103
      %p156 = pneg %p100
      %s157 = smul.u32 16, %s14
      %p158 = scmp.lt.s32.totalorder %s157, 31
      %s159 = scalar_select %p158, %s157, 31
      %s160 = smul.addr %s159, 8
      %s161 = scalar_lea.vmem %s3, %s160
      %s162 = smul.u32 16, %s14
      %p163 = scmp.lt.s32.totalorder %s162, 31
      %s164 = scalar_select %p163, %s162, 31
      %s165 = smul.addr %s164, 4
      %s166 = scalar_lea.vmem %s0, %s165
      %s167 = smul.u32 16, %s14
      %s168 = smul.u32 16, %s14
      %p169 = scmp.lt.s32.totalorder %s168, 31
      %s170 = scalar_select %p169, %s168, 31
      %s171 = smul.addr %s170, 8
      %s172 = scalar_lea.vmem %s3, %s171
      %s173 = smul.u32 16, %s14
      %v175 = vld [vmem:[%s166] sm:$0xf]
      %v176 = vld [vmem:[%s166 + $0x4] sm:$0xf]
      %v177 = vld [vmem:[%s166 + $0x8] sm:$0xf]
      %v178 = vld [vmem:[%s166 + $0xc] sm:$0xf]
      %v179 = vld [vmem:[%s166 + $0x10] sm:$0xf]
      %v180 = vld [vmem:[%s166 + $0x14] sm:$0xf]
      %v181 = vld [vmem:[%s166 + $0x18] sm:$0xf]
      %v182 = vld [vmem:[%s166 + $0x1c] sm:$0xf]
      %v183 = vld [vmem:[%s166 + $0x20] sm:$0xf]
      %v184 = vld [vmem:[%s166 + $0x24] sm:$0xf]
      %v185 = vld [vmem:[%s166 + $0x28] sm:$0xf]
      %v186 = vld [vmem:[%s166 + $0x2c] sm:$0xf]
      %v187 = vld [vmem:[%s166 + $0x30] sm:$0xf]
      %v188 = vld [vmem:[%s166 + $0x34] sm:$0xf]
      %v189 = vld [vmem:[%s166 + $0x38] sm:$0xf]
      %v190 = vld [vmem:[%s166 + $0x3c] sm:$0xf]
      %v191 = vld [vmem:[%s1] sm:$0xf]
      %v192 = vld [vmem:[%s1 + $0x4] sm:$0xf]
      %v193 = vld [vmem:[%s1 + $0x8] sm:$0xf]
      %v194 = vld [vmem:[%s1 + $0xc] sm:$0xf]
      %v195 = vld [vmem:[%s1 + $0x10] sm:$0xf]
      %v196 = vld [vmem:[%s1 + $0x14] sm:$0xf]
      %v197 = vld [vmem:[%s1 + $0x18] sm:$0xf]
      %v198 = vld [vmem:[%s1 + $0x1c] sm:$0xf]
      %v199 = vld [vmem:[%s1 + $0x20] sm:$0xf]
      %v200 = vld [vmem:[%s2] sm:$0x1]
      %v202 = vperm.slane %v200, 0
      %v220 = vunpack.c.l.b16 %v175
      %v221 = vunpack.c.l.b16 %v176
      %v222 = vunpack.c.l.b16 %v177
      %v223 = vunpack.c.l.b16 %v178
      %v224 = vunpack.c.l.b16 %v179
      %v225 = vunpack.c.l.b16 %v180
      %v226 = vunpack.c.l.b16 %v181
      %v227 = vunpack.c.l.b16 %v182
      %v228 = vunpack.c.l.b16 %v183
      %v229 = vunpack.c.l.b16 %v184
      %v230 = vunpack.c.l.b16 %v185
      %v231 = vunpack.c.l.b16 %v186
      %v232 = vunpack.c.l.b16 %v187
      %v233 = vunpack.c.l.b16 %v188
      %v234 = vunpack.c.l.b16 %v189
      %v235 = vunpack.c.l.b16 %v190
      %v236 = vpack.c.b16 %v221, %v220
      %v237 = vpack.c.b16 %v223, %v222
      %v238 = vpack.c.b16 %v225, %v224
      %v239 = vpack.c.b16 %v227, %v226
      %v240 = vpack.c.b16 %v229, %v228
      %v241 = vpack.c.b16 %v231, %v230
      %v242 = vpack.c.b16 %v233, %v232
      %v243 = vpack.c.b16 %v235, %v234
      %v253 = vunpack.c.l.b16 %v191
      %v254 = vunpack.c.l.b16 %v192
      %v255 = vunpack.c.l.b16 %v193
      %v256 = vunpack.c.l.b16 %v194
      %v257 = vunpack.c.l.b16 %v195
      %v258 = vunpack.c.l.b16 %v196
      %v259 = vunpack.c.l.b16 %v197
      %v260 = vunpack.c.l.b16 %v198
      %v261 = vunpack.c.l.b16 %v199
      %v262 = vpack.c.b16 %v254, %v253
      %v263 = vpack.c.b16 %v256, %v255
      %v264 = vpack.c.b16 %v258, %v257
      %v265 = vpack.c.b16 %v260, %v259
      %v266 = vpack.c.b16 %v261, %v261
      %vm271 = vcmask 588800
      %v273 = vsel %vm271, %v236, 0
      %v276 = vsel %vm271, %v237, 0
      %v279 = vsel %vm271, %v238, 0
      %v282 = vsel %vm271, %v239, 0
      %v285 = vsel %vm271, %v240, 0
      %v288 = vsel %vm271, %v241, 0
      %v291 = vsel %vm271, %v242, 0
      %v294 = vsel %vm271, %v243, 0
      %vm296 = vcmask 1043456
      %v298 = vsel %vm296, %v266, 0
      %300 = vmatpush.bf16.msra.mxu0 0
      %301 = vmatpush.bf16.msra.mxu0 0
      %302 = vmatpush.bf16.msra.mxu0 0
      %303 = vmatpush.bf16.msra.mxu0 %v298
      %304 = vmatpush.bf16.msra.mxu0 %v265
      %305 = vmatpush.bf16.msra.mxu0 %v264
      %306 = vmatpush.bf16.msra.mxu0 %v263
      %307 = vmatpush.bf16.msra.mxu0 %v262
      %308 = vmatmul.bf16.gmra.mxu0 %v273
      %v309 = vpop.f32.mrf.mxu0
      %v310 = vadd.f32 %v202, %v309
      %v311 = vpop.f32.mrf.mxu0
      %v312 = vadd.f32 %v202, %v311
      %313 = vmatmul.bf16.gmra.mxu0 %v276
      %v314 = vpop.f32.mrf.mxu0
      %v315 = vadd.f32 %v202, %v314
      %v316 = vpop.f32.mrf.mxu0
      %v317 = vadd.f32 %v202, %v316
      %318 = vmatmul.bf16.gmra.mxu0 %v279
      %v319 = vpop.f32.mrf.mxu0
      %v320 = vadd.f32 %v202, %v319
      %v321 = vpop.f32.mrf.mxu0
      %v322 = vadd.f32 %v202, %v321
      %323 = vmatmul.bf16.gmra.mxu0 %v282
      %v324 = vpop.f32.mrf.mxu0
      %v325 = vadd.f32 %v202, %v324
      %v326 = vpop.f32.mrf.mxu0
      %v327 = vadd.f32 %v202, %v326
      %328 = vmatmul.bf16.gmra.mxu0 %v285
      %v329 = vpop.f32.mrf.mxu0
      %v330 = vadd.f32 %v202, %v329
      %v331 = vpop.f32.mrf.mxu0
      %v332 = vadd.f32 %v202, %v331
      %333 = vmatmul.bf16.gmra.mxu0 %v288
      %v334 = vpop.f32.mrf.mxu0
      %v335 = vadd.f32 %v202, %v334
      %v336 = vpop.f32.mrf.mxu0
      %v337 = vadd.f32 %v202, %v336
      %338 = vmatmul.bf16.gmra.mxu0 %v291
      %v339 = vpop.f32.mrf.mxu0
      %v340 = vadd.f32 %v202, %v339
      %v341 = vpop.f32.mrf.mxu0
      %v342 = vadd.f32 %v202, %v341
      %343 = vmatmul.bf16.gmra.mxu0 %v294
      %v344 = vpop.f32.mrf.mxu0
      %v345 = vadd.f32 %v202, %v344
      %v346 = vpop.f32.mrf.mxu0
      %v347 = vadd.f32 %v202, %v346
      %348 = vdwg.mxu0
      %v349 = vmax.f32 %v310, 0.0
      %v350 = vmax.f32 %v312, 0.0
      %v351 = vmax.f32 %v315, 0.0
      %v352 = vmax.f32 %v317, 0.0
      %v353 = vmax.f32 %v320, 0.0
      %v354 = vmax.f32 %v322, 0.0
      %v355 = vmax.f32 %v325, 0.0
      %v356 = vmax.f32 %v327, 0.0
      %v357 = vmax.f32 %v330, 0.0
      %v358 = vmax.f32 %v332, 0.0
      %v359 = vmax.f32 %v335, 0.0
      %v360 = vmax.f32 %v337, 0.0
      %v361 = vmax.f32 %v340, 0.0
      %v362 = vmax.f32 %v342, 0.0
      %v363 = vmax.f32 %v345, 0.0
      %v364 = vmax.f32 %v347, 0.0
      %365 = vst [vmem:[%s172] sm:$0xff] %v349
      %366 = vst [vmem:[%s172 + $0x8] sm:$0xff] %v350
      %367 = vst [vmem:[%s172 + $0x10] sm:$0xff] %v351
      %368 = vst [vmem:[%s172 + $0x18] sm:$0xff] %v352
      %369 = vst [vmem:[%s172 + $0x20] sm:$0xff] %v353
      %370 = vst [vmem:[%s172 + $0x28] sm:$0xff] %v354
      %371 = vst [vmem:[%s172 + $0x30] sm:$0xff] %v355
      %372 = vst [vmem:[%s172 + $0x38] sm:$0xff] %v356
      %373 = vst [vmem:[%s172 + $0x40] sm:$0xff] %v357
      %374 = vst [vmem:[%s172 + $0x48] sm:$0xff] %v358
      %375 = vst [vmem:[%s172 + $0x50] sm:$0xff] %v359
      %376 = vst [vmem:[%s172 + $0x58] sm:$0xff] %v360
      %377 = vst [vmem:[%s172 + $0x60] sm:$0xff] %v361
      %378 = vst [vmem:[%s172 + $0x68] sm:$0xff] %v362
      %379 = vst [vmem:[%s172 + $0x70] sm:$0xff] %v363
      %380 = vst [vmem:[%s172 + $0x78] sm:$0xff] %v364
      %s381 = smul.u32 16, %s14
      %p382 = scmp.lt.s32.totalorder %s381, 31
      %s383 = scalar_select %p382, %s381, 31
      %s384 = smul.addr %s383, 8
      %s385 = scalar_lea.vmem %s3, %s384
      // Predicated region
      $region33: #{lift_splat_shoot_gpn.6} parent=31 // pred_check
        %p386 = pneg %p100
      $region34: #{lift_splat_shoot_gpn.6} parent=31 // pred_check_branch
        %388 = sbr.rel (%p386) target = $region36
      $region35: #{lift_splat_shoot_gpn.6} parent=31 // pred_region
        %s389 = smul.u32 16, %s14
      $region36: #{lift_splat_shoot_gpn.6} parent=31 // pred_fallthru
        _
    $region32: #{lift_splat_shoot_gpn.6} parent=5 // pred_fallthru
      _
    %p390 = scmp.le.s32.totalorder 2, %s9
    // Predicated region
    $region37: #{lift_splat_shoot_gpn.6} parent=5 // pred_check
      %p391 = pneg %p390
    $region38: #{lift_splat_shoot_gpn.6} parent=5 // pred_check_branch
      %393 = sbr.rel (%p391) target = $region40
    $region39: #{lift_splat_shoot_gpn.6} parent=5 // pred_region
      %s394 = ssub.s32 %s9, 2
      // Predicated region
      $region41: #{lift_splat_shoot_gpn.6} parent=39 // pred_check
        %p395 = pneg %p106
      $region42: #{lift_splat_shoot_gpn.6} parent=39 // pred_check_branch
        %397 = sbr.rel (%p395) target = $region44
      $region43: #{lift_splat_shoot_gpn.6} parent=39 // pred_region
        %s398 = smul.u32 16, %s15
        %p399 = scmp.lt.s32.totalorder %s398, 31
        %s400 = scalar_select %p399, %s398, 31
        %s401 = smul.addr %s400, 8
        %s402 = scalar_lea.vmem %s3, %s401
      $region44: #{lift_splat_shoot_gpn.6} parent=39 // pred_fallthru
        _
    $region40: #{lift_splat_shoot_gpn.6} parent=5 // pred_fallthru
      _
  $region6: #{lift_splat_shoot_gpn.6} parent=0 // loop_footer
    %s13 = sadd.s32 1, %s9
  $region7: #{lift_splat_shoot_gpn.6} parent=0 // loop_footer_branch
    %8 = sbr.rel target = $region3
  $region8: #{lift_splat_shoot_gpn.6} parent=0 // loop_exit
    _

// kernel: lift_splat_shoot_gpn.7
$region0: #{lift_splat_shoot_gpn.7}
  #allocation0 [shape = 'u32[]', space=smem, size = 0x4, offset = 0x4, fixed_abs, tag = 'smem constant byte address 0x4 - core index']
  #allocation1 [shape = 'u32[72,128]{1,0:T(1,128)}', space=vmem, size = 0x9000, scoped, tag = 'internal scratch']
  %s0 = inlined_call_operand.vmem [shape: bf16[256,288], index: 0, kind: input, shape index: {}]
  %s1 = inlined_call_operand.vmem [shape: bf16[288,128], index: 1, kind: input, shape index: {}]
  %s2 = inlined_call_operand.vmem [shape: f32[1,128], index: 2, kind: input, shape index: {}]
  %s3 = inlined_call_operand.vmem [shape: f32[256,128], index: 3, kind: output, shape index: {}]
  %s4 = sld [smem:[#allocation0]]
  $region45: #{lift_splat_shoot_gpn.7} parent=0
    _
  %s6 = ssub.s32 1, %s4
  %s7 = scalar_select 0, %s6, %s4
  loop: start=0, step=1, limit=4
  $region2: #{lift_splat_shoot_gpn.7} parent=0 // loop_pre_header
    _
  $region3: #{lift_splat_shoot_gpn.7} parent=0 // loop_header
    %s9 = sphi 0, %s13
    %p10 = scmp.ge.s32.totalorder %s9, 4
    %s19 = sphi 0, %s21
    %s22 = sphi 0, %s19
    %s23 = sphi 0, %s22
    %s39 = sphi 0, %s23
    %s43 = sphi 0, %s43
    %s45 = sphi 0, %s43
    %s46 = sphi 0, %s45
    %s60 = sphi 0, %s46
    %s64 = sphi 0, %s64
    %s66 = sphi 0, %s64
    %s67 = sphi 0, %s66
    %s81 = sphi 0, %s67
    %s87 = sphi 0, %s89
    %s90 = sphi 0, %s87
    %s91 = sphi 0, %s90
    %s107 = sphi 0, %s91
  $region4: #{lift_splat_shoot_gpn.7} parent=0 // loop_header_branch
    %12 = sbr.rel (%p10) target = $region8
  $region5: #{lift_splat_shoot_gpn.7} parent=0 // loop_body
    %s14 = ssub.s32 %s9, 1
    %s15 = ssub.s32 %s9, 2
    %s16 = sadd.s32 %s9, 1
    %s17 = ssub.s32 %s9, %s16
    %p18 = scmp.eq.s32.totalorder %s17, 0
    %s20 = sadd.s32 %s19, 1
    %s21 = scalar_select %p18, %s19, %s20
    %p24 = pneg %p18
    %p25 = scmp.eq.s32.totalorder %s9, 1
    %p26 = por %p24, %p25
    %p27 = scmp.ne.s32.totalorder %s19, %s22
    %p28 = scmp.eq.s32.totalorder %s9, 0
    %p29 = por %p27, %p28
    %p30 = scmp.ne.s32.totalorder %s19, %s22
    %p31 = scmp.eq.s32.totalorder %s14, 1
    %p32 = por %p30, %p31
    %p33 = scmp.ne.s32.totalorder %s22, %s23
    %p34 = scmp.eq.s32.totalorder %s14, 0
    %p35 = por %p33, %p34
    %p36 = scmp.ne.s32.totalorder %s22, %s23
    %p37 = scmp.eq.s32.totalorder %s15, 1
    %p38 = por %p36, %p37
    %p40 = scmp.ne.s32.totalorder %s23, %s39
    %p41 = scmp.eq.s32.totalorder %s15, 0
    %p42 = por %p40, %p41
    %s44 = sadd.s32 %s43, 1
    %p47 = scmp.eq.s32.totalorder %s9, 1
    %p48 = scmp.ne.s32.totalorder %s43, %s45
    %p49 = scmp.eq.s32.totalorder %s9, 0
    %p50 = por %p48, %p49
    %p51 = scmp.ne.s32.totalorder %s43, %s45
    %p52 = scmp.eq.s32.totalorder %s14, 1
    %p53 = por %p51, %p52
    %p54 = scmp.ne.s32.totalorder %s45, %s46
    %p55 = scmp.eq.s32.totalorder %s14, 0
    %p56 = por %p54, %p55
    %p57 = scmp.ne.s32.totalorder %s45, %s46
    %p58 = scmp.eq.s32.totalorder %s15, 1
    %p59 = por %p57, %p58
    %p61 = scmp.ne.s32.totalorder %s46, %s60
    %p62 = scmp.eq.s32.totalorder %s15, 0
    %p63 = por %p61, %p62
    %s65 = sadd.s32 %s64, 1
    %p68 = scmp.eq.s32.totalorder %s9, 1
    %p69 = scmp.ne.s32.totalorder %s64, %s66
    %p70 = scmp.eq.s32.totalorder %s9, 0
    %p71 = por %p69, %p70
    %p72 = scmp.ne.s32.totalorder %s64, %s66
    %p73 = scmp.eq.s32.totalorder %s14, 1
    %p74 = por %p72, %p73
    %p75 = scmp.ne.s32.totalorder %s66, %s67
    %p76 = scmp.eq.s32.totalorder %s14, 0
    %p77 = por %p75, %p76
    %p78 = scmp.ne.s32.totalorder %s66, %s67
    %p79 = scmp.eq.s32.totalorder %s15, 1
    %p80 = por %p78, %p79
    %p82 = scmp.ne.s32.totalorder %s67, %s81
    %p83 = scmp.eq.s32.totalorder %s15, 0
    %p84 = por %p82, %p83
    %s85 = ssub.s32 %s9, %s16
    %p86 = scmp.eq.s32.totalorder %s85, 0
    %s88 = sadd.s32 %s87, 1
    %s89 = scalar_select %p86, %s87, %s88
    %p92 = pneg %p86
    %p93 = scmp.eq.s32.totalorder %s9, 1
    %p94 = por %p92, %p93
    %p95 = scmp.ne.s32.totalorder %s87, %s90
    %p96 = scmp.eq.s32.totalorder %s9, 0
    %p97 = por %p95, %p96
    %p98 = scmp.ne.s32.totalorder %s87, %s90
    %p99 = scmp.eq.s32.totalorder %s14, 1
    %p100 = por %p98, %p99
    %p101 = scmp.ne.s32.totalorder %s90, %s91
    %p102 = scmp.eq.s32.totalorder %s14, 0
    %p103 = por %p101, %p102
    %p104 = scmp.ne.s32.totalorder %s90, %s91
    %p105 = scmp.eq.s32.totalorder %s15, 1
    %p106 = por %p104, %p105
    %p108 = scmp.ne.s32.totalorder %s91, %s107
    %p109 = scmp.eq.s32.totalorder %s15, 0
    %p110 = por %p108, %p109
    %p111 = scmp.le.s32.totalorder 1, %s9
    %p112 = scmp.lt.s32.totalorder %s9, 3
    %p113 = pnand %p111, %p112
    %p114 = pneg %p113
    // Predicated region
    $region9: #{lift_splat_shoot_gpn.7} parent=5 // pred_check
      _
    $region10: #{lift_splat_shoot_gpn.7} parent=5 // pred_check_branch
      %116 = sbr.rel (%p113) target = $region12
    $region11: #{lift_splat_shoot_gpn.7} parent=5 // pred_region
      %s117 = ssub.s32 %s9, 1
      // Predicated region
      $region13: #{lift_splat_shoot_gpn.7} parent=11 // pred_check
        %p118 = pneg %p56
      $region14: #{lift_splat_shoot_gpn.7} parent=11 // pred_check_branch
        %120 = sbr.rel (%p118) target = $region16
      $region15: #{lift_splat_shoot_gpn.7} parent=11 // pred_region
        _
      $region16: #{lift_splat_shoot_gpn.7} parent=11 // pred_fallthru
        _
      // Predicated region
      $region17: #{lift_splat_shoot_gpn.7} parent=11 // pred_check
        %p121 = pneg %p77
      $region18: #{lift_splat_shoot_gpn.7} parent=11 // pred_check_branch
        %123 = sbr.rel (%p121) target = $region20
      $region19: #{lift_splat_shoot_gpn.7} parent=11 // pred_region
        _
      $region20: #{lift_splat_shoot_gpn.7} parent=11 // pred_fallthru
        _
    $region12: #{lift_splat_shoot_gpn.7} parent=5 // pred_fallthru
      _
    %p124 = scmp.lt.s32.totalorder %s9, 2
    // Predicated region
    $region21: #{lift_splat_shoot_gpn.7} parent=5 // pred_check
      %p125 = pneg %p124
    $region22: #{lift_splat_shoot_gpn.7} parent=5 // pred_check_branch
      %127 = sbr.rel (%p125) target = $region24
    $region23: #{lift_splat_shoot_gpn.7} parent=5 // pred_region
      // Predicated region
      $region25: #{lift_splat_shoot_gpn.7} parent=23 // pred_check
        %p128 = pneg %p29
      $region26: #{lift_splat_shoot_gpn.7} parent=23 // pred_check_branch
        %130 = sbr.rel (%p128) target = $region28
      $region27: #{lift_splat_shoot_gpn.7} parent=23 // pred_region
        %s131 = smul.u32 16, %s9
        %p132 = scmp.lt.s32.totalorder %s131, 31
        %s133 = scalar_select %p132, %s131, 31
        %s134 = smul.addr %s133, 3
        %s135 = smul.addr %s134, 4
        %s136 = scalar_lea.vmem %s0, %s135
        %s137 = smul.u32 16, %s9
      $region28: #{lift_splat_shoot_gpn.7} parent=23 // pred_fallthru
        _
    $region24: #{lift_splat_shoot_gpn.7} parent=5 // pred_fallthru
      _
    %p138 = scmp.le.s32.totalorder 1, %s9
    %p139 = scmp.lt.s32.totalorder %s9, 3
    %p140 = pnand %p138, %p139
    %p141 = pneg %p140
    // Predicated region
    $region29: #{lift_splat_shoot_gpn.7} parent=5 // pred_check
      _
    $region30: #{lift_splat_shoot_gpn.7} parent=5 // pred_check_branch
      %143 = sbr.rel (%p140) target = $region32
    $region31: #{lift_splat_shoot_gpn.7} parent=5 // pred_region
      %s144 = ssub.s32 %s9, 1
      %s145 = smul.u32 16, %s14
      %p146 = scmp.lt.s32.totalorder %s145, 31
      %s147 = scalar_select %p146, %s145, 31
      %s148 = smul.addr %s147, 3
      %s149 = smul.addr %s148, 4
      %s150 = scalar_lea.vmem %s0, %s149
      %p151 = pneg %p35
      %p152 = pneg %p32
      %p153 = pneg %p56
      %p154 = pneg %p53
      %p155 = pneg %p77
      %p156 = pneg %p74
      %p157 = pneg %p103
      %p158 = pneg %p100
      %s159 = smul.u32 16, %s14
      %p160 = scmp.lt.s32.totalorder %s159, 31
      %s161 = scalar_select %p160, %s159, 31
      %s162 = smul.addr %s161, 8
      %s163 = scalar_lea.vmem %s3, %s162
      %s164 = smul.u32 16, %s14
      %p165 = scmp.lt.s32.totalorder %s164, 31
      %s166 = scalar_select %p165, %s164, 31
      %s167 = smul.addr %s166, 3
      %s168 = smul.addr %s167, 4
      %s169 = scalar_lea.vmem %s0, %s168
      %s170 = smul.u32 16, %s14
      %s171 = smul.u32 16, %s14
      %p172 = scmp.lt.s32.totalorder %s171, 31
      %s173 = scalar_select %p172, %s171, 31
      %s174 = smul.addr %s173, 8
      %s175 = scalar_lea.vmem %s3, %s174
      %s176 = smul.u32 16, %s14
      %v178 = vld [vmem:[%s169] sm:$0xff]
      %v179 = vld [vmem:[%s169 + $0x8] sm:$0xf]
      %v180 = vld [vmem:[%s169 + $0xc] sm:$0xff]
      %v181 = vld [vmem:[%s169 + $0x14] sm:$0xf]
      %v182 = vld [vmem:[%s169 + $0x18] sm:$0xff]
      %v183 = vld [vmem:[%s169 + $0x20] sm:$0xf]
      %v184 = vld [vmem:[%s169 + $0x24] sm:$0xff]
      %v185 = vld [vmem:[%s169 + $0x2c] sm:$0xf]
      %v186 = vld [vmem:[%s169 + $0x30] sm:$0xff]
      %v187 = vld [vmem:[%s169 + $0x38] sm:$0xf]
      %v188 = vld [vmem:[%s169 + $0x3c] sm:$0xff]
      %v189 = vld [vmem:[%s169 + $0x44] sm:$0xf]
      %v190 = vld [vmem:[%s169 + $0x48] sm:$0xff]
      %v191 = vld [vmem:[%s169 + $0x50] sm:$0xf]
      %v192 = vld [vmem:[%s169 + $0x54] sm:$0xff]
      %v193 = vld [vmem:[%s169 + $0x5c] sm:$0xf]
      %v194 = vld [vmem:[%s169 + $0x60] sm:$0xff]
      %v195 = vld [vmem:[%s169 + $0x68] sm:$0xf]
      %v196 = vld [vmem:[%s169 + $0x6c] sm:$0xff]
      %v197 = vld [vmem:[%s169 + $0x74] sm:$0xf]
      %v198 = vld [vmem:[%s169 + $0x78] sm:$0xff]
      %v199 = vld [vmem:[%s169 + $0x80] sm:$0xf]
      %v200 = vld [vmem:[%s169 + $0x84] sm:$0xff]
      %v201 = vld [vmem:[%s169 + $0x8c] sm:$0xf]
      %v202 = vld [vmem:[%s169 + $0x90] sm:$0xff]
      %v203 = vld [vmem:[%s169 + $0x98] sm:$0xf]
      %v204 = vld [vmem:[%s169 + $0x9c] sm:$0xff]
      %v205 = vld [vmem:[%s169 + $0xa4] sm:$0xf]
      %v206 = vld [vmem:[%s169 + $0xa8] sm:$0xff]
      %v207 = vld [vmem:[%s169 + $0xb0] sm:$0xf]
      %v208 = vld [vmem:[%s169 + $0xb4] sm:$0xff]
      %v209 = vld [vmem:[%s169 + $0xbc] sm:$0xf]
      %v210 = vld [vmem:[%s1] sm:$0xf]
      %v211 = vld [vmem:[%s1 + $0x4] sm:$0xf]
      %v212 = vld [vmem:[%s1 + $0x8] sm:$0xf]
      %v213 = vld [vmem:[%s1 + $0xc] sm:$0xf]
      %v214 = vld [vmem:[%s1 + $0x10] sm:$0xf]
      %v215 = vld [vmem:[%s1 + $0x14] sm:$0xf]
      %v216 = vld [vmem:[%s1 + $0x18] sm:$0xf]
      %v217 = vld [vmem:[%s1 + $0x1c] sm:$0xf]
      %v218 = vld [vmem:[%s1 + $0x20] sm:$0xf]
      %v219 = vld [vmem:[%s1 + $0x24] sm:$0xf]
      %v220 = vld [vmem:[%s1 + $0x28] sm:$0xf]
      %v221 = vld [vmem:[%s1 + $0x2c] sm:$0xf]
      %v222 = vld [vmem:[%s1 + $0x30] sm:$0xf]
      %v223 = vld [vmem:[%s1 + $0x34] sm:$0xf]
      %v224 = vld [vmem:[%s1 + $0x38] sm:$0xf]
      %v225 = vld [vmem:[%s1 + $0x3c] sm:$0xf]
      %v226 = vld [vmem:[%s1 + $0x40] sm:$0xf]
      %v227 = vld [vmem:[%s1 + $0x44] sm:$0xf]
      %v228 = vld [vmem:[%s1 + $0x48] sm:$0xf]
      %v229 = vld [vmem:[%s1 + $0x4c] sm:$0xf]
      %v230 = vld [vmem:[%s1 + $0x50] sm:$0xf]
      %v231 = vld [vmem:[%s1 + $0x54] sm:$0xf]
      %v232 = vld [vmem:[%s1 + $0x58] sm:$0xf]
      %v233 = vld [vmem:[%s1 + $0x5c] sm:$0xf]
      %v234 = vld [vmem:[%s1 + $0x60] sm:$0xf]
      %v235 = vld [vmem:[%s1 + $0x64] sm:$0xf]
      %v236 = vld [vmem:[%s1 + $0x68] sm:$0xf]
      %v237 = vld [vmem:[%s1 + $0x6c] sm:$0xf]
      %v238 = vld [vmem:[%s1 + $0x70] sm:$0xf]
      %v239 = vld [vmem:[%s1 + $0x74] sm:$0xf]
      %v240 = vld [vmem:[%s1 + $0x78] sm:$0xf]
      %v241 = vld [vmem:[%s1 + $0x7c] sm:$0xf]
      %v242 = vld [vmem:[%s1 + $0x80] sm:$0xf]
      %v243 = vld [vmem:[%s1 + $0x84] sm:$0xf]
      %v244 = vld [vmem:[%s1 + $0x88] sm:$0xf]
      %v245 = vld [vmem:[%s1 + $0x8c] sm:$0xf]
      %v246 = vld [vmem:[%s2] sm:$0x1]
      %v248 = vperm.slane %v246, 0
      %v282 = vunpack.c.l.b16 %v178
      %v283 = vunpack.c.h.b16 %v178
      %v284 = vunpack.c.l.b16 %v179
      %v285 = vunpack.c.l.b16 %v180
      %v286 = vunpack.c.h.b16 %v180
      %v287 = vunpack.c.l.b16 %v181
      %v288 = vunpack.c.l.b16 %v182
      %v289 = vunpack.c.h.b16 %v182
      %v290 = vunpack.c.l.b16 %v183
      %v291 = vunpack.c.l.b16 %v184
      %v292 = vunpack.c.h.b16 %v184
      %v293 = vunpack.c.l.b16 %v185
      %v294 = vunpack.c.l.b16 %v186
      %v295 = vunpack.c.h.b16 %v186
      %v296 = vunpack.c.l.b16 %v187
      %v297 = vunpack.c.l.b16 %v188
      %v298 = vunpack.c.h.b16 %v188
      %v299 = vunpack.c.l.b16 %v189
      %v300 = vunpack.c.l.b16 %v190
      %v301 = vunpack.c.h.b16 %v190
      %v302 = vunpack.c.l.b16 %v191
      %v303 = vunpack.c.l.b16 %v192
      %v304 = vunpack.c.h.b16 %v192
      %v305 = vunpack.c.l.b16 %v193
      %v306 = vunpack.c.l.b16 %v194
      %v307 = vunpack.c.h.b16 %v194
      %v308 = vunpack.c.l.b16 %v195
      %v309 = vunpack.c.l.b16 %v196
      %v310 = vunpack.c.h.b16 %v196
      %v311 = vunpack.c.l.b16 %v197
      %v312 = vunpack.c.l.b16 %v198
      %v313 = vunpack.c.h.b16 %v198
      %v314 = vunpack.c.l.b16 %v199
      %v315 = vunpack.c.l.b16 %v200
      %v316 = vunpack.c.h.b16 %v200
      %v317 = vunpack.c.l.b16 %v201
      %v318 = vunpack.c.l.b16 %v202
      %v319 = vunpack.c.h.b16 %v202
      %v320 = vunpack.c.l.b16 %v203
      %v321 = vunpack.c.l.b16 %v204
      %v322 = vunpack.c.h.b16 %v204
      %v323 = vunpack.c.l.b16 %v205
      %v324 = vunpack.c.l.b16 %v206
      %v325 = vunpack.c.h.b16 %v206
      %v326 = vunpack.c.l.b16 %v207
      %v327 = vunpack.c.l.b16 %v208
      %v328 = vunpack.c.h.b16 %v208
      %v329 = vunpack.c.l.b16 %v209
      %v330 = vpack.c.b16 %v285, %v282
      %v331 = vpack.c.b16 %v286, %v283
      %v332 = vpack.c.b16 %v287, %v284
      %v333 = vpack.c.b16 %v291, %v288
      %v334 = vpack.c.b16 %v292, %v289
      %v335 = vpack.c.b16 %v293, %v290
      %v336 = vpack.c.b16 %v297, %v294
      %v337 = vpack.c.b16 %v298, %v295
      %v338 = vpack.c.b16 %v299, %v296
      %v339 = vpack.c.b16 %v303, %v300
      %v340 = vpack.c.b16 %v304, %v301
      %v341 = vpack.c.b16 %v305, %v302
      %v342 = vpack.c.b16 %v309, %v306
      %v343 = vpack.c.b16 %v310, %v307
      %v344 = vpack.c.b16 %v311, %v308
      %v345 = vpack.c.b16 %v315, %v312
      %v346 = vpack.c.b16 %v316, %v313
      %v347 = vpack.c.b16 %v317, %v314
      %v348 = vpack.c.b16 %v321, %v318
      %v349 = vpack.c.b16 %v322, %v319
      %v350 = vpack.c.b16 %v323, %v320
      %v351 = vpack.c.b16 %v327, %v324
      %v352 = vpack.c.b16 %v328, %v325
      %v353 = vpack.c.b16 %v329, %v326
      %v406 = vunpack.c.l.b16 %v210
      %v407 = vunpack.c.l.b16 %v211
      %v408 = vunpack.c.l.b16 %v212
      %v409 = vunpack.c.l.b16 %v213
      %v410 = vunpack.c.l.b16 %v214
      %v411 = vunpack.c.l.b16 %v215
      %v412 = vunpack.c.l.b16 %v216
      %v413 = vunpack.c.l.b16 %v217
      %v414 = vunpack.c.l.b16 %v218
      %v415 = vunpack.c.l.b16 %v219
      %v416 = vunpack.c.l.b16 %v220
      %v417 = vunpack.c.l.b16 %v221
      %v418 = vunpack.c.l.b16 %v222
      %v419 = vunpack.c.l.b16 %v223
      %v420 = vunpack.c.l.b16 %v224
      %v421 = vunpack.c.l.b16 %v225
      %v422 = vunpack.c.l.b16 %v226
      %v423 = vunpack.c.l.b16 %v227
      %v424 = vunpack.c.l.b16 %v228
      %v425 = vunpack.c.l.b16 %v229
      %v426 = vunpack.c.l.b16 %v230
      %v427 = vunpack.c.l.b16 %v231
      %v428 = vunpack.c.l.b16 %v232
      %v429 = vunpack.c.l.b16 %v233
      %v430 = vunpack.c.l.b16 %v234
      %v431 = vunpack.c.l.b16 %v235
      %v432 = vunpack.c.l.b16 %v236
      %v433 = vunpack.c.l.b16 %v237
      %v434 = vunpack.c.l.b16 %v238
      %v435 = vunpack.c.l.b16 %v239
      %v436 = vunpack.c.l.b16 %v240
      %v437 = vunpack.c.l.b16 %v241
      %v438 = vunpack.c.l.b16 %v242
      %v439 = vunpack.c.l.b16 %v243
      %v440 = vunpack.c.l.b16 %v244
      %v441 = vunpack.c.l.b16 %v245
      %v442 = vpack.c.b16 %v407, %v406
      %v443 = vpack.c.b16 %v409, %v408
      %v444 = vpack.c.b16 %v411, %v410
      %v445 = vpack.c.b16 %v413, %v412
      %v446 = vpack.c.b16 %v415, %v414
      %v447 = vpack.c.b16 %v417, %v416
      %v448 = vpack.c.b16 %v419, %v418
      %v449 = vpack.c.b16 %v421, %v420
      %v450 = vpack.c.b16 %v423, %v422
      %v451 = vpack.c.b16 %v425, %v424
      %v452 = vpack.c.b16 %v427, %v426
      %v453 = vpack.c.b16 %v429, %v428
      %v454 = vpack.c.b16 %v431, %v430
      %v455 = vpack.c.b16 %v433, %v432
      %v456 = vpack.c.b16 %v435, %v434
      %v457 = vpack.c.b16 %v437, %v436
      %v458 = vpack.c.b16 %v439, %v438
      %v459 = vpack.c.b16 %v441, %v440
      %vm478 = vcmask 261120
      %v480 = vsel %vm478, %v332, 0
      %v483 = vsel %vm478, %v335, 0
      %v486 = vsel %vm478, %v338, 0
      %v489 = vsel %vm478, %v341, 0
      %v492 = vsel %vm478, %v344, 0
      %v495 = vsel %vm478, %v347, 0
      %v498 = vsel %vm478, %v350, 0
      %v501 = vsel %vm478, %v353, 0
      %503 = vmatpush.bf16.msra.mxu0 %v449
      %504 = vmatpush.bf16.msra.mxu0 %v448
      %505 = vmatpush.bf16.msra.mxu0 %v447
      %506 = vmatpush.bf16.msra.mxu0 %v446
      %507 = vmatpush.bf16.msra.mxu0 %v445
      %508 = vmatpush.bf16.msra.mxu0 %v444
      %509 = vmatpush.bf16.msra.mxu0 %v443
      %510 = vmatpush.bf16.msra.mxu0 %v442
      %511 = vmatmul.bf16.gmra.mxu0 %v330
      %v512 = vpop.f32.mrf.mxu0
      %v513 = vadd.f32 %v248, %v512
      %v514 = vpop.f32.mrf.mxu0
      %v515 = vadd.f32 %v248, %v514
      %516 = vmatmul.bf16.gmra.mxu0 %v333
      %v517 = vpop.f32.mrf.mxu0
      %v518 = vadd.f32 %v248, %v517
      %v519 = vpop.f32.mrf.mxu0
      %v520 = vadd.f32 %v248, %v519
      %521 = vmatmul.bf16.gmra.mxu0 %v336
      %v522 = vpop.f32.mrf.mxu0
      %v523 = vadd.f32 %v248, %v522
      %v524 = vpop.f32.mrf.mxu0
      %v525 = vadd.f32 %v248, %v524
      %526 = vmatmul.bf16.gmra.mxu0 %v339
      %v527 = vpop.f32.mrf.mxu0
      %v528 = vadd.f32 %v248, %v527
      %v529 = vpop.f32.mrf.mxu0
      %v530 = vadd.f32 %v248, %v529
      %531 = vmatmul.bf16.gmra.mxu0 %v342
      %v532 = vpop.f32.mrf.mxu0
      %v533 = vadd.f32 %v248, %v532
      %v534 = vpop.f32.mrf.mxu0
      %v535 = vadd.f32 %v248, %v534
      %536 = vmatmul.bf16.gmra.mxu0 %v345
      %v537 = vpop.f32.mrf.mxu0
      %v538 = vadd.f32 %v248, %v537
      %v539 = vpop.f32.mrf.mxu0
      %v540 = vadd.f32 %v248, %v539
      %541 = vmatmul.bf16.gmra.mxu0 %v348
      %v542 = vpop.f32.mrf.mxu0
      %v543 = vadd.f32 %v248, %v542
      %v544 = vpop.f32.mrf.mxu0
      %v545 = vadd.f32 %v248, %v544
      %546 = vmatmul.bf16.gmra.mxu0 %v351
      %v547 = vpop.f32.mrf.mxu0
      %v548 = vadd.f32 %v248, %v547
      %v549 = vpop.f32.mrf.mxu0
      %v550 = vadd.f32 %v248, %v549
      %551 = vdwg.mxu0
      %552 = vmatpush.bf16.msra.mxu0 %v457
      %553 = vmatpush.bf16.msra.mxu0 %v456
      %554 = vmatpush.bf16.msra.mxu0 %v455
      %555 = vmatpush.bf16.msra.mxu0 %v454
      %556 = vmatpush.bf16.msra.mxu0 %v453
      %557 = vmatpush.bf16.msra.mxu0 %v452
      %558 = vmatpush.bf16.msra.mxu0 %v451
      %559 = vmatpush.bf16.msra.mxu0 %v450
      %560 = vmatmul.bf16.gmra.mxu0 %v331
      %v561 = vpop.f32.mrf.mxu0
      %v562 = vadd.f32 %v513, %v561
      %v563 = vpop.f32.mrf.mxu0
      %v564 = vadd.f32 %v515, %v563
      %565 = vmatmul.bf16.gmra.mxu0 %v334
      %v566 = vpop.f32.mrf.mxu0
      %v567 = vadd.f32 %v518, %v566
      %v568 = vpop.f32.mrf.mxu0
      %v569 = vadd.f32 %v520, %v568
      %570 = vmatmul.bf16.gmra.mxu0 %v337
      %v571 = vpop.f32.mrf.mxu0
      %v572 = vadd.f32 %v523, %v571
      %v573 = vpop.f32.mrf.mxu0
      %v574 = vadd.f32 %v525, %v573
      %575 = vmatmul.bf16.gmra.mxu0 %v340
      %v576 = vpop.f32.mrf.mxu0
      %v577 = vadd.f32 %v528, %v576
      %v578 = vpop.f32.mrf.mxu0
      %v579 = vadd.f32 %v530, %v578
      %580 = vmatmul.bf16.gmra.mxu0 %v343
      %v581 = vpop.f32.mrf.mxu0
      %v582 = vadd.f32 %v533, %v581
      %v583 = vpop.f32.mrf.mxu0
      %v584 = vadd.f32 %v535, %v583
      %585 = vmatmul.bf16.gmra.mxu0 %v346
      %v586 = vpop.f32.mrf.mxu0
      %v587 = vadd.f32 %v538, %v586
      %v588 = vpop.f32.mrf.mxu0
      %v589 = vadd.f32 %v540, %v588
      %590 = vmatmul.bf16.gmra.mxu0 %v349
      %v591 = vpop.f32.mrf.mxu0
      %v592 = vadd.f32 %v543, %v591
      %v593 = vpop.f32.mrf.mxu0
      %v594 = vadd.f32 %v545, %v593
      %595 = vmatmul.bf16.gmra.mxu0 %v352
      %v596 = vpop.f32.mrf.mxu0
      %v597 = vadd.f32 %v548, %v596
      %v598 = vpop.f32.mrf.mxu0
      %v599 = vadd.f32 %v550, %v598
      %600 = vdwg.mxu0
      %601 = vmatpush.bf16.msra.mxu0 0
      %602 = vmatpush.bf16.msra.mxu0 0
      %603 = vmatpush.bf16.msra.mxu0 0
      %604 = vmatpush.bf16.msra.mxu0 0
      %605 = vmatpush.bf16.msra.mxu0 0
      %606 = vmatpush.bf16.msra.mxu0 0
      %607 = vmatpush.bf16.msra.mxu0 %v459
      %608 = vmatpush.bf16.msra.mxu0 %v458
      %609 = vmatmul.bf16.gmra.mxu0 %v480
      %v610 = vpop.f32.mrf.mxu0
      %v611 = vadd.f32 %v562, %v610
      %v612 = vpop.f32.mrf.mxu0
      %v613 = vadd.f32 %v564, %v612
      %614 = vmatmul.bf16.gmra.mxu0 %v483
      %v615 = vpop.f32.mrf.mxu0
      %v616 = vadd.f32 %v567, %v615
      %v617 = vpop.f32.mrf.mxu0
      %v618 = vadd.f32 %v569, %v617
      %619 = vmatmul.bf16.gmra.mxu0 %v486
      %v620 = vpop.f32.mrf.mxu0
      %v621 = vadd.f32 %v572, %v620
      %v622 = vpop.f32.mrf.mxu0
      %v623 = vadd.f32 %v574, %v622
      %624 = vmatmul.bf16.gmra.mxu0 %v489
      %v625 = vpop.f32.mrf.mxu0
      %v626 = vadd.f32 %v577, %v625
      %v627 = vpop.f32.mrf.mxu0
      %v628 = vadd.f32 %v579, %v627
      %629 = vmatmul.bf16.gmra.mxu0 %v492
      %v630 = vpop.f32.mrf.mxu0
      %v631 = vadd.f32 %v582, %v630
      %v632 = vpop.f32.mrf.mxu0
      %v633 = vadd.f32 %v584, %v632
      %634 = vmatmul.bf16.gmra.mxu0 %v495
      %v635 = vpop.f32.mrf.mxu0
      %v636 = vadd.f32 %v587, %v635
      %v637 = vpop.f32.mrf.mxu0
      %v638 = vadd.f32 %v589, %v637
      %639 = vmatmul.bf16.gmra.mxu0 %v498
      %v640 = vpop.f32.mrf.mxu0
      %v641 = vadd.f32 %v592, %v640
      %v642 = vpop.f32.mrf.mxu0
      %v643 = vadd.f32 %v594, %v642
      %644 = vmatmul.bf16.gmra.mxu0 %v501
      %v645 = vpop.f32.mrf.mxu0
      %v646 = vadd.f32 %v597, %v645
      %v647 = vpop.f32.mrf.mxu0
      %v648 = vadd.f32 %v599, %v647
      %649 = vdwg.mxu0
      %v650 = vmax.f32 %v611, 0.0
      %v651 = vmax.f32 %v613, 0.0
      %v652 = vmax.f32 %v616, 0.0
      %v653 = vmax.f32 %v618, 0.0
      %v654 = vmax.f32 %v621, 0.0
      %v655 = vmax.f32 %v623, 0.0
      %v656 = vmax.f32 %v626, 0.0
      %v657 = vmax.f32 %v628, 0.0
      %v658 = vmax.f32 %v631, 0.0
      %v659 = vmax.f32 %v633, 0.0
      %v660 = vmax.f32 %v636, 0.0
      %v661 = vmax.f32 %v638, 0.0
      %v662 = vmax.f32 %v641, 0.0
      %v663 = vmax.f32 %v643, 0.0
      %v664 = vmax.f32 %v646, 0.0
      %v665 = vmax.f32 %v648, 0.0
      %666 = vst [vmem:[%s175] sm:$0xff] %v650
      %667 = vst [vmem:[%s175 + $0x8] sm:$0xff] %v651
      %668 = vst [vmem:[%s175 + $0x10] sm:$0xff] %v652
      %669 = vst [vmem:[%s175 + $0x18] sm:$0xff] %v653
      %670 = vst [vmem:[%s175 + $0x20] sm:$0xff] %v654
      %671 = vst [vmem:[%s175 + $0x28] sm:$0xff] %v655
      %672 = vst [vmem:[%s175 + $0x30] sm:$0xff] %v656
      %673 = vst [vmem:[%s175 + $0x38] sm:$0xff] %v657
      %674 = vst [vmem:[%s175 + $0x40] sm:$0xff] %v658
      %675 = vst [vmem:[%s175 + $0x48] sm:$0xff] %v659
      %676 = vst [vmem:[%s175 + $0x50] sm:$0xff] %v660
      %677 = vst [vmem:[%s175 + $0x58] sm:$0xff] %v661
      %678 = vst [vmem:[%s175 + $0x60] sm:$0xff] %v662
      %679 = vst [vmem:[%s175 + $0x68] sm:$0xff] %v663
      %680 = vst [vmem:[%s175 + $0x70] sm:$0xff] %v664
      %681 = vst [vmem:[%s175 + $0x78] sm:$0xff] %v665
      %s682 = smul.u32 16, %s14
      %p683 = scmp.lt.s32.totalorder %s682, 31
      %s684 = scalar_select %p683, %s682, 31
      %s685 = smul.addr %s684, 8
      %s686 = scalar_lea.vmem %s3, %s685
      // Predicated region
      $region33: #{lift_splat_shoot_gpn.7} parent=31 // pred_check
        %p687 = pneg %p100
      $region34: #{lift_splat_shoot_gpn.7} parent=31 // pred_check_branch
        %689 = sbr.rel (%p687) target = $region36
      $region35: #{lift_splat_shoot_gpn.7} parent=31 // pred_region
        %s690 = smul.u32 16, %s14
      $region36: #{lift_splat_shoot_gpn.7} parent=31 // pred_fallthru
        _
    $region32: #{lift_splat_shoot_gpn.7} parent=5 // pred_fallthru
      _
    %p691 = scmp.le.s32.totalorder 2, %s9
    // Predicated region
    $region37: #{lift_splat_shoot_gpn.7} parent=5 // pred_check
      %p692 = pneg %p691
    $region38: #{lift_splat_shoot_gpn.7} parent=5 // pred_check_branch
      %694 = sbr.rel (%p692) target = $region40
    $region39: #{lift_splat_shoot_gpn.7} parent=5 // pred_region
      %s695 = ssub.s32 %s9, 2
      // Predicated region
      $region41: #{lift_splat_shoot_gpn.7} parent=39 // pred_check
        %p696 = pneg %p106
      $region42: #{lift_splat_shoot_gpn.7} parent=39 // pred_check_branch
        %698 = sbr.rel (%p696) target = $region44
      $region43: #{lift_splat_shoot_gpn.7} parent=39 // pred_region
        %s699 = smul.u32 16, %s15
        %p700 = scmp.lt.s32.totalorder %s699, 31
        %s701 = scalar_select %p700, %s699, 31
        %s702 = smul.addr %s701, 8
        %s703 = scalar_lea.vmem %s3, %s702
      $region44: #{lift_splat_shoot_gpn.7} parent=39 // pred_fallthru
        _
    $region40: #{lift_splat_shoot_gpn.7} parent=5 // pred_fallthru
      _
  $region6: #{lift_splat_shoot_gpn.7} parent=0 // loop_footer
    %s13 = sadd.s32 1, %s9
  $region7: #{lift_splat_shoot_gpn.7} parent=0 // loop_footer_branch
    %8 = sbr.rel target = $region3
  $region8: #{lift_splat_shoot_gpn.7} parent=0 // loop_exit
    _

// kernel: lift_splat_shoot_gpn.8
$region0: #{lift_splat_shoot_gpn.8}
  #allocation0 [shape = 'u32[]', space=smem, size = 0x4, offset = 0x4, fixed_abs, tag = 'smem constant byte address 0x4 - core index']
  #allocation1 [shape = 'u32[72,128]{1,0:T(1,128)}', space=vmem, size = 0x9000, scoped, tag = 'internal scratch']
  %s0 = inlined_call_operand.vmem [shape: bf16[256,288], index: 0, kind: input, shape index: {}]
  %s1 = inlined_call_operand.vmem [shape: bf16[288,16], index: 1, kind: input, shape index: {}]
  %s2 = inlined_call_operand.vmem [shape: bf16[16,128], index: 2, kind: input, shape index: {}]
  %s3 = inlined_call_operand.vmem [shape: f32[1,128], index: 3, kind: input, shape index: {}]
  %s4 = inlined_call_operand.vmem [shape: f32[256,128], index: 4, kind: output, shape index: {}]
  %s5 = sld [smem:[#allocation0]]
  $region49: #{lift_splat_shoot_gpn.8} parent=0
    _
  %s7 = ssub.s32 1, %s5
  %s8 = scalar_select 0, %s7, %s5
  loop: start=0, step=1, limit=4
  $region2: #{lift_splat_shoot_gpn.8} parent=0 // loop_pre_header
    _
  $region3: #{lift_splat_shoot_gpn.8} parent=0 // loop_header
    %s10 = sphi 0, %s14
    %p11 = scmp.ge.s32.totalorder %s10, 4
    %s20 = sphi 0, %s22
    %s23 = sphi 0, %s20
    %s24 = sphi 0, %s23
    %s40 = sphi 0, %s24
    %s44 = sphi 0, %s44
    %s46 = sphi 0, %s44
    %s47 = sphi 0, %s46
    %s61 = sphi 0, %s47
    %s65 = sphi 0, %s65
    %s67 = sphi 0, %s65
    %s68 = sphi 0, %s67
    %s82 = sphi 0, %s68
    %s86 = sphi 0, %s86
    %s88 = sphi 0, %s86
    %s89 = sphi 0, %s88
    %s103 = sphi 0, %s89
    %s109 = sphi 0, %s111
    %s112 = sphi 0, %s109
    %s113 = sphi 0, %s112
    %s129 = sphi 0, %s113
  $region4: #{lift_splat_shoot_gpn.8} parent=0 // loop_header_branch
    %13 = sbr.rel (%p11) target = $region8
  $region5: #{lift_splat_shoot_gpn.8} parent=0 // loop_body
    %s15 = ssub.s32 %s10, 1
    %s16 = ssub.s32 %s10, 2
    %s17 = sadd.s32 %s10, 1
    %s18 = ssub.s32 %s10, %s17
    %p19 = scmp.eq.s32.totalorder %s18, 0
    %s21 = sadd.s32 %s20, 1
    %s22 = scalar_select %p19, %s20, %s21
    %p25 = pneg %p19
    %p26 = scmp.eq.s32.totalorder %s10, 1
    %p27 = por %p25, %p26
    %p28 = scmp.ne.s32.totalorder %s20, %s23
    %p29 = scmp.eq.s32.totalorder %s10, 0
    %p30 = por %p28, %p29
    %p31 = scmp.ne.s32.totalorder %s20, %s23
    %p32 = scmp.eq.s32.totalorder %s15, 1
    %p33 = por %p31, %p32
    %p34 = scmp.ne.s32.totalorder %s23, %s24
    %p35 = scmp.eq.s32.totalorder %s15, 0
    %p36 = por %p34, %p35
    %p37 = scmp.ne.s32.totalorder %s23, %s24
    %p38 = scmp.eq.s32.totalorder %s16, 1
    %p39 = por %p37, %p38
    %p41 = scmp.ne.s32.totalorder %s24, %s40
    %p42 = scmp.eq.s32.totalorder %s16, 0
    %p43 = por %p41, %p42
    %s45 = sadd.s32 %s44, 1
    %p48 = scmp.eq.s32.totalorder %s10, 1
    %p49 = scmp.ne.s32.totalorder %s44, %s46
    %p50 = scmp.eq.s32.totalorder %s10, 0
    %p51 = por %p49, %p50
    %p52 = scmp.ne.s32.totalorder %s44, %s46
    %p53 = scmp.eq.s32.totalorder %s15, 1
    %p54 = por %p52, %p53
    %p55 = scmp.ne.s32.totalorder %s46, %s47
    %p56 = scmp.eq.s32.totalorder %s15, 0
    %p57 = por %p55, %p56
    %p58 = scmp.ne.s32.totalorder %s46, %s47
    %p59 = scmp.eq.s32.totalorder %s16, 1
    %p60 = por %p58, %p59
    %p62 = scmp.ne.s32.totalorder %s47, %s61
    %p63 = scmp.eq.s32.totalorder %s16, 0
    %p64 = por %p62, %p63
    %s66 = sadd.s32 %s65, 1
    %p69 = scmp.eq.s32.totalorder %s10, 1
    %p70 = scmp.ne.s32.totalorder %s65, %s67
    %p71 = scmp.eq.s32.totalorder %s10, 0
    %p72 = por %p70, %p71
    %p73 = scmp.ne.s32.totalorder %s65, %s67
    %p74 = scmp.eq.s32.totalorder %s15, 1
    %p75 = por %p73, %p74
    %p76 = scmp.ne.s32.totalorder %s67, %s68
    %p77 = scmp.eq.s32.totalorder %s15, 0
    %p78 = por %p76, %p77
    %p79 = scmp.ne.s32.totalorder %s67, %s68
    %p80 = scmp.eq.s32.totalorder %s16, 1
    %p81 = por %p79, %p80
    %p83 = scmp.ne.s32.totalorder %s68, %s82
    %p84 = scmp.eq.s32.totalorder %s16, 0
    %p85 = por %p83, %p84
    %s87 = sadd.s32 %s86, 1
    %p90 = scmp.eq.s32.totalorder %s10, 1
    %p91 = scmp.ne.s32.totalorder %s86, %s88
    %p92 = scmp.eq.s32.totalorder %s10, 0
    %p93 = por %p91, %p92
    %p94 = scmp.ne.s32.totalorder %s86, %s88
    %p95 = scmp.eq.s32.totalorder %s15, 1
    %p96 = por %p94, %p95
    %p97 = scmp.ne.s32.totalorder %s88, %s89
    %p98 = scmp.eq.s32.totalorder %s15, 0
    %p99 = por %p97, %p98
    %p100 = scmp.ne.s32.totalorder %s88, %s89
    %p101 = scmp.eq.s32.totalorder %s16, 1
    %p102 = por %p100, %p101
    %p104 = scmp.ne.s32.totalorder %s89, %s103
    %p105 = scmp.eq.s32.totalorder %s16, 0
    %p106 = por %p104, %p105
    %s107 = ssub.s32 %s10, %s17
    %p108 = scmp.eq.s32.totalorder %s107, 0
    %s110 = sadd.s32 %s109, 1
    %s111 = scalar_select %p108, %s109, %s110
    %p114 = pneg %p108
    %p115 = scmp.eq.s32.totalorder %s10, 1
    %p116 = por %p114, %p115
    %p117 = scmp.ne.s32.totalorder %s109, %s112
    %p118 = scmp.eq.s32.totalorder %s10, 0
    %p119 = por %p117, %p118
    %p120 = scmp.ne.s32.totalorder %s109, %s112
    %p121 = scmp.eq.s32.totalorder %s15, 1
    %p122 = por %p120, %p121
    %p123 = scmp.ne.s32.totalorder %s112, %s113
    %p124 = scmp.eq.s32.totalorder %s15, 0
    %p125 = por %p123, %p124
    %p126 = scmp.ne.s32.totalorder %s112, %s113
    %p127 = scmp.eq.s32.totalorder %s16, 1
    %p128 = por %p126, %p127
    %p130 = scmp.ne.s32.totalorder %s113, %s129
    %p131 = scmp.eq.s32.totalorder %s16, 0
    %p132 = por %p130, %p131
    %p133 = scmp.le.s32.totalorder 1, %s10
    %p134 = scmp.lt.s32.totalorder %s10, 3
    %p135 = pnand %p133, %p134
    %p136 = pneg %p135
    // Predicated region
    $region9: #{lift_splat_shoot_gpn.8} parent=5 // pred_check
      _
    $region10: #{lift_splat_shoot_gpn.8} parent=5 // pred_check_branch
      %138 = sbr.rel (%p135) target = $region12
    $region11: #{lift_splat_shoot_gpn.8} parent=5 // pred_region
      %s139 = ssub.s32 %s10, 1
      // Predicated region
      $region13: #{lift_splat_shoot_gpn.8} parent=11 // pred_check
        %p140 = pneg %p57
      $region14: #{lift_splat_shoot_gpn.8} parent=11 // pred_check_branch
        %142 = sbr.rel (%p140) target = $region16
      $region15: #{lift_splat_shoot_gpn.8} parent=11 // pred_region
        _
      $region16: #{lift_splat_shoot_gpn.8} parent=11 // pred_fallthru
        _
      // Predicated region
      $region17: #{lift_splat_shoot_gpn.8} parent=11 // pred_check
        %p143 = pneg %p78
      $region18: #{lift_splat_shoot_gpn.8} parent=11 // pred_check_branch
        %145 = sbr.rel (%p143) target = $region20
      $region19: #{lift_splat_shoot_gpn.8} parent=11 // pred_region
        _
      $region20: #{lift_splat_shoot_gpn.8} parent=11 // pred_fallthru
        _
      // Predicated region
      $region21: #{lift_splat_shoot_gpn.8} parent=11 // pred_check
        %p146 = pneg %p99
      $region22: #{lift_splat_shoot_gpn.8} parent=11 // pred_check_branch
        %148 = sbr.rel (%p146) target = $region24
      $region23: #{lift_splat_shoot_gpn.8} parent=11 // pred_region
        _
      $region24: #{lift_splat_shoot_gpn.8} parent=11 // pred_fallthru
        _
    $region12: #{lift_splat_shoot_gpn.8} parent=5 // pred_fallthru
      _
    %p149 = scmp.lt.s32.totalorder %s10, 2
    // Predicated region
    $region25: #{lift_splat_shoot_gpn.8} parent=5 // pred_check
      %p150 = pneg %p149
    $region26: #{lift_splat_shoot_gpn.8} parent=5 // pred_check_branch
      %152 = sbr.rel (%p150) target = $region28
    $region27: #{lift_splat_shoot_gpn.8} parent=5 // pred_region
      // Predicated region
      $region29: #{lift_splat_shoot_gpn.8} parent=27 // pred_check
        %p153 = pneg %p30
      $region30: #{lift_splat_shoot_gpn.8} parent=27 // pred_check_branch
        %155 = sbr.rel (%p153) target = $region32
      $region31: #{lift_splat_shoot_gpn.8} parent=27 // pred_region
        %s156 = smul.u32 16, %s10
        %p157 = scmp.lt.s32.totalorder %s156, 31
        %s158 = scalar_select %p157, %s156, 31
        %s159 = smul.addr %s158, 3
        %s160 = smul.addr %s159, 4
        %s161 = scalar_lea.vmem %s0, %s160
        %s162 = smul.u32 16, %s10
      $region32: #{lift_splat_shoot_gpn.8} parent=27 // pred_fallthru
        _
    $region28: #{lift_splat_shoot_gpn.8} parent=5 // pred_fallthru
      _
    %p163 = scmp.le.s32.totalorder 1, %s10
    %p164 = scmp.lt.s32.totalorder %s10, 3
    %p165 = pnand %p163, %p164
    %p166 = pneg %p165
    // Predicated region
    $region33: #{lift_splat_shoot_gpn.8} parent=5 // pred_check
      _
    $region34: #{lift_splat_shoot_gpn.8} parent=5 // pred_check_branch
      %168 = sbr.rel (%p165) target = $region36
    $region35: #{lift_splat_shoot_gpn.8} parent=5 // pred_region
      %s169 = ssub.s32 %s10, 1
      %s170 = smul.u32 16, %s15
      %p171 = scmp.lt.s32.totalorder %s170, 31
      %s172 = scalar_select %p171, %s170, 31
      %s173 = smul.addr %s172, 3
      %s174 = smul.addr %s173, 4
      %s175 = scalar_lea.vmem %s0, %s174
      %p176 = pneg %p36
      %p177 = pneg %p33
      %p178 = pneg %p57
      %p179 = pneg %p54
      %p180 = pneg %p78
      %p181 = pneg %p75
      %p182 = pneg %p99
      %p183 = pneg %p96
      %p184 = pneg %p125
      %p185 = pneg %p122
      %s186 = smul.u32 16, %s15
      %p187 = scmp.lt.s32.totalorder %s186, 31
      %s188 = scalar_select %p187, %s186, 31
      %s189 = smul.addr %s188, 8
      %s190 = scalar_lea.vmem %s4, %s189
      %s191 = smul.u32 16, %s15
      %p192 = scmp.lt.s32.totalorder %s191, 31
      %s193 = scalar_select %p192, %s191, 31
      %s194 = smul.addr %s193, 3
      %s195 = smul.addr %s194, 4
      %s196 = scalar_lea.vmem %s0, %s195
      %s197 = smul.u32 16, %s15
      %s198 = smul.u32 16, %s15
      %p199 = scmp.lt.s32.totalorder %s198, 31
      %s200 = scalar_select %p199, %s198, 31
      %s201 = smul.addr %s200, 8
      %s202 = scalar_lea.vmem %s4, %s201
      %s203 = smul.u32 16, %s15
      %v205 = vld [vmem:[%s196] sm:$0xff]
      %v206 = vld [vmem:[%s196 + $0x8] sm:$0xf]
      %v207 = vld [vmem:[%s196 + $0xc] sm:$0xff]
      %v208 = vld [vmem:[%s196 + $0x14] sm:$0xf]
      %v209 = vld [vmem:[%s196 + $0x18] sm:$0xff]
      %v210 = vld [vmem:[%s196 + $0x20] sm:$0xf]
      %v211 = vld [vmem:[%s196 + $0x24] sm:$0xff]
      %v212 = vld [vmem:[%s196 + $0x2c] sm:$0xf]
      %v213 = vld [vmem:[%s196 + $0x30] sm:$0xff]
      %v214 = vld [vmem:[%s196 + $0x38] sm:$0xf]
      %v215 = vld [vmem:[%s196 + $0x3c] sm:$0xff]
      %v216 = vld [vmem:[%s196 + $0x44] sm:$0xf]
      %v217 = vld [vmem:[%s196 + $0x48] sm:$0xff]
      %v218 = vld [vmem:[%s196 + $0x50] sm:$0xf]
      %v219 = vld [vmem:[%s196 + $0x54] sm:$0xff]
      %v220 = vld [vmem:[%s196 + $0x5c] sm:$0xf]
      %v221 = vld [vmem:[%s196 + $0x60] sm:$0xff]
      %v222 = vld [vmem:[%s196 + $0x68] sm:$0xf]
      %v223 = vld [vmem:[%s196 + $0x6c] sm:$0xff]
      %v224 = vld [vmem:[%s196 + $0x74] sm:$0xf]
      %v225 = vld [vmem:[%s196 + $0x78] sm:$0xff]
      %v226 = vld [vmem:[%s196 + $0x80] sm:$0xf]
      %v227 = vld [vmem:[%s196 + $0x84] sm:$0xff]
      %v228 = vld [vmem:[%s196 + $0x8c] sm:$0xf]
      %v229 = vld [vmem:[%s196 + $0x90] sm:$0xff]
      %v230 = vld [vmem:[%s196 + $0x98] sm:$0xf]
      %v231 = vld [vmem:[%s196 + $0x9c] sm:$0xff]
      %v232 = vld [vmem:[%s196 + $0xa4] sm:$0xf]
      %v233 = vld [vmem:[%s196 + $0xa8] sm:$0xff]
      %v234 = vld [vmem:[%s196 + $0xb0] sm:$0xf]
      %v235 = vld [vmem:[%s196 + $0xb4] sm:$0xff]
      %v236 = vld [vmem:[%s196 + $0xbc] sm:$0xf]
      %v237 = vld [vmem:[%s1] sm:$0xf]
      %v238 = vld [vmem:[%s1 + $0x4] sm:$0xf]
      %v239 = vld [vmem:[%s1 + $0x8] sm:$0xf]
      %v240 = vld [vmem:[%s1 + $0xc] sm:$0xf]
      %v241 = vld [vmem:[%s1 + $0x10] sm:$0xf]
      %v242 = vld [vmem:[%s1 + $0x14] sm:$0xf]
      %v243 = vld [vmem:[%s1 + $0x18] sm:$0xf]
      %v244 = vld [vmem:[%s1 + $0x1c] sm:$0xf]
      %v245 = vld [vmem:[%s1 + $0x20] sm:$0xf]
      %v246 = vld [vmem:[%s1 + $0x24] sm:$0xf]
      %v247 = vld [vmem:[%s1 + $0x28] sm:$0xf]
      %v248 = vld [vmem:[%s1 + $0x2c] sm:$0xf]
      %v249 = vld [vmem:[%s1 + $0x30] sm:$0xf]
      %v250 = vld [vmem:[%s1 + $0x34] sm:$0xf]
      %v251 = vld [vmem:[%s1 + $0x38] sm:$0xf]
      %v252 = vld [vmem:[%s1 + $0x3c] sm:$0xf]
      %v253 = vld [vmem:[%s1 + $0x40] sm:$0xf]
      %v254 = vld [vmem:[%s1 + $0x44] sm:$0xf]
      %v255 = vld [vmem:[%s1 + $0x48] sm:$0xf]
      %v256 = vld [vmem:[%s1 + $0x4c] sm:$0xf]
      %v257 = vld [vmem:[%s1 + $0x50] sm:$0xf]
      %v258 = vld [vmem:[%s1 + $0x54] sm:$0xf]
      %v259 = vld [vmem:[%s1 + $0x58] sm:$0xf]
      %v260 = vld [vmem:[%s1 + $0x5c] sm:$0xf]
      %v261 = vld [vmem:[%s1 + $0x60] sm:$0xf]
      %v262 = vld [vmem:[%s1 + $0x64] sm:$0xf]
      %v263 = vld [vmem:[%s1 + $0x68] sm:$0xf]
      %v264 = vld [vmem:[%s1 + $0x6c] sm:$0xf]
      %v265 = vld [vmem:[%s1 + $0x70] sm:$0xf]
      %v266 = vld [vmem:[%s1 + $0x74] sm:$0xf]
      %v267 = vld [vmem:[%s1 + $0x78] sm:$0xf]
      %v268 = vld [vmem:[%s1 + $0x7c] sm:$0xf]
      %v269 = vld [vmem:[%s1 + $0x80] sm:$0xf]
      %v270 = vld [vmem:[%s1 + $0x84] sm:$0xf]
      %v271 = vld [vmem:[%s1 + $0x88] sm:$0xf]
      %v272 = vld [vmem:[%s1 + $0x8c] sm:$0xf]
      %v305 = vunpack.c.l.b16 %v205
      %v306 = vunpack.c.h.b16 %v205
      %v307 = vunpack.c.l.b16 %v206
      %v308 = vunpack.c.l.b16 %v207
      %v309 = vunpack.c.h.b16 %v207
      %v310 = vunpack.c.l.b16 %v208
      %v311 = vunpack.c.l.b16 %v209
      %v312 = vunpack.c.h.b16 %v209
      %v313 = vunpack.c.l.b16 %v210
      %v314 = vunpack.c.l.b16 %v211
      %v315 = vunpack.c.h.b16 %v211
      %v316 = vunpack.c.l.b16 %v212
      %v317 = vunpack.c.l.b16 %v213
      %v318 = vunpack.c.h.b16 %v213
      %v319 = vunpack.c.l.b16 %v214
      %v320 = vunpack.c.l.b16 %v215
      %v321 = vunpack.c.h.b16 %v215
      %v322 = vunpack.c.l.b16 %v216
      %v323 = vunpack.c.l.b16 %v217
      %v324 = vunpack.c.h.b16 %v217
      %v325 = vunpack.c.l.b16 %v218
      %v326 = vunpack.c.l.b16 %v219
      %v327 = vunpack.c.h.b16 %v219
      %v328 = vunpack.c.l.b16 %v220
      %v329 = vunpack.c.l.b16 %v221
      %v330 = vunpack.c.h.b16 %v221
      %v331 = vunpack.c.l.b16 %v222
      %v332 = vunpack.c.l.b16 %v223
      %v333 = vunpack.c.h.b16 %v223
      %v334 = vunpack.c.l.b16 %v224
      %v335 = vunpack.c.l.b16 %v225
      %v336 = vunpack.c.h.b16 %v225
      %v337 = vunpack.c.l.b16 %v226
      %v338 = vunpack.c.l.b16 %v227
      %v339 = vunpack.c.h.b16 %v227
      %v340 = vunpack.c.l.b16 %v228
      %v341 = vunpack.c.l.b16 %v229
      %v342 = vunpack.c.h.b16 %v229
      %v343 = vunpack.c.l.b16 %v230
      %v344 = vunpack.c.l.b16 %v231
      %v345 = vunpack.c.h.b16 %v231
      %v346 = vunpack.c.l.b16 %v232
      %v347 = vunpack.c.l.b16 %v233
      %v348 = vunpack.c.h.b16 %v233
      %v349 = vunpack.c.l.b16 %v234
      %v350 = vunpack.c.l.b16 %v235
      %v351 = vunpack.c.h.b16 %v235
      %v352 = vunpack.c.l.b16 %v236
      %v353 = vpack.c.b16 %v308, %v305
      %v354 = vpack.c.b16 %v309, %v306
      %v355 = vpack.c.b16 %v310, %v307
      %v356 = vpack.c.b16 %v314, %v311
      %v357 = vpack.c.b16 %v315, %v312
      %v358 = vpack.c.b16 %v316, %v313
      %v359 = vpack.c.b16 %v320, %v317
      %v360 = vpack.c.b16 %v321, %v318
      %v361 = vpack.c.b16 %v322, %v319
      %v362 = vpack.c.b16 %v326, %v323
      %v363 = vpack.c.b16 %v327, %v324
      %v364 = vpack.c.b16 %v328, %v325
      %v365 = vpack.c.b16 %v332, %v329
      %v366 = vpack.c.b16 %v333, %v330
      %v367 = vpack.c.b16 %v334, %v331
      %v368 = vpack.c.b16 %v338, %v335
      %v369 = vpack.c.b16 %v339, %v336
      %v370 = vpack.c.b16 %v340, %v337
      %v371 = vpack.c.b16 %v344, %v341
      %v372 = vpack.c.b16 %v345, %v342
      %v373 = vpack.c.b16 %v346, %v343
      %v374 = vpack.c.b16 %v350, %v347
      %v375 = vpack.c.b16 %v351, %v348
      %v376 = vpack.c.b16 %v352, %v349
      %v429 = vunpack.c.l.b16 %v237
      %v430 = vunpack.c.l.b16 %v238
      %v431 = vunpack.c.l.b16 %v239
      %v432 = vunpack.c.l.b16 %v240
      %v433 = vunpack.c.l.b16 %v241
      %v434 = vunpack.c.l.b16 %v242
      %v435 = vunpack.c.l.b16 %v243
      %v436 = vunpack.c.l.b16 %v244
      %v437 = vunpack.c.l.b16 %v245
      %v438 = vunpack.c.l.b16 %v246
      %v439 = vunpack.c.l.b16 %v247
      %v440 = vunpack.c.l.b16 %v248
      %v441 = vunpack.c.l.b16 %v249
      %v442 = vunpack.c.l.b16 %v250
      %v443 = vunpack.c.l.b16 %v251
      %v444 = vunpack.c.l.b16 %v252
      %v445 = vunpack.c.l.b16 %v253
      %v446 = vunpack.c.l.b16 %v254
      %v447 = vunpack.c.l.b16 %v255
      %v448 = vunpack.c.l.b16 %v256
      %v449 = vunpack.c.l.b16 %v257
      %v450 = vunpack.c.l.b16 %v258
      %v451 = vunpack.c.l.b16 %v259
      %v452 = vunpack.c.l.b16 %v260
      %v453 = vunpack.c.l.b16 %v261
      %v454 = vunpack.c.l.b16 %v262
      %v455 = vunpack.c.l.b16 %v263
      %v456 = vunpack.c.l.b16 %v264
      %v457 = vunpack.c.l.b16 %v265
      %v458 = vunpack.c.l.b16 %v266
      %v459 = vunpack.c.l.b16 %v267
      %v460 = vunpack.c.l.b16 %v268
      %v461 = vunpack.c.l.b16 %v269
      %v462 = vunpack.c.l.b16 %v270
      %v463 = vunpack.c.l.b16 %v271
      %v464 = vunpack.c.l.b16 %v272
      %v465 = vpack.c.b16 %v430, %v429
      %v466 = vpack.c.b16 %v432, %v431
      %v467 = vpack.c.b16 %v434, %v433
      %v468 = vpack.c.b16 %v436, %v435
      %v469 = vpack.c.b16 %v438, %v437
      %v470 = vpack.c.b16 %v440, %v439
      %v471 = vpack.c.b16 %v442, %v441
      %v472 = vpack.c.b16 %v444, %v443
      %v473 = vpack.c.b16 %v446, %v445
      %v474 = vpack.c.b16 %v448, %v447
      %v475 = vpack.c.b16 %v450, %v449
      %v476 = vpack.c.b16 %v452, %v451
      %v477 = vpack.c.b16 %v454, %v453
      %v478 = vpack.c.b16 %v456, %v455
      %v479 = vpack.c.b16 %v458, %v457
      %v480 = vpack.c.b16 %v460, %v459
      %v481 = vpack.c.b16 %v462, %v461
      %v482 = vpack.c.b16 %v464, %v463
      %vm501 = vcmask 261120
      %v503 = vsel %vm501, %v355, 0
      %v506 = vsel %vm501, %v358, 0
      %v509 = vsel %vm501, %v361, 0
      %v512 = vsel %vm501, %v364, 0
      %v515 = vsel %vm501, %v367, 0
      %v518 = vsel %vm501, %v370, 0
      %v521 = vsel %vm501, %v373, 0
      %v524 = vsel %vm501, %v376, 0
      %526 = vmatpush.bf16.msra.mxu0 %v472
      %527 = vmatpush.bf16.msra.mxu0 %v471
      %528 = vmatpush.bf16.msra.mxu0 %v470
      %529 = vmatpush.bf16.msra.mxu0 %v469
      %530 = vmatpush.bf16.msra.mxu0 %v468
      %531 = vmatpush.bf16.msra.mxu0 %v467
      %532 = vmatpush.bf16.msra.mxu0 %v466
      %533 = vmatpush.bf16.msra.mxu0 %v465
      %534 = vmatmul.bf16.gmra.mxu0 %v353
      %v535 = vpop.f32.mrf.mxu0
      %v536 = vadd.f32 0.0, %v535
      %v537 = vpop.f32.mrf.mxu0
      %v538 = vadd.f32 0.0, %v537
      %539 = vmatmul.bf16.gmra.mxu0 %v356
      %v540 = vpop.f32.mrf.mxu0
      %v541 = vadd.f32 0.0, %v540
      %v542 = vpop.f32.mrf.mxu0
      %v543 = vadd.f32 0.0, %v542
      %544 = vmatmul.bf16.gmra.mxu0 %v359
      %v545 = vpop.f32.mrf.mxu0
      %v546 = vadd.f32 0.0, %v545
      %v547 = vpop.f32.mrf.mxu0
      %v548 = vadd.f32 0.0, %v547
      %549 = vmatmul.bf16.gmra.mxu0 %v362
      %v550 = vpop.f32.mrf.mxu0
      %v551 = vadd.f32 0.0, %v550
      %v552 = vpop.f32.mrf.mxu0
      %v553 = vadd.f32 0.0, %v552
      %554 = vmatmul.bf16.gmra.mxu0 %v365
      %v555 = vpop.f32.mrf.mxu0
      %v556 = vadd.f32 0.0, %v555
      %v557 = vpop.f32.mrf.mxu0
      %v558 = vadd.f32 0.0, %v557
      %559 = vmatmul.bf16.gmra.mxu0 %v368
      %v560 = vpop.f32.mrf.mxu0
      %v561 = vadd.f32 0.0, %v560
      %v562 = vpop.f32.mrf.mxu0
      %v563 = vadd.f32 0.0, %v562
      %564 = vmatmul.bf16.gmra.mxu0 %v371
      %v565 = vpop.f32.mrf.mxu0
      %v566 = vadd.f32 0.0, %v565
      %v567 = vpop.f32.mrf.mxu0
      %v568 = vadd.f32 0.0, %v567
      %569 = vmatmul.bf16.gmra.mxu0 %v374
      %v570 = vpop.f32.mrf.mxu0
      %v571 = vadd.f32 0.0, %v570
      %v572 = vpop.f32.mrf.mxu0
      %v573 = vadd.f32 0.0, %v572
      %574 = vdwg.mxu0
      %575 = vmatpush.bf16.msra.mxu0 %v480
      %576 = vmatpush.bf16.msra.mxu0 %v479
      %577 = vmatpush.bf16.msra.mxu0 %v478
      %578 = vmatpush.bf16.msra.mxu0 %v477
      %579 = vmatpush.bf16.msra.mxu0 %v476
      %580 = vmatpush.bf16.msra.mxu0 %v475
      %581 = vmatpush.bf16.msra.mxu0 %v474
      %582 = vmatpush.bf16.msra.mxu0 %v473
      %583 = vmatmul.bf16.gmra.mxu0 %v354
      %v584 = vpop.f32.mrf.mxu0
      %v585 = vadd.f32 %v536, %v584
      %v586 = vpop.f32.mrf.mxu0
      %v587 = vadd.f32 %v538, %v586
      %588 = vmatmul.bf16.gmra.mxu0 %v357
      %v589 = vpop.f32.mrf.mxu0
      %v590 = vadd.f32 %v541, %v589
      %v591 = vpop.f32.mrf.mxu0
      %v592 = vadd.f32 %v543, %v591
      %593 = vmatmul.bf16.gmra.mxu0 %v360
      %v594 = vpop.f32.mrf.mxu0
      %v595 = vadd.f32 %v546, %v594
      %v596 = vpop.f32.mrf.mxu0
      %v597 = vadd.f32 %v548, %v596
      %598 = vmatmul.bf16.gmra.mxu0 %v363
      %v599 = vpop.f32.mrf.mxu0
      %v600 = vadd.f32 %v551, %v599
      %v601 = vpop.f32.mrf.mxu0
      %v602 = vadd.f32 %v553, %v601
      %603 = vmatmul.bf16.gmra.mxu0 %v366
      %v604 = vpop.f32.mrf.mxu0
      %v605 = vadd.f32 %v556, %v604
      %v606 = vpop.f32.mrf.mxu0
      %v607 = vadd.f32 %v558, %v606
      %608 = vmatmul.bf16.gmra.mxu0 %v369
      %v609 = vpop.f32.mrf.mxu0
      %v610 = vadd.f32 %v561, %v609
      %v611 = vpop.f32.mrf.mxu0
      %v612 = vadd.f32 %v563, %v611
      %613 = vmatmul.bf16.gmra.mxu0 %v372
      %v614 = vpop.f32.mrf.mxu0
      %v615 = vadd.f32 %v566, %v614
      %v616 = vpop.f32.mrf.mxu0
      %v617 = vadd.f32 %v568, %v616
      %618 = vmatmul.bf16.gmra.mxu0 %v375
      %v619 = vpop.f32.mrf.mxu0
      %v620 = vadd.f32 %v571, %v619
      %v621 = vpop.f32.mrf.mxu0
      %v622 = vadd.f32 %v573, %v621
      %623 = vdwg.mxu0
      %624 = vmatpush.bf16.msra.mxu0 0
      %625 = vmatpush.bf16.msra.mxu0 0
      %626 = vmatpush.bf16.msra.mxu0 0
      %627 = vmatpush.bf16.msra.mxu0 0
      %628 = vmatpush.bf16.msra.mxu0 0
      %629 = vmatpush.bf16.msra.mxu0 0
      %630 = vmatpush.bf16.msra.mxu0 %v482
      %631 = vmatpush.bf16.msra.mxu0 %v481
      %632 = vmatmul.bf16.gmra.mxu0 %v503
      %v633 = vpop.f32.mrf.mxu0
      %v634 = vadd.f32 %v585, %v633
      %v635 = vpop.f32.mrf.mxu0
      %v636 = vadd.f32 %v587, %v635
      %637 = vmatmul.bf16.gmra.mxu0 %v506
      %v638 = vpop.f32.mrf.mxu0
      %v639 = vadd.f32 %v590, %v638
      %v640 = vpop.f32.mrf.mxu0
      %v641 = vadd.f32 %v592, %v640
      %642 = vmatmul.bf16.gmra.mxu0 %v509
      %v643 = vpop.f32.mrf.mxu0
      %v644 = vadd.f32 %v595, %v643
      %v645 = vpop.f32.mrf.mxu0
      %v646 = vadd.f32 %v597, %v645
      %647 = vmatmul.bf16.gmra.mxu0 %v512
      %v648 = vpop.f32.mrf.mxu0
      %v649 = vadd.f32 %v600, %v648
      %v650 = vpop.f32.mrf.mxu0
      %v651 = vadd.f32 %v602, %v650
      %652 = vmatmul.bf16.gmra.mxu0 %v515
      %v653 = vpop.f32.mrf.mxu0
      %v654 = vadd.f32 %v605, %v653
      %v655 = vpop.f32.mrf.mxu0
      %v656 = vadd.f32 %v607, %v655
      %657 = vmatmul.bf16.gmra.mxu0 %v518
      %v658 = vpop.f32.mrf.mxu0
      %v659 = vadd.f32 %v610, %v658
      %v660 = vpop.f32.mrf.mxu0
      %v661 = vadd.f32 %v612, %v660
      %662 = vmatmul.bf16.gmra.mxu0 %v521
      %v663 = vpop.f32.mrf.mxu0
      %v664 = vadd.f32 %v615, %v663
      %v665 = vpop.f32.mrf.mxu0
      %v666 = vadd.f32 %v617, %v665
      %667 = vmatmul.bf16.gmra.mxu0 %v524
      %v668 = vpop.f32.mrf.mxu0
      %v669 = vadd.f32 %v620, %v668
      %v670 = vpop.f32.mrf.mxu0
      %v671 = vadd.f32 %v622, %v670
      %672 = vdwg.mxu0
      %v673 = vmax.f32 %v634, 0.0
      %v674 = vmax.f32 %v636, 0.0
      %v675 = vmax.f32 %v639, 0.0
      %v676 = vmax.f32 %v641, 0.0
      %v677 = vmax.f32 %v644, 0.0
      %v678 = vmax.f32 %v646, 0.0
      %v679 = vmax.f32 %v649, 0.0
      %v680 = vmax.f32 %v651, 0.0
      %v681 = vmax.f32 %v654, 0.0
      %v682 = vmax.f32 %v656, 0.0
      %v683 = vmax.f32 %v659, 0.0
      %v684 = vmax.f32 %v661, 0.0
      %v685 = vmax.f32 %v664, 0.0
      %v686 = vmax.f32 %v666, 0.0
      %v687 = vmax.f32 %v669, 0.0
      %v688 = vmax.f32 %v671, 0.0
      %v689 = vpack.c.bf16 %v674, %v673
      %v690 = vpack.c.bf16 %v676, %v675
      %v691 = vpack.c.bf16 %v678, %v677
      %v692 = vpack.c.bf16 %v680, %v679
      %v693 = vpack.c.bf16 %v682, %v681
      %v694 = vpack.c.bf16 %v684, %v683
      %v695 = vpack.c.bf16 %v686, %v685
      %v696 = vpack.c.bf16 %v688, %v687
      %v697 = vld [vmem:[%s2] sm:$0xf]
      %v698 = vld [vmem:[%s2 + $0x4] sm:$0xf]
      %v699 = vld [vmem:[%s3] sm:$0x1]
      %v701 = vperm.slane %v699, 0
      %v705 = vunpack.c.l.b16 %v697
      %v706 = vunpack.c.l.b16 %v698
      %v707 = vpack.c.b16 %v706, %v705
      %vm709 = vcmask 130048
      %v711 = vsel %vm709, %v689, 0
      %v714 = vsel %vm709, %v690, 0
      %v717 = vsel %vm709, %v691, 0
      %v720 = vsel %vm709, %v692, 0
      %v723 = vsel %vm709, %v693, 0
      %v726 = vsel %vm709, %v694, 0
      %v729 = vsel %vm709, %v695, 0
      %v732 = vsel %vm709, %v696, 0
      %734 = vmatpush.bf16.msra.mxu0 0
      %735 = vmatpush.bf16.msra.mxu0 0
      %736 = vmatpush.bf16.msra.mxu0 0
      %737 = vmatpush.bf16.msra.mxu0 0
      %738 = vmatpush.bf16.msra.mxu0 0
      %739 = vmatpush.bf16.msra.mxu0 0
      %740 = vmatpush.bf16.msra.mxu0 0
      %741 = vmatpush.bf16.msra.mxu0 %v707
      %742 = vmatmul.bf16.gmra.mxu0 %v711
      %v743 = vpop.f32.mrf.mxu0
      %v744 = vadd.f32 %v701, %v743
      %v745 = vpop.f32.mrf.mxu0
      %v746 = vadd.f32 %v701, %v745
      %747 = vmatmul.bf16.gmra.mxu0 %v714
      %v748 = vpop.f32.mrf.mxu0
      %v749 = vadd.f32 %v701, %v748
      %v750 = vpop.f32.mrf.mxu0
      %v751 = vadd.f32 %v701, %v750
      %752 = vmatmul.bf16.gmra.mxu0 %v717
      %v753 = vpop.f32.mrf.mxu0
      %v754 = vadd.f32 %v701, %v753
      %v755 = vpop.f32.mrf.mxu0
      %v756 = vadd.f32 %v701, %v755
      %757 = vmatmul.bf16.gmra.mxu0 %v720
      %v758 = vpop.f32.mrf.mxu0
      %v759 = vadd.f32 %v701, %v758
      %v760 = vpop.f32.mrf.mxu0
      %v761 = vadd.f32 %v701, %v760
      %762 = vmatmul.bf16.gmra.mxu0 %v723
      %v763 = vpop.f32.mrf.mxu0
      %v764 = vadd.f32 %v701, %v763
      %v765 = vpop.f32.mrf.mxu0
      %v766 = vadd.f32 %v701, %v765
      %767 = vmatmul.bf16.gmra.mxu0 %v726
      %v768 = vpop.f32.mrf.mxu0
      %v769 = vadd.f32 %v701, %v768
      %v770 = vpop.f32.mrf.mxu0
      %v771 = vadd.f32 %v701, %v770
      %772 = vmatmul.bf16.gmra.mxu0 %v729
      %v773 = vpop.f32.mrf.mxu0
      %v774 = vadd.f32 %v701, %v773
      %v775 = vpop.f32.mrf.mxu0
      %v776 = vadd.f32 %v701, %v775
      %777 = vmatmul.bf16.gmra.mxu0 %v732
      %v778 = vpop.f32.mrf.mxu0
      %v779 = vadd.f32 %v701, %v778
      %v780 = vpop.f32.mrf.mxu0
      %v781 = vadd.f32 %v701, %v780
      %782 = vdwg.mxu0
      %783 = vst [vmem:[%s202] sm:$0xff] %v744
      %784 = vst [vmem:[%s202 + $0x8] sm:$0xff] %v746
      %785 = vst [vmem:[%s202 + $0x10] sm:$0xff] %v749
      %786 = vst [vmem:[%s202 + $0x18] sm:$0xff] %v751
      %787 = vst [vmem:[%s202 + $0x20] sm:$0xff] %v754
      %788 = vst [vmem:[%s202 + $0x28] sm:$0xff] %v756
      %789 = vst [vmem:[%s202 + $0x30] sm:$0xff] %v759
      %790 = vst [vmem:[%s202 + $0x38] sm:$0xff] %v761
      %791 = vst [vmem:[%s202 + $0x40] sm:$0xff] %v764
      %792 = vst [vmem:[%s202 + $0x48] sm:$0xff] %v766
      %793 = vst [vmem:[%s202 + $0x50] sm:$0xff] %v769
      %794 = vst [vmem:[%s202 + $0x58] sm:$0xff] %v771
      %795 = vst [vmem:[%s202 + $0x60] sm:$0xff] %v774
      %796 = vst [vmem:[%s202 + $0x68] sm:$0xff] %v776
      %797 = vst [vmem:[%s202 + $0x70] sm:$0xff] %v779
      %798 = vst [vmem:[%s202 + $0x78] sm:$0xff] %v781
      %s799 = smul.u32 16, %s15
      %p800 = scmp.lt.s32.totalorder %s799, 31
      %s801 = scalar_select %p800, %s799, 31
      %s802 = smul.addr %s801, 8
      %s803 = scalar_lea.vmem %s4, %s802
      // Predicated region
      $region37: #{lift_splat_shoot_gpn.8} parent=35 // pred_check
        %p804 = pneg %p122
      $region38: #{lift_splat_shoot_gpn.8} parent=35 // pred_check_branch
        %806 = sbr.rel (%p804) target = $region40
      $region39: #{lift_splat_shoot_gpn.8} parent=35 // pred_region
        %s807 = smul.u32 16, %s15
      $region40: #{lift_splat_shoot_gpn.8} parent=35 // pred_fallthru
        _
    $region36: #{lift_splat_shoot_gpn.8} parent=5 // pred_fallthru
      _
    %p808 = scmp.le.s32.totalorder 2, %s10
    // Predicated region
    $region41: #{lift_splat_shoot_gpn.8} parent=5 // pred_check
      %p809 = pneg %p808
    $region42: #{lift_splat_shoot_gpn.8} parent=5 // pred_check_branch
      %811 = sbr.rel (%p809) target = $region44
    $region43: #{lift_splat_shoot_gpn.8} parent=5 // pred_region
      %s812 = ssub.s32 %s10, 2
      // Predicated region
      $region45: #{lift_splat_shoot_gpn.8} parent=43 // pred_check
        %p813 = pneg %p128
      $region46: #{lift_splat_shoot_gpn.8} parent=43 // pred_check_branch
        %815 = sbr.rel (%p813) target = $region48
      $region47: #{lift_splat_shoot_gpn.8} parent=43 // pred_region
        %s816 = smul.u32 16, %s16
        %p817 = scmp.lt.s32.totalorder %s816, 31
        %s818 = scalar_select %p817, %s816, 31
        %s819 = smul.addr %s818, 8
        %s820 = scalar_lea.vmem %s4, %s819
      $region48: #{lift_splat_shoot_gpn.8} parent=43 // pred_fallthru
        _
    $region44: #{lift_splat_shoot_gpn.8} parent=5 // pred_fallthru
      _
  $region6: #{lift_splat_shoot_gpn.8} parent=0 // loop_footer
    %s14 = sadd.s32 1, %s10
  $region7: #{lift_splat_shoot_gpn.8} parent=0 // loop_footer_branch
    %9 = sbr.rel target = $region3
  $region8: #{lift_splat_shoot_gpn.8} parent=0 // loop_exit
    _

// kernel: lift_splat_shoot_gpn.9
$region0: #{lift_splat_shoot_gpn.9}
  #allocation0 [shape = 'u32[]', space=smem, size = 0x4, offset = 0x4, fixed_abs, tag = 'smem constant byte address 0x4 - core index']
  #allocation1 [shape = 'u32[72,128]{1,0:T(1,128)}', space=vmem, size = 0x9000, scoped, tag = 'internal scratch']
  %s0 = inlined_call_operand.vmem [shape: bf16[256,27], index: 0, kind: input, shape index: {}]
  %s1 = inlined_call_operand.vmem [shape: bf16[27,128], index: 1, kind: input, shape index: {}]
  %s2 = inlined_call_operand.vmem [shape: f32[1,128], index: 2, kind: input, shape index: {}]
  %s3 = inlined_call_operand.vmem [shape: f32[256,128], index: 3, kind: output, shape index: {}]
  %s4 = sld [smem:[#allocation0]]
  $region45: #{lift_splat_shoot_gpn.9} parent=0
    _
  %s6 = ssub.s32 1, %s4
  %s7 = scalar_select 0, %s6, %s4
  loop: start=0, step=1, limit=4
  $region2: #{lift_splat_shoot_gpn.9} parent=0 // loop_pre_header
    _
  $region3: #{lift_splat_shoot_gpn.9} parent=0 // loop_header
    %s9 = sphi 0, %s13
    %p10 = scmp.ge.s32.totalorder %s9, 4
    %s19 = sphi 0, %s21
    %s22 = sphi 0, %s19
    %s23 = sphi 0, %s22
    %s39 = sphi 0, %s23
    %s43 = sphi 0, %s43
    %s45 = sphi 0, %s43
    %s46 = sphi 0, %s45
    %s60 = sphi 0, %s46
    %s64 = sphi 0, %s64
    %s66 = sphi 0, %s64
    %s67 = sphi 0, %s66
    %s81 = sphi 0, %s67
    %s87 = sphi 0, %s89
    %s90 = sphi 0, %s87
    %s91 = sphi 0, %s90
    %s107 = sphi 0, %s91
  $region4: #{lift_splat_shoot_gpn.9} parent=0 // loop_header_branch
    %12 = sbr.rel (%p10) target = $region8
  $region5: #{lift_splat_shoot_gpn.9} parent=0 // loop_body
    %s14 = ssub.s32 %s9, 1
    %s15 = ssub.s32 %s9, 2
    %s16 = sadd.s32 %s9, 1
    %s17 = ssub.s32 %s9, %s16
    %p18 = scmp.eq.s32.totalorder %s17, 0
    %s20 = sadd.s32 %s19, 1
    %s21 = scalar_select %p18, %s19, %s20
    %p24 = pneg %p18
    %p25 = scmp.eq.s32.totalorder %s9, 1
    %p26 = por %p24, %p25
    %p27 = scmp.ne.s32.totalorder %s19, %s22
    %p28 = scmp.eq.s32.totalorder %s9, 0
    %p29 = por %p27, %p28
    %p30 = scmp.ne.s32.totalorder %s19, %s22
    %p31 = scmp.eq.s32.totalorder %s14, 1
    %p32 = por %p30, %p31
    %p33 = scmp.ne.s32.totalorder %s22, %s23
    %p34 = scmp.eq.s32.totalorder %s14, 0
    %p35 = por %p33, %p34
    %p36 = scmp.ne.s32.totalorder %s22, %s23
    %p37 = scmp.eq.s32.totalorder %s15, 1
    %p38 = por %p36, %p37
    %p40 = scmp.ne.s32.totalorder %s23, %s39
    %p41 = scmp.eq.s32.totalorder %s15, 0
    %p42 = por %p40, %p41
    %s44 = sadd.s32 %s43, 1
    %p47 = scmp.eq.s32.totalorder %s9, 1
    %p48 = scmp.ne.s32.totalorder %s43, %s45
    %p49 = scmp.eq.s32.totalorder %s9, 0
    %p50 = por %p48, %p49
    %p51 = scmp.ne.s32.totalorder %s43, %s45
    %p52 = scmp.eq.s32.totalorder %s14, 1
    %p53 = por %p51, %p52
    %p54 = scmp.ne.s32.totalorder %s45, %s46
    %p55 = scmp.eq.s32.totalorder %s14, 0
    %p56 = por %p54, %p55
    %p57 = scmp.ne.s32.totalorder %s45, %s46
    %p58 = scmp.eq.s32.totalorder %s15, 1
    %p59 = por %p57, %p58
    %p61 = scmp.ne.s32.totalorder %s46, %s60
    %p62 = scmp.eq.s32.totalorder %s15, 0
    %p63 = por %p61, %p62
    %s65 = sadd.s32 %s64, 1
    %p68 = scmp.eq.s32.totalorder %s9, 1
    %p69 = scmp.ne.s32.totalorder %s64, %s66
    %p70 = scmp.eq.s32.totalorder %s9, 0
    %p71 = por %p69, %p70
    %p72 = scmp.ne.s32.totalorder %s64, %s66
    %p73 = scmp.eq.s32.totalorder %s14, 1
    %p74 = por %p72, %p73
    %p75 = scmp.ne.s32.totalorder %s66, %s67
    %p76 = scmp.eq.s32.totalorder %s14, 0
    %p77 = por %p75, %p76
    %p78 = scmp.ne.s32.totalorder %s66, %s67
    %p79 = scmp.eq.s32.totalorder %s15, 1
    %p80 = por %p78, %p79
    %p82 = scmp.ne.s32.totalorder %s67, %s81
    %p83 = scmp.eq.s32.totalorder %s15, 0
    %p84 = por %p82, %p83
    %s85 = ssub.s32 %s9, %s16
    %p86 = scmp.eq.s32.totalorder %s85, 0
    %s88 = sadd.s32 %s87, 1
    %s89 = scalar_select %p86, %s87, %s88
    %p92 = pneg %p86
    %p93 = scmp.eq.s32.totalorder %s9, 1
    %p94 = por %p92, %p93
    %p95 = scmp.ne.s32.totalorder %s87, %s90
    %p96 = scmp.eq.s32.totalorder %s9, 0
    %p97 = por %p95, %p96
    %p98 = scmp.ne.s32.totalorder %s87, %s90
    %p99 = scmp.eq.s32.totalorder %s14, 1
    %p100 = por %p98, %p99
    %p101 = scmp.ne.s32.totalorder %s90, %s91
    %p102 = scmp.eq.s32.totalorder %s14, 0
    %p103 = por %p101, %p102
    %p104 = scmp.ne.s32.totalorder %s90, %s91
    %p105 = scmp.eq.s32.totalorder %s15, 1
    %p106 = por %p104, %p105
    %p108 = scmp.ne.s32.totalorder %s91, %s107
    %p109 = scmp.eq.s32.totalorder %s15, 0
    %p110 = por %p108, %p109
    %p111 = scmp.le.s32.totalorder 1, %s9
    %p112 = scmp.lt.s32.totalorder %s9, 3
    %p113 = pnand %p111, %p112
    %p114 = pneg %p113
    // Predicated region
    $region9: #{lift_splat_shoot_gpn.9} parent=5 // pred_check
      _
    $region10: #{lift_splat_shoot_gpn.9} parent=5 // pred_check_branch
      %116 = sbr.rel (%p113) target = $region12
    $region11: #{lift_splat_shoot_gpn.9} parent=5 // pred_region
      %s117 = ssub.s32 %s9, 1
      // Predicated region
      $region13: #{lift_splat_shoot_gpn.9} parent=11 // pred_check
        %p118 = pneg %p56
      $region14: #{lift_splat_shoot_gpn.9} parent=11 // pred_check_branch
        %120 = sbr.rel (%p118) target = $region16
      $region15: #{lift_splat_shoot_gpn.9} parent=11 // pred_region
        _
      $region16: #{lift_splat_shoot_gpn.9} parent=11 // pred_fallthru
        _
      // Predicated region
      $region17: #{lift_splat_shoot_gpn.9} parent=11 // pred_check
        %p121 = pneg %p77
      $region18: #{lift_splat_shoot_gpn.9} parent=11 // pred_check_branch
        %123 = sbr.rel (%p121) target = $region20
      $region19: #{lift_splat_shoot_gpn.9} parent=11 // pred_region
        _
      $region20: #{lift_splat_shoot_gpn.9} parent=11 // pred_fallthru
        _
    $region12: #{lift_splat_shoot_gpn.9} parent=5 // pred_fallthru
      _
    %p124 = scmp.lt.s32.totalorder %s9, 2
    // Predicated region
    $region21: #{lift_splat_shoot_gpn.9} parent=5 // pred_check
      %p125 = pneg %p124
    $region22: #{lift_splat_shoot_gpn.9} parent=5 // pred_check_branch
      %127 = sbr.rel (%p125) target = $region24
    $region23: #{lift_splat_shoot_gpn.9} parent=5 // pred_region
      // Predicated region
      $region25: #{lift_splat_shoot_gpn.9} parent=23 // pred_check
        %p128 = pneg %p29
      $region26: #{lift_splat_shoot_gpn.9} parent=23 // pred_check_branch
        %130 = sbr.rel (%p128) target = $region28
      $region27: #{lift_splat_shoot_gpn.9} parent=23 // pred_region
        %s131 = smul.u32 16, %s9
        %p132 = scmp.lt.s32.totalorder %s131, 31
        %s133 = scalar_select %p132, %s131, 31
        %s134 = smul.addr %s133, 4
        %s135 = scalar_lea.vmem %s0, %s134
        %s136 = smul.u32 16, %s9
      $region28: #{lift_splat_shoot_gpn.9} parent=23 // pred_fallthru
        _
    $region24: #{lift_splat_shoot_gpn.9} parent=5 // pred_fallthru
      _
    %p137 = scmp.le.s32.totalorder 1, %s9
    %p138 = scmp.lt.s32.totalorder %s9, 3
    %p139 = pnand %p137, %p138
    %p140 = pneg %p139
    // Predicated region
    $region29: #{lift_splat_shoot_gpn.9} parent=5 // pred_check
      _
    $region30: #{lift_splat_shoot_gpn.9} parent=5 // pred_check_branch
      %142 = sbr.rel (%p139) target = $region32
    $region31: #{lift_splat_shoot_gpn.9} parent=5 // pred_region
      %s143 = ssub.s32 %s9, 1
      %s144 = smul.u32 16, %s14
      %p145 = scmp.lt.s32.totalorder %s144, 31
      %s146 = scalar_select %p145, %s144, 31
      %s147 = smul.addr %s146, 4
      %s148 = scalar_lea.vmem %s0, %s147
      %p149 = pneg %p35
      %p150 = pneg %p32
      %p151 = pneg %p56
      %p152 = pneg %p53
      %p153 = pneg %p77
      %p154 = pneg %p74
      %p155 = pneg %p103
      %p156 = pneg %p100
      %s157 = smul.u32 16, %s14
      %p158 = scmp.lt.s32.totalorder %s157, 31
      %s159 = scalar_select %p158, %s157, 31
      %s160 = smul.addr %s159, 8
      %s161 = scalar_lea.vmem %s3, %s160
      %s162 = smul.u32 16, %s14
      %p163 = scmp.lt.s32.totalorder %s162, 31
      %s164 = scalar_select %p163, %s162, 31
      %s165 = smul.addr %s164, 4
      %s166 = scalar_lea.vmem %s0, %s165
      %s167 = smul.u32 16, %s14
      %s168 = smul.u32 16, %s14
      %p169 = scmp.lt.s32.totalorder %s168, 31
      %s170 = scalar_select %p169, %s168, 31
      %s171 = smul.addr %s170, 8
      %s172 = scalar_lea.vmem %s3, %s171
      %s173 = smul.u32 16, %s14
      %v175 = vld [vmem:[%s166] sm:$0xf]
      %v176 = vld [vmem:[%s166 + $0x4] sm:$0xf]
      %v177 = vld [vmem:[%s166 + $0x8] sm:$0xf]
      %v178 = vld [vmem:[%s166 + $0xc] sm:$0xf]
      %v179 = vld [vmem:[%s166 + $0x10] sm:$0xf]
      %v180 = vld [vmem:[%s166 + $0x14] sm:$0xf]
      %v181 = vld [vmem:[%s166 + $0x18] sm:$0xf]
      %v182 = vld [vmem:[%s166 + $0x1c] sm:$0xf]
      %v183 = vld [vmem:[%s166 + $0x20] sm:$0xf]
      %v184 = vld [vmem:[%s166 + $0x24] sm:$0xf]
      %v185 = vld [vmem:[%s166 + $0x28] sm:$0xf]
      %v186 = vld [vmem:[%s166 + $0x2c] sm:$0xf]
      %v187 = vld [vmem:[%s166 + $0x30] sm:$0xf]
      %v188 = vld [vmem:[%s166 + $0x34] sm:$0xf]
      %v189 = vld [vmem:[%s166 + $0x38] sm:$0xf]
      %v190 = vld [vmem:[%s166 + $0x3c] sm:$0xf]
      %v191 = vld [vmem:[%s1] sm:$0xf]
      %v192 = vld [vmem:[%s1 + $0x4] sm:$0xf]
      %v193 = vld [vmem:[%s1 + $0x8] sm:$0xf]
      %v194 = vld [vmem:[%s1 + $0xc] sm:$0x3]
      %v195 = vld [vmem:[%s2] sm:$0x1]
      %v197 = vperm.slane %v195, 0
      %v215 = vunpack.c.l.b16 %v175
      %v216 = vunpack.c.l.b16 %v176
      %v217 = vunpack.c.l.b16 %v177
      %v218 = vunpack.c.l.b16 %v178
      %v219 = vunpack.c.l.b16 %v179
      %v220 = vunpack.c.l.b16 %v180
      %v221 = vunpack.c.l.b16 %v181
      %v222 = vunpack.c.l.b16 %v182
      %v223 = vunpack.c.l.b16 %v183
      %v224 = vunpack.c.l.b16 %v184
      %v225 = vunpack.c.l.b16 %v185
      %v226 = vunpack.c.l.b16 %v186
      %v227 = vunpack.c.l.b16 %v187
      %v228 = vunpack.c.l.b16 %v188
      %v229 = vunpack.c.l.b16 %v189
      %v230 = vunpack.c.l.b16 %v190
      %v231 = vpack.c.b16 %v216, %v215
      %v232 = vpack.c.b16 %v218, %v217
      %v233 = vpack.c.b16 %v220, %v219
      %v234 = vpack.c.b16 %v222, %v221
      %v235 = vpack.c.b16 %v224, %v223
      %v236 = vpack.c.b16 %v226, %v225
      %v237 = vpack.c.b16 %v228, %v227
      %v238 = vpack.c.b16 %v230, %v229
      %v243 = vunpack.c.l.b16 %v191
      %v244 = vunpack.c.l.b16 %v192
      %v245 = vunpack.c.l.b16 %v193
      %v246 = vunpack.c.l.b16 %v194
      %v247 = vpack.c.b16 %v244, %v243
      %v248 = vpack.c.b16 %v246, %v245
      %vm250 = vcmask 220160
      %v252 = vsel %vm250, %v231, 0
      %v255 = vsel %vm250, %v232, 0
      %v258 = vsel %vm250, %v233, 0
      %v261 = vsel %vm250, %v234, 0
      %v264 = vsel %vm250, %v235, 0
      %v267 = vsel %vm250, %v236, 0
      %v270 = vsel %vm250, %v237, 0
      %v273 = vsel %vm250, %v238, 0
      %vm275 = vcmask 1044480
      %vm276 = vcmask 1045504
      %v277 = vsel %vm275, 4294967295, 65535
      %v278 = vsel %vm276, %v277, 0
      %v280 = vand.u32 %v248, %v278
      %282 = vmatpush.bf16.msra.mxu0 0
      %283 = vmatpush.bf16.msra.mxu0 0
      %284 = vmatpush.bf16.msra.mxu0 0
      %285 = vmatpush.bf16.msra.mxu0 0
      %286 = vmatpush.bf16.msra.mxu0 0
      %287 = vmatpush.bf16.msra.mxu0 0
      %288 = vmatpush.bf16.msra.mxu0 %v280
      %289 = vmatpush.bf16.msra.mxu0 %v247
      %290 = vmatmul.bf16.gmra.mxu0 %v252
      %v291 = vpop.f32.mrf.mxu0
      %v292 = vadd.f32 %v197, %v291
      %v293 = vpop.f32.mrf.mxu0
      %v294 = vadd.f32 %v197, %v293
      %295 = vmatmul.bf16.gmra.mxu0 %v255
      %v296 = vpop.f32.mrf.mxu0
      %v297 = vadd.f32 %v197, %v296
      %v298 = vpop.f32.mrf.mxu0
      %v299 = vadd.f32 %v197, %v298
      %300 = vmatmul.bf16.gmra.mxu0 %v258
      %v301 = vpop.f32.mrf.mxu0
      %v302 = vadd.f32 %v197, %v301
      %v303 = vpop.f32.mrf.mxu0
      %v304 = vadd.f32 %v197, %v303
      %305 = vmatmul.bf16.gmra.mxu0 %v261
      %v306 = vpop.f32.mrf.mxu0
      %v307 = vadd.f32 %v197, %v306
      %v308 = vpop.f32.mrf.mxu0
      %v309 = vadd.f32 %v197, %v308
      %310 = vmatmul.bf16.gmra.mxu0 %v264
      %v311 = vpop.f32.mrf.mxu0
      %v312 = vadd.f32 %v197, %v311
      %v313 = vpop.f32.mrf.mxu0
      %v314 = vadd.f32 %v197, %v313
      %315 = vmatmul.bf16.gmra.mxu0 %v267
      %v316 = vpop.f32.mrf.mxu0
      %v317 = vadd.f32 %v197, %v316
      %v318 = vpop.f32.mrf.mxu0
      %v319 = vadd.f32 %v197, %v318
      %320 = vmatmul.bf16.gmra.mxu0 %v270
      %v321 = vpop.f32.mrf.mxu0
      %v322 = vadd.f32 %v197, %v321
      %v323 = vpop.f32.mrf.mxu0
      %v324 = vadd.f32 %v197, %v323
      %325 = vmatmul.bf16.gmra.mxu0 %v273
      %v326 = vpop.f32.mrf.mxu0
      %v327 = vadd.f32 %v197, %v326
      %v328 = vpop.f32.mrf.mxu0
      %v329 = vadd.f32 %v197, %v328
      %330 = vdwg.mxu0
      %v331 = vmul.f32 %v292, 1.442695
      %v332 = vpow.pop %v331
      %v333 = vmul.f32 %v294, 1.442695
      %v334 = vpow.pop %v333
      %v335 = vmul.f32 %v297, 1.442695
      %v336 = vpow.pop %v335
      %v337 = vmul.f32 %v299, 1.442695
      %v338 = vpow.pop %v337
      %v339 = vmul.f32 %v302, 1.442695
      %v340 = vpow.pop %v339
      %v341 = vmul.f32 %v304, 1.442695
      %v342 = vpow.pop %v341
      %v343 = vmul.f32 %v307, 1.442695
      %v344 = vpow.pop %v343
      %v345 = vmul.f32 %v309, 1.442695
      %v346 = vpow.pop %v345
      %v347 = vmul.f32 %v312, 1.442695
      %v348 = vpow.pop %v347
      %v349 = vmul.f32 %v314, 1.442695
      %v350 = vpow.pop %v349
      %v351 = vmul.f32 %v317, 1.442695
      %v352 = vpow.pop %v351
      %v353 = vmul.f32 %v319, 1.442695
      %v354 = vpow.pop %v353
      %v355 = vmul.f32 %v322, 1.442695
      %v356 = vpow.pop %v355
      %v357 = vmul.f32 %v324, 1.442695
      %v358 = vpow.pop %v357
      %v359 = vmul.f32 %v327, 1.442695
      %v360 = vpow.pop %v359
      %v361 = vmul.f32 %v329, 1.442695
      %v362 = vpow.pop %v361
      %v363 = vadd.f32 %v332, 1.0
      %v364 = vadd.f32 %v334, 1.0
      %v365 = vadd.f32 %v336, 1.0
      %v366 = vadd.f32 %v338, 1.0
      %v367 = vadd.f32 %v340, 1.0
      %v368 = vadd.f32 %v342, 1.0
      %v369 = vadd.f32 %v344, 1.0
      %v370 = vadd.f32 %v346, 1.0
      %v371 = vadd.f32 %v348, 1.0
      %v372 = vadd.f32 %v350, 1.0
      %v373 = vadd.f32 %v352, 1.0
      %v374 = vadd.f32 %v354, 1.0
      %v375 = vadd.f32 %v356, 1.0
      %v376 = vadd.f32 %v358, 1.0
      %v377 = vadd.f32 %v360, 1.0
      %v378 = vadd.f32 %v362, 1.0
      %v379 = vmax.f32 %v363, 0.0001
      %v380 = vmax.f32 %v364, 0.0001
      %v381 = vmax.f32 %v365, 0.0001
      %v382 = vmax.f32 %v366, 0.0001
      %v383 = vmax.f32 %v367, 0.0001
      %v384 = vmax.f32 %v368, 0.0001
      %v385 = vmax.f32 %v369, 0.0001
      %v386 = vmax.f32 %v370, 0.0001
      %v387 = vmax.f32 %v371, 0.0001
      %v388 = vmax.f32 %v372, 0.0001
      %v389 = vmax.f32 %v373, 0.0001
      %v390 = vmax.f32 %v374, 0.0001
      %v391 = vmax.f32 %v375, 0.0001
      %v392 = vmax.f32 %v376, 0.0001
      %v393 = vmax.f32 %v377, 0.0001
      %v394 = vmax.f32 %v378, 0.0001
      %395 = vst [vmem:[%s172] sm:$0xff] %v379
      %396 = vst [vmem:[%s172 + $0x8] sm:$0xff] %v380
      %397 = vst [vmem:[%s172 + $0x10] sm:$0xff] %v381
      %398 = vst [vmem:[%s172 + $0x18] sm:$0xff] %v382
      %399 = vst [vmem:[%s172 + $0x20] sm:$0xff] %v383
      %400 = vst [vmem:[%s172 + $0x28] sm:$0xff] %v384
      %401 = vst [vmem:[%s172 + $0x30] sm:$0xff] %v385
      %402 = vst [vmem:[%s172 + $0x38] sm:$0xff] %v386
      %403 = vst [vmem:[%s172 + $0x40] sm:$0xff] %v387
      %404 = vst [vmem:[%s172 + $0x48] sm:$0xff] %v388
      %405 = vst [vmem:[%s172 + $0x50] sm:$0xff] %v389
      %406 = vst [vmem:[%s172 + $0x58] sm:$0xff] %v390
      %407 = vst [vmem:[%s172 + $0x60] sm:$0xff] %v391
      %408 = vst [vmem:[%s172 + $0x68] sm:$0xff] %v392
      %409 = vst [vmem:[%s172 + $0x70] sm:$0xff] %v393
      %410 = vst [vmem:[%s172 + $0x78] sm:$0xff] %v394
      %s411 = smul.u32 16, %s14
      %p412 = scmp.lt.s32.totalorder %s411, 31
      %s413 = scalar_select %p412, %s411, 31
      %s414 = smul.addr %s413, 8
      %s415 = scalar_lea.vmem %s3, %s414
      // Predicated region
      $region33: #{lift_splat_shoot_gpn.9} parent=31 // pred_check
        %p416 = pneg %p100
      $region34: #{lift_splat_shoot_gpn.9} parent=31 // pred_check_branch
        %418 = sbr.rel (%p416) target = $region36
      $region35: #{lift_splat_shoot_gpn.9} parent=31 // pred_region
        %s419 = smul.u32 16, %s14
      $region36: #{lift_splat_shoot_gpn.9} parent=31 // pred_fallthru
        _
    $region32: #{lift_splat_shoot_gpn.9} parent=5 // pred_fallthru
      _
    %p420 = scmp.le.s32.totalorder 2, %s9
    // Predicated region
    $region37: #{lift_splat_shoot_gpn.9} parent=5 // pred_check
      %p421 = pneg %p420
    $region38: #{lift_splat_shoot_gpn.9} parent=5 // pred_check_branch
      %423 = sbr.rel (%p421) target = $region40
    $region39: #{lift_splat_shoot_gpn.9} parent=5 // pred_region
      %s424 = ssub.s32 %s9, 2
      // Predicated region
      $region41: #{lift_splat_shoot_gpn.9} parent=39 // pred_check
        %p425 = pneg %p106
      $region42: #{lift_splat_shoot_gpn.9} parent=39 // pred_check_branch
        %427 = sbr.rel (%p425) target = $region44
      $region43: #{lift_splat_shoot_gpn.9} parent=39 // pred_region
        %s428 = smul.u32 16, %s15
        %p429 = scmp.lt.s32.totalorder %s428, 31
        %s430 = scalar_select %p429, %s428, 31
        %s431 = smul.addr %s430, 8
        %s432 = scalar_lea.vmem %s3, %s431
      $region44: #{lift_splat_shoot_gpn.9} parent=39 // pred_fallthru
        _
    $region40: #{lift_splat_shoot_gpn.9} parent=5 // pred_fallthru
      _
  $region6: #{lift_splat_shoot_gpn.9} parent=0 // loop_footer
    %s13 = sadd.s32 1, %s9
  $region7: #{lift_splat_shoot_gpn.9} parent=0 // loop_footer_branch
    %8 = sbr.rel target = $region3
  $region8: #{lift_splat_shoot_gpn.9} parent=0 // loop_exit
    _

</llo_original>
